<compile_context>
chip_gen: v7x
topology: tpu7x:2x2x1
jax: 0.10.0
libtpu: 0.0.40
codegen_flags: <defaults>
</compile_context>

<pallas_src>
import math

import jax
import jax.numpy as jnp
from jax import lax
from jax.experimental import pallas as pl
from jax.experimental.pallas import tpu as pltpu


COMPUTE_DTYPE = jnp.bfloat16   # MXU operand dtype; accumulation stays float32


def _round_up(n, m):
    return ((n + m - 1) // m) * m


# ----------------------------------------------------------------------------
# Fused Pallas kernel:
#   MultiHeadAttention (h=1) -> adj_ag, then n_layers of the GCN
#   (dep branch + ag branch + bilinear mixing), all resident in VMEM,
#   processing Bt batch elements per grid step.
# ----------------------------------------------------------------------------
def make_fused_kernel(n_layers, d_k_logical, Bt, L, Dp, Mp, Lp):
    assert n_layers >= 1
    inv_sqrt_dk = 1.0 / math.sqrt(float(d_k_logical))

    def _softmax(s):
        # exact division (not approx reciprocal): these feed returned outputs
        s = s - jnp.max(s, axis=-1, keepdims=True)
        e = jnp.exp(s)
        return e / jnp.sum(e, axis=-1, keepdims=True)

    def kernel(x_ref, adj_ref, src_ref, wqk_ref, bqk_ref, aff1_ref, aff2_ref,
               wdep_ref, bdep_ref, wag_ref, bag_ref,
               out_ag_ref, out_dep_ref, adj_ag_ref):
        x = x_ref[...]                                       # (Bt, L, Dp) f32
        # leading-dim merge (L is a multiple of 8 -> layout no-op), then bf16
        x2 = x.reshape(Bt * L, Dp).astype(COMPUTE_DTYPE)

        # fused q|k projection: one (Bt*L, Dp) @ (Dp, 2*Dp) MXU pass
        qk = jnp.dot(x2, wqk_ref[...],
                     preferred_element_type=jnp.float32) + bqk_ref[...]
        q = qk[:, :Dp].reshape(Bt, L, Dp).astype(COMPUTE_DTYPE)
        k = qk[:, Dp:].reshape(Bt, L, Dp).astype(COMPUTE_DTYPE)

        # TODO(synk): check lower_as_mlir for per-call vxpose on these NT
        # contractions; at current sizes they are negligible.
        scores = jnp.einsum('bqd,bkd->bqk', q, k,
                            preferred_element_type=jnp.float32)
        scores = scores * jnp.float32(inv_sqrt_dk)           # d_k = logical 100
        src = src_ref[...]                                   # (Bt, 1, L) key mask
        scores = jnp.where(src == 0.0, jnp.float32(-1e9), scores)
        attn = _softmax(scores)                              # (Bt, L, L) f32

        row = lax.broadcasted_iota(jnp.int32, (L, L), 0)
        col = lax.broadcasted_iota(jnp.int32, (L, L), 1)
        eye = (row == col).astype(jnp.float32)               # (L, L)
        adj_ag_unmasked = attn * (1.0 - eye) + eye           # diagonal := 1
        # Query-row mask (`mask_` in the reference) equals the key mask
        # transposed; apply it as diag(src) @ adj_ag on the MXU so we never
        # relayout a (1,L) lane vector into a (L,1) sublane vector.
        dmask = eye * src                                    # (Bt, L, L)
        adj_ag = jnp.einsum('bij,bjk->bik', dmask, adj_ag_unmasked,
                            preferred_element_type=jnp.float32)

        # lane-dense adj_ag writeback (padded to Lp, sliced in the wrapper)
        if Lp > L:
            adj_ag_ref[...] = jnp.concatenate(
                [adj_ag, jnp.zeros((Bt, L, Lp - L), jnp.float32)], axis=-1)
        else:
            adj_ag_ref[...] = adj_ag

        adj = adj_ref[...]                                   # (Bt, L, L) f32
        inv_ddep = pl.reciprocal(jnp.sum(adj, axis=-1, keepdims=True) + 1.0,
                                 approx=True)                # (Bt, L, 1)
        inv_dag = pl.reciprocal(jnp.sum(adj_ag, axis=-1, keepdims=True) + 1.0,
                                approx=True)                 # (Bt, L, 1)

        adj_c = adj.astype(COMPUTE_DTYPE)
        adj_ag_c = adj_ag.astype(COMPUTE_DTYPE)
        aff1 = aff1_ref[...]                                 # (Mp, Mp) bf16
        aff2 = aff2_ref[...]

        out_dep_c = x.astype(COMPUTE_DTYPE)
        out_ag_c = x.astype(COMPUTE_DTYPE)
        out_dep_f = out_ag_f = None
        for l in range(n_layers):                            # static unroll
            wdep, bdep = wdep_ref[l], bdep_ref[l]            # bf16 / f32
            wag, bag = wag_ref[l], bag_ref[l]

            # dep branch
            ax_dep = jnp.einsum('bij,bjd->bid', adj_c, out_dep_c,
                                preferred_element_type=jnp.float32)
            ax_dep2 = ax_dep.reshape(Bt * L, ax_dep.shape[-1]).astype(COMPUTE_DTYPE)
            axw_dep = jnp.dot(ax_dep2, wdep,
                              preferred_element_type=jnp.float32
                              ).reshape(Bt, L, Mp) + bdep
            g_dep = jnp.maximum(axw_dep * inv_ddep, 0.0)

            # ag branch
            ax_ag = jnp.einsum('bij,bjd->bid', adj_ag_c, out_ag_c,
                               preferred_element_type=jnp.float32)
            ax_ag2 = ax_ag.reshape(Bt * L, ax_ag.shape[-1]).astype(COMPUTE_DTYPE)
            axw_ag = jnp.dot(ax_ag2, wag,
                             preferred_element_type=jnp.float32
                             ).reshape(Bt, L, Mp) + bag
            g_ag = jnp.maximum(axw_ag * inv_dag, 0.0)

            gd_c = g_dep.astype(COMPUTE_DTYPE)
            ga_c = g_ag.astype(COMPUTE_DTYPE)

            # bilinear mixing
            t1 = jnp.dot(g_dep.reshape(Bt * L, Mp).astype(COMPUTE_DTYPE), aff1,
                         preferred_element_type=jnp.float32).reshape(Bt, L, Mp)
            t2 = jnp.dot(g_ag.reshape(Bt * L, Mp).astype(COMPUTE_DTYPE), aff2,
                         preferred_element_type=jnp.float32).reshape(Bt, L, Mp)
            s1 = jnp.einsum('bqm,bkm->bqk', t1.astype(COMPUTE_DTYPE), ga_c,
                            preferred_element_type=jnp.float32)
            s2 = jnp.einsum('bqm,bkm->bqk', t2.astype(COMPUTE_DTYPE), gd_c,
                            preferred_element_type=jnp.float32)
            a1 = _softmax(s1).astype(COMPUTE_DTYPE)
            a2 = _softmax(s2).astype(COMPUTE_DTYPE)

            out_dep_f = jnp.einsum('bqk,bkm->bqm', a1, ga_c,
                                   preferred_element_type=jnp.float32)
            out_ag_f = jnp.einsum('bqk,bkm->bqm', a2, gd_c,
                                  preferred_element_type=jnp.float32)
            out_dep_c = out_dep_f.astype(COMPUTE_DTYPE)
            out_ag_c = out_ag_f.astype(COMPUTE_DTYPE)

        out_ag_ref[...] = out_ag_f                            # f32, lane-dense
        out_dep_ref[...] = out_dep_f

    return kernel


def _fused_cost(B, L, Dp, Mp, n_layers):
    mm = lambda m, k, n: 2 * m * k * n
    per_ex = mm(L, Dp, 2 * Dp) + mm(L, Dp, L) + mm(L, L, L)   # q|k proj, scores, row mask
    per_layer = 2 * (mm(L, L, Dp) + mm(L, Dp, Mp))            # adj@x, (.)@W  (both branches)
    per_layer += 2 * (mm(L, Mp, Mp) + mm(L, Mp, L))           # bilinear scores
    per_layer += 2 * mm(L, L, Mp)                             # A1@g_ag, A2@g_dep
    flops = B * (per_ex + n_layers * per_layer)
    transcendentals = B * L * L * (1 + 2 * n_layers)          # softmax exps
    return flops, transcendentals


def fused_gcn(x_p, adj, src_mask, fp, n_layers):
    B, L, Dp = x_p.shape
    Mp = fp["Mp"]
    Lp = _round_up(L, 128)            # lane-dense adj_ag slab, sliced back below

    # Batch tile: aim for >= 128 MXU rows (Bt * L) per grid step, capped at B.
    # Grid steps beyond one only scale on v7x (2 TCs); on v5e/v6e the grid is a
    # sequential loop, so the per-step row count is what matters.
    Bt = max(1, min(B, max(1, 128 // max(L, 1))))
    n_steps = (B + Bt - 1) // Bt
    Bpad = n_steps * Bt
    if Bpad != B:                     # zero-pad batch; padded rows masked out
        pad = ((0, Bpad - B), (0, 0), (0, 0))
        x_p = jnp.pad(x_p, pad)
        adj = jnp.pad(adj, pad)
        src_mask = jnp.pad(src_mask, pad)

    kernel = make_fused_kernel(n_layers, fp["d_model"], Bt, L, Dp, Mp, Lp)

    operands = (x_p, adj, src_mask,
                fp["wqk"], fp["bqk"], fp["aff1"], fp["aff2"],
                fp["w_dep"], fp["b_dep"], fp["w_ag"], fp["b_ag"])

    in_specs = [
        pl.BlockSpec((Bt, L, Dp), lambda b: (b, 0, 0)),           # gcn_inputs (padded)
        pl.BlockSpec((Bt, L, L), lambda b: (b, 0, 0)),            # adj
        pl.BlockSpec((Bt, 1, L), lambda b: (b, 0, 0)),            # src_mask (key mask)
        pl.BlockSpec((Dp, 2 * Dp), lambda b: (0, 0)),             # Wq|Wk fused (bf16)
        pl.BlockSpec((1, 2 * Dp), lambda b: (0, 0)),              # bq|bk fused (f32)
        pl.BlockSpec((Mp, Mp), lambda b: (0, 0)),                 # affine1 (bf16)
        pl.BlockSpec((Mp, Mp), lambda b: (0, 0)),                 # affine2 (bf16)
        pl.BlockSpec((n_layers, Dp, Mp), lambda b: (0, 0, 0)),    # W (dep) stacked
        pl.BlockSpec((n_layers, 1, Mp), lambda b: (0, 0, 0)),     # W bias stacked
        pl.BlockSpec((n_layers, Dp, Mp), lambda b: (0, 0, 0)),    # weight_list (ag) stacked
        pl.BlockSpec((n_layers, 1, Mp), lambda b: (0, 0, 0)),     # weight_list bias stacked
    ]
    out_specs = [
        pl.BlockSpec((Bt, L, Mp), lambda b: (b, 0, 0)),           # outputs_ag
        pl.BlockSpec((Bt, L, Mp), lambda b: (b, 0, 0)),           # outputs_dep
        pl.BlockSpec((Bt, L, Lp), lambda b: (b, 0, 0)),           # adj_ag (lane-dense)
    ]
    out_shape = (
        jax.ShapeDtypeStruct((Bpad, L, Mp), jnp.float32),
        jax.ShapeDtypeStruct((Bpad, L, Mp), jnp.float32),
        jax.ShapeDtypeStruct((Bpad, L, Lp), jnp.float32),
    )

    flops, transcendentals = _fused_cost(Bpad, L, Dp, Mp, n_layers)
    bytes_accessed = sum(int(a.size) * a.dtype.itemsize for a in operands)
    bytes_accessed += sum(int(math.prod(s.shape)) * 4 for s in out_shape)

    out_ag_p, out_dep_p, adj_ag_p = pl.pallas_call(
        kernel,
        out_shape=out_shape,
        grid=(n_steps,),
        in_specs=in_specs,
        out_specs=out_specs,
        compiler_params=pltpu.CompilerParams(
            dimension_semantics=("parallel",)),
        cost_estimate=pl.CostEstimate(flops=flops,
                                      transcendentals=transcendentals,
                                      bytes_accessed=bytes_accessed),
    )(*operands)

    return out_ag_p[:B], out_dep_p[:B], adj_ag_p[:B, :, :L]


# ----------------------------------------------------------------------------
# Bidirectional LSTM with pack_padded_sequence semantics (plain JAX glue).
# TODO(synk): LSTM recurrence is inherently sequential; kept in lax.scan.
# Non-recurrent input projections for both directions are hoisted out of the
# scan and fused into a single (B*T, 360) @ (360, 8H) matmul.
# ----------------------------------------------------------------------------
def lstm_bidirectional(x, lens, params, hidden=50):
    B, T, _ = x.shape

    wi_all = jnp.concatenate([params["wi_f"], params["wi_b"]], axis=0)       # (8H, In)
    bi_all = jnp.concatenate([params["bi_f"] + params["bh_f"],
                              params["bi_b"] + params["bh_b"]], axis=0)      # (8H,)
    xg = (x.reshape(B * T, -1) @ wi_all.T).reshape(B, T, 8 * hidden) + bi_all
    xg_f = xg[..., : 4 * hidden]
    xg_b = xg[..., 4 * hidden:]

    def run_dir(xg_dir, wh, reverse):
        wh_t = wh.T

        def cell(carry, t):
            h, c = carry
            gates = xg_dir[:, t, :] + h @ wh_t                               # (B, 4H)
            i = jax.nn.sigmoid(gates[:, 0:hidden])
            f = jax.nn.sigmoid(gates[:, hidden:2 * hidden])
            g = jnp.tanh(gates[:, 2 * hidden:3 * hidden])
            o = jax.nn.sigmoid(gates[:, 3 * hidden:4 * hidden])
            c_new = f * c + i * g
            h_new = o * jnp.tanh(c_new)
            valid = (t < lens).astype(x.dtype)[:, None]
            h_out = valid * h_new + (1.0 - valid) * h
            c_out = valid * c_new + (1.0 - valid) * c
            return (h_out, c_out), valid * h_new                              # 0 at pads

        h0 = jnp.zeros((B, hidden), x.dtype)
        c0 = jnp.zeros((B, hidden), x.dtype)
        ts = jnp.arange(T - 1, -1, -1) if reverse else jnp.arange(T)
        _, ys = lax.scan(cell, (h0, c0), ts)
        ys = jnp.transpose(ys, (1, 0, 2))
        if reverse:
            ys = ys[:, ::-1, :]
        return ys

    fwd = run_dir(xg_f, params["wh_f"], False)
    bwd = run_dir(xg_b, params["wh_b"], True)
    return jnp.concatenate([fwd, bwd], axis=-1)                               # (B, T, 2H)


# ----------------------------------------------------------------------------
# Full GCN forward
# ----------------------------------------------------------------------------
def gcn_forward(adj, tok, pos, post, lens, params, fused_params, n_layers):
    src_mask = (tok != 0).astype(jnp.float32)[:, None, :]      # (B, 1, L) key mask
    # (query-row mask `mask_` is derived from src_mask inside the kernel)

    # embeddings (glue); dropouts are identity in eval mode
    word_embs = params["emb"][tok]
    pos_embs = params["pos_emb"][pos]
    post_embs = params["post_emb"][post]
    embs = jnp.concatenate([word_embs, pos_embs, post_embs], axis=2)   # (B, L, 360)

    # BiLSTM encoder
    gcn_inputs = lstm_bidirectional(embs, lens, params["lstm"])        # (B, L, 100)

    # pad feature dim to 128 lanes for the fused kernel
    B, L, D = gcn_inputs.shape
    Dp = fused_params["Dp"]
    x_p = jnp.pad(gcn_inputs, ((0, 0), (0, 0), (0, Dp - D)))

    out_ag, out_dep, adj_ag = fused_gcn(x_p, adj, src_mask, fused_params, n_layers)

    mem = fused_params["mem_dim"]
    return out_ag[..., :mem], out_dep[..., :mem], adj_ag


# ----------------------------------------------------------------------------
# Deterministic parameter construction + host-side padding / casting
# ----------------------------------------------------------------------------
def make_params(key, vocab=20, pos_vocab=10, post_vocab=10,
                emb_dim=300, pos_dim=30, post_dim=30, mem_dim=50, n_layers=2):
    keys = iter(jax.random.split(key, 64))

    def p(shape, scale=0.1):
        return (scale * jax.random.normal(next(keys), shape)).astype(jnp.float32)

    d_model = 2 * mem_dim                      # 100 (bi-LSTM output)
    lstm_in = emb_dim + pos_dim + post_dim     # 360
    hidden = 50
    lstm = {
        "wi_f": p((4 * hidden, lstm_in)), "wh_f": p((4 * hidden, hidden)),
        "bi_f": p((4 * hidden,)), "bh_f": p((4 * hidden,)),
        "wi_b": p((4 * hidden, lstm_in)), "wh_b": p((4 * hidden, hidden)),
        "bi_b": p((4 * hidden,)), "bh_b": p((4 * hidden,)),
    }

    W_t, W_b, WL_t, WL_b = [], [], [], []
    for layer in range(n_layers):
        din = d_model if layer == 0 else mem_dim
        W_t.append(p((mem_dim, din)).T)        # (din, mem)
        W_b.append(p((mem_dim,)))
        WL_t.append(p((mem_dim, din)).T)
        WL_b.append(p((mem_dim,)))

    return {
        "emb": p((vocab, emb_dim)),
        "pos_emb": p((pos_vocab, pos_dim)),
        "post_emb": p((post_vocab, post_dim)),
        "lstm": lstm,
        "wq_t": p((d_model, d_model)).T, "bq": p((d_model,)),
        "wk_t": p((d_model, d_model)).T, "bk": p((d_model,)),
        "W_t": W_t, "W_b": W_b, "WL_t": WL_t, "WL_b": WL_b,
        "affine1": p((mem_dim, mem_dim)),
        "affine2": p((mem_dim, mem_dim)),
    }


def prepare_fused_params(params, n_layers, d_model, mem_dim, Dp=128, Mp=128):
    """Pad + cast every weight once on the host.

    * lane-pad to 128-aligned dims so kernel matmuls / stores are lane-dense
    * fuse Wq|Wk along the output dim (one (Dp, 2*Dp) projection matmul)
    * MXU operand weights in bf16; biases stay f32 (added to f32 accumulators)
    """
    assert n_layers == 1 or Dp == Mp, "stacked layer weights require Dp == Mp"

    def pad2(a, r, c):
        return jnp.pad(a, ((0, r - a.shape[0]), (0, c - a.shape[1])))

    def pad_bias(b, n):
        return jnp.pad(b, (0, n - b.shape[0])).reshape(1, n)

    wq = pad2(params["wq_t"], Dp, Dp)
    wk = pad2(params["wk_t"], Dp, Dp)
    wqk = jnp.concatenate([wq, wk], axis=1).astype(COMPUTE_DTYPE)        # (Dp, 2Dp)
    bqk = jnp.concatenate([pad_bias(params["bq"], Dp),
                           pad_bias(params["bk"], Dp)], axis=1)          # (1, 2Dp) f32

    w_dep = jnp.stack([pad2(params["W_t"][l], Dp, Mp)
                       for l in range(n_layers)]).astype(COMPUTE_DTYPE)
    b_dep = jnp.stack([pad_bias(params["W_b"][l], Mp) for l in range(n_layers)])
    w_ag = jnp.stack([pad2(params["WL_t"][l], Dp, Mp)
                      for l in range(n_layers)]).astype(COMPUTE_DTYPE)
    b_ag = jnp.stack([pad_bias(params["WL_b"][l], Mp) for l in range(n_layers)])

    return {
        "wqk": wqk, "bqk": bqk,
        "aff1": pad2(params["affine1"], Mp, Mp).astype(COMPUTE_DTYPE),
        "aff2": pad2(params["affine2"], Mp, Mp).astype(COMPUTE_DTYPE),
        "w_dep": w_dep, "b_dep": b_dep, "w_ag": w_ag, "b_ag": b_ag,
        "Dp": Dp, "Mp": Mp, "d_model": d_model, "mem_dim": mem_dim,
    }


if __name__ == "__main__":
    B, L = 2, 8
    n_layers = 2
    mem_dim = 50
    d_model = 2 * mem_dim

    key = jax.random.PRNGKey(0)
    kp, k_tok, k_pos, k_post, k_adj = jax.random.split(key, 5)
    params = make_params(kp, mem_dim=mem_dim, n_layers=n_layers)
    fused_params = prepare_fused_params(params, n_layers, d_model, mem_dim)

    # token ids (0 = pad); lengths [8, 6] -> batch element 1 has 2 padded steps
    tok = jax.random.randint(k_tok, (B, L), 1, 20, dtype=jnp.int32)
    lens = jnp.array([8, 6], dtype=jnp.int32)
    tok = tok.at[1, 6:].set(0)
    pos = jax.random.randint(k_pos, (B, L), 0, 10, dtype=jnp.int32)
    post = jax.random.randint(k_post, (B, L), 0, 10, dtype=jnp.int32)
    adj = (jax.random.uniform(k_adj, (B, L, L)) > 0.6).astype(jnp.float32)

    fwd = jax.jit(lambda a, t, p_, q_, ln: gcn_forward(
        a, t, p_, q_, ln, params, fused_params, n_layers))
    outputs_ag, outputs_dep, adj_ag = fwd(adj, tok, pos, post, lens)
    jax.block_until_ready((outputs_ag, outputs_dep, adj_ag))

    assert outputs_ag.shape == (B, L, mem_dim)
    assert outputs_dep.shape == (B, L, mem_dim)
    assert adj_ag.shape == (B, L, L)
    assert bool(jnp.all(jnp.isfinite(outputs_ag)))
    assert bool(jnp.all(jnp.isfinite(outputs_dep)))
    assert bool(jnp.all(jnp.isfinite(adj_ag)))
    print("KERNEL_OK")
</pallas_src>

<mosaic_0001>
module attributes {stable_mosaic.version = 11 : i64} {
  func.func @kernel(%arg0: i32, %arg1: memref<2x8x128xf32, #tpu.memory_space<vmem>>, %arg2: memref<2x8x8xf32, #tpu.memory_space<vmem>>, %arg3: memref<2x1x8xf32, #tpu.memory_space<vmem>>, %arg4: memref<128x256xbf16, #tpu.memory_space<vmem>>, %arg5: memref<1x256xf32, #tpu.memory_space<vmem>>, %arg6: memref<128x128xbf16, #tpu.memory_space<vmem>>, %arg7: memref<128x128xbf16, #tpu.memory_space<vmem>>, %arg8: memref<2x128x128xbf16, #tpu.memory_space<vmem>>, %arg9: memref<2x1x128xf32, #tpu.memory_space<vmem>>, %arg10: memref<2x128x128xbf16, #tpu.memory_space<vmem>>, %arg11: memref<2x1x128xf32, #tpu.memory_space<vmem>>, %arg12: memref<2x8x128xf32, #tpu.memory_space<vmem>>, %arg13: memref<2x8x128xf32, #tpu.memory_space<vmem>>, %arg14: memref<2x8x128xf32, #tpu.memory_space<vmem>>) attributes {dimension_semantics = [#tpu.dimension_semantics<parallel>], iteration_bounds = array<i64: 1>, scalar_prefetch = 0 : i64, scratch_operands = 0 : i64, tpu.core_type = #tpu.core_type<tc>, window_params = [{transform_indices = @transform_0, window_bounds = array<i64: 2, 8, 128>}, {transform_indices = @transform_1, window_bounds = array<i64: 2, 8, 8>}, {transform_indices = @transform_2, window_bounds = array<i64: 2, 1, 8>}, {pipeline_mode = #tpu.pipeline_mode<synchronous>, transform_indices = @transform_3, window_bounds = array<i64: 128, 256>}, {pipeline_mode = #tpu.pipeline_mode<synchronous>, transform_indices = @transform_4, window_bounds = array<i64: 1, 256>}, {pipeline_mode = #tpu.pipeline_mode<synchronous>, transform_indices = @transform_5, window_bounds = array<i64: 128, 128>}, {pipeline_mode = #tpu.pipeline_mode<synchronous>, transform_indices = @transform_6, window_bounds = array<i64: 128, 128>}, {pipeline_mode = #tpu.pipeline_mode<synchronous>, transform_indices = @transform_7, window_bounds = array<i64: 2, 128, 128>}, {pipeline_mode = #tpu.pipeline_mode<synchronous>, transform_indices = @transform_8, window_bounds = array<i64: 2, 1, 128>}, {pipeline_mode = #tpu.pipeline_mode<synchronous>, transform_indices = @transform_9, window_bounds = array<i64: 2, 128, 128>}, {pipeline_mode = #tpu.pipeline_mode<synchronous>, transform_indices = @transform_10, window_bounds = array<i64: 2, 1, 128>}, {transform_indices = @transform_11, window_bounds = array<i64: 2, 8, 128>}, {transform_indices = @transform_12, window_bounds = array<i64: 2, 8, 128>}, {transform_indices = @transform_13, window_bounds = array<i64: 2, 8, 128>}]} {
    %c0 = arith.constant 0 : index
    %c0_0 = arith.constant 0 : index
    %c0_1 = arith.constant 0 : index
    %0 = vector.load %arg1[%c0, %c0_0, %c0_1] : memref<2x8x128xf32, #tpu.memory_space<vmem>>, vector<2x8x128xf32>
    %1 = vector.shape_cast %0 : vector<2x8x128xf32> to vector<16x128xf32>
    %2 = arith.truncf %1 : vector<16x128xf32> to vector<16x128xbf16>
    %c0_2 = arith.constant 0 : index
    %c0_3 = arith.constant 0 : index
    %3 = vector.load %arg4[%c0_2, %c0_3] : memref<128x256xbf16, #tpu.memory_space<vmem>>, vector<128x256xbf16>
    %cst = arith.constant dense<0.000000e+00> : vector<16x256xf32>
    %4 = tpu.matmul %2, %3, %cst {dimension_numbers = #tpu.dot_dimension_numbers<[1], [0], [0], [1], [0, 0, 1, 1], [], []>} : vector<16x128xbf16>, vector<128x256xbf16>, vector<16x256xf32> -> vector<16x256xf32>
    %c0_4 = arith.constant 0 : index
    %c0_5 = arith.constant 0 : index
    %5 = vector.load %arg5[%c0_4, %c0_5] : memref<1x256xf32, #tpu.memory_space<vmem>>, vector<1x256xf32>
    %6 = vector.broadcast %5 : vector<1x256xf32> to vector<16x256xf32>
    %7 = arith.addf %4, %6 : vector<16x256xf32>
    %8 = vector.extract_strided_slice %7 {offsets = [0, 0], sizes = [16, 128], strides = [1, 1]} : vector<16x256xf32> to vector<16x128xf32>
    %9 = vector.shape_cast %8 : vector<16x128xf32> to vector<2x8x128xf32>
    %10 = arith.truncf %9 : vector<2x8x128xf32> to vector<2x8x128xbf16>
    %11 = vector.extract_strided_slice %7 {offsets = [0, 128], sizes = [16, 128], strides = [1, 1]} : vector<16x256xf32> to vector<16x128xf32>
    %12 = vector.shape_cast %11 : vector<16x128xf32> to vector<2x8x128xf32>
    %13 = arith.truncf %12 : vector<2x8x128xf32> to vector<2x8x128xbf16>
    "tpu.trace_start"() <{level = 10 : i32, message = "bqd,bkd->bqk"}> : () -> ()
    %cst_6 = arith.constant dense<0.000000e+00> : vector<2x8x8xf32>
    %14 = tpu.matmul %10, %13, %cst_6 {dimension_numbers = #tpu.dot_dimension_numbers<[2], [2], [1], [1], [0, 0, 0, 1, 1, 1], [0], [0]>} : vector<2x8x128xbf16>, vector<2x8x128xbf16>, vector<2x8x8xf32> -> vector<2x8x8xf32>
    "tpu.trace_stop"() : () -> ()
    %cst_7 = arith.constant 1.000000e-01 : f32
    %15 = vector.broadcast %cst_7 : f32 to vector<2x8x8xf32>
    %16 = arith.mulf %14, %15 : vector<2x8x8xf32>
    %c0_8 = arith.constant 0 : index
    %c0_9 = arith.constant 0 : index
    %c0_10 = arith.constant 0 : index
    %17 = vector.load %arg3[%c0_8, %c0_9, %c0_10] : memref<2x1x8xf32, #tpu.memory_space<vmem>>, vector<2x1x8xf32>
    %cst_11 = arith.constant 0.000000e+00 : f32
    %18 = vector.broadcast %cst_11 : f32 to vector<2x1x8xf32>
    %19 = arith.cmpf oeq, %17, %18 : vector<2x1x8xf32>
    %cst_12 = arith.constant -1.000000e+09 : f32
    %20 = vector.shape_cast %19 : vector<2x1x8xi1> to vector<2x1x8xi1>
    %21 = vector.broadcast %20 : vector<2x1x8xi1> to vector<2x8x8xi1>
    %22 = vector.broadcast %cst_12 : f32 to vector<2x8x8xf32>
    %23 = arith.select %21, %22, %16 : vector<2x8x8xi1>, vector<2x8x8xf32>
    %cst_13 = arith.constant dense<0xFF800000> : vector<2x8xf32>
    %24 = vector.multi_reduction <maximumf>, %23, %cst_13 [2] : vector<2x8x8xf32> to vector<2x8xf32>
    %25 = vector.shape_cast %24 : vector<2x8xf32> to vector<2x8x1xf32>
    %26 = vector.broadcast %25 : vector<2x8x1xf32> to vector<2x8x8xf32>
    %27 = arith.subf %23, %26 : vector<2x8x8xf32>
    %28 = math.exp %27 : vector<2x8x8xf32>
    %cst_14 = arith.constant dense<0.000000e+00> : vector<2x8xf32>
    %29 = vector.multi_reduction <add>, %28, %cst_14 [2] : vector<2x8x8xf32> to vector<2x8xf32>
    %30 = vector.shape_cast %29 : vector<2x8xf32> to vector<2x8x1xf32>
    %31 = vector.broadcast %30 : vector<2x8x1xf32> to vector<2x8x8xf32>
    %32 = arith.divf %28, %31 : vector<2x8x8xf32>
    %33 = tpu.iota {dimensions = array<i32: 0>} : vector<8x8xi32>
    %34 = tpu.iota {dimensions = array<i32: 1>} : vector<8x8xi32>
    %35 = arith.cmpi eq, %33, %34 : vector<8x8xi32>
    %36 = arith.extui %35 : vector<8x8xi1> to vector<8x8xi32>
    %37 = arith.sitofp %36 : vector<8x8xi32> to vector<8x8xf32>
    %cst_15 = arith.constant 1.000000e+00 : f32
    %38 = vector.broadcast %cst_15 : f32 to vector<8x8xf32>
    %39 = arith.subf %38, %37 : vector<8x8xf32>
    %40 = vector.shape_cast %39 : vector<8x8xf32> to vector<1x8x8xf32>
    %41 = vector.broadcast %40 : vector<1x8x8xf32> to vector<2x8x8xf32>
    %42 = arith.mulf %32, %41 : vector<2x8x8xf32>
    %43 = vector.shape_cast %37 : vector<8x8xf32> to vector<1x8x8xf32>
    %44 = vector.broadcast %43 : vector<1x8x8xf32> to vector<2x8x8xf32>
    %45 = arith.addf %42, %44 : vector<2x8x8xf32>
    %46 = vector.shape_cast %37 : vector<8x8xf32> to vector<1x8x8xf32>
    %47 = vector.broadcast %46 : vector<1x8x8xf32> to vector<2x8x8xf32>
    %48 = vector.broadcast %17 : vector<2x1x8xf32> to vector<2x8x8xf32>
    %49 = arith.mulf %47, %48 : vector<2x8x8xf32>
    "tpu.trace_start"() <{level = 10 : i32, message = "bij,bjk->bik"}> : () -> ()
    %cst_16 = arith.constant dense<0.000000e+00> : vector<2x8x8xf32>
    %50 = tpu.matmul %49, %45, %cst_16 {dimension_numbers = #tpu.dot_dimension_numbers<[2], [1], [1], [2], [0, 0, 0, 1, 1, 2], [0], [0]>} : vector<2x8x8xf32>, vector<2x8x8xf32>, vector<2x8x8xf32> -> vector<2x8x8xf32>
    %cst_17 = arith.constant 0.000000e+00 : f32
    "tpu.trace_stop"() : () -> ()
    %51 = vector.broadcast %cst_17 : f32 to vector<2x8x120xf32>
    %52 = tpu.concatenate %50, %51 in 2 : vector<2x8x8xf32>, vector<2x8x120xf32> -> vector<2x8x128xf32>
    %c0_18 = arith.constant 0 : index
    %c0_19 = arith.constant 0 : index
    %c0_20 = arith.constant 0 : index
    %53 = vector.load %arg14[%c0_18, %c0_19, %c0_20] : memref<2x8x128xf32, #tpu.memory_space<vmem>>, vector<2x8x128xf32>
    tpu.vector_store %arg14[%c0_18, %c0_19, %c0_20], %52 {strides = array<i32>} : memref<2x8x128xf32, #tpu.memory_space<vmem>>, vector<2x8x128xf32>,
    %c0_21 = arith.constant 0 : index
    %c0_22 = arith.constant 0 : index
    %c0_23 = arith.constant 0 : index
    %54 = vector.load %arg2[%c0_21, %c0_22, %c0_23] : memref<2x8x8xf32, #tpu.memory_space<vmem>>, vector<2x8x8xf32>
    %cst_24 = arith.constant dense<0.000000e+00> : vector<2x8xf32>
    %55 = vector.multi_reduction <add>, %54, %cst_24 [2] : vector<2x8x8xf32> to vector<2x8xf32>
    %56 = vector.shape_cast %55 : vector<2x8xf32> to vector<2x8x1xf32>
    %cst_25 = arith.constant 1.000000e+00 : f32
    %57 = vector.broadcast %cst_25 : f32 to vector<2x8x1xf32>
    %58 = arith.addf %56, %57 : vector<2x8x1xf32>
    %59 = tpu.reciprocal %58 {approx = true} : vector<2x8x1xf32> -> vector<2x8x1xf32>
    %cst_26 = arith.constant dense<0.000000e+00> : vector<2x8xf32>
    %60 = vector.multi_reduction <add>, %50, %cst_26 [2] : vector<2x8x8xf32> to vector<2x8xf32>
    %61 = vector.shape_cast %60 : vector<2x8xf32> to vector<2x8x1xf32>
    %cst_27 = arith.constant 1.000000e+00 : f32
    %62 = vector.broadcast %cst_27 : f32 to vector<2x8x1xf32>
    %63 = arith.addf %61, %62 : vector<2x8x1xf32>
    %64 = tpu.reciprocal %63 {approx = true} : vector<2x8x1xf32> -> vector<2x8x1xf32>
    %65 = arith.truncf %54 : vector<2x8x8xf32> to vector<2x8x8xbf16>
    %66 = arith.truncf %50 : vector<2x8x8xf32> to vector<2x8x8xbf16>
    %c0_28 = arith.constant 0 : index
    %c0_29 = arith.constant 0 : index
    %67 = vector.load %arg6[%c0_28, %c0_29] : memref<128x128xbf16, #tpu.memory_space<vmem>>, vector<128x128xbf16>
    %c0_30 = arith.constant 0 : index
    %c0_31 = arith.constant 0 : index
    %68 = vector.load %arg7[%c0_30, %c0_31] : memref<128x128xbf16, #tpu.memory_space<vmem>>, vector<128x128xbf16>
    %69 = arith.truncf %0 : vector<2x8x128xf32> to vector<2x8x128xbf16>
    %70 = arith.truncf %0 : vector<2x8x128xf32> to vector<2x8x128xbf16>
    %c0_32 = arith.constant 0 : index
    %c0_33 = arith.constant 0 : index
    %c0_34 = arith.constant 0 : index
    %71 = vector.load %arg8[%c0_32, %c0_33, %c0_34] : memref<2x128x128xbf16, #tpu.memory_space<vmem>>, vector<1x128x128xbf16>
    %72 = vector.shape_cast %71 : vector<1x128x128xbf16> to vector<128x128xbf16>
    %c0_35 = arith.constant 0 : index
    %c0_36 = arith.constant 0 : index
    %c0_37 = arith.constant 0 : index
    %73 = vector.load %arg9[%c0_35, %c0_36, %c0_37] : memref<2x1x128xf32, #tpu.memory_space<vmem>>, vector<1x1x128xf32>
    %74 = vector.shape_cast %73 : vector<1x1x128xf32> to vector<1x128xf32>
    %c0_38 = arith.constant 0 : index
    %c0_39 = arith.constant 0 : index
    %c0_40 = arith.constant 0 : index
    %75 = vector.load %arg10[%c0_38, %c0_39, %c0_40] : memref<2x128x128xbf16, #tpu.memory_space<vmem>>, vector<1x128x128xbf16>
    %76 = vector.shape_cast %75 : vector<1x128x128xbf16> to vector<128x128xbf16>
    %c0_41 = arith.constant 0 : index
    %c0_42 = arith.constant 0 : index
    %c0_43 = arith.constant 0 : index
    %77 = vector.load %arg11[%c0_41, %c0_42, %c0_43] : memref<2x1x128xf32, #tpu.memory_space<vmem>>, vector<1x1x128xf32>
    %78 = vector.shape_cast %77 : vector<1x1x128xf32> to vector<1x128xf32>
    "tpu.trace_start"() <{level = 10 : i32, message = "bij,bjd->bid"}> : () -> ()
    %cst_44 = arith.constant dense<0.000000e+00> : vector<2x8x128xf32>
    %79 = tpu.matmul %65, %69, %cst_44 {dimension_numbers = #tpu.dot_dimension_numbers<[2], [1], [1], [2], [0, 0, 0, 1, 1, 2], [0], [0]>} : vector<2x8x8xbf16>, vector<2x8x128xbf16>, vector<2x8x128xf32> -> vector<2x8x128xf32>
    "tpu.trace_stop"() : () -> ()
    %80 = vector.shape_cast %79 : vector<2x8x128xf32> to vector<16x128xf32>
    %81 = arith.truncf %80 : vector<16x128xf32> to vector<16x128xbf16>
    %cst_45 = arith.constant dense<0.000000e+00> : vector<16x128xf32>
    %82 = tpu.matmul %81, %72, %cst_45 {dimension_numbers = #tpu.dot_dimension_numbers<[1], [0], [0], [1], [0, 0, 1, 1], [], []>} : vector<16x128xbf16>, vector<128x128xbf16>, vector<16x128xf32> -> vector<16x128xf32>
    %83 = vector.shape_cast %82 : vector<16x128xf32> to vector<2x8x128xf32>
    %84 = vector.shape_cast %74 : vector<1x128xf32> to vector<1x1x128xf32>
    %85 = vector.broadcast %84 : vector<1x1x128xf32> to vector<2x8x128xf32>
    %86 = arith.addf %83, %85 : vector<2x8x128xf32>
    %87 = vector.broadcast %59 : vector<2x8x1xf32> to vector<2x8x128xf32>
    %88 = arith.mulf %86, %87 : vector<2x8x128xf32>
    %cst_46 = arith.constant 0.000000e+00 : f32
    %89 = vector.broadcast %cst_46 : f32 to vector<2x8x128xf32>
    %90 = arith.maximumf %88, %89 : vector<2x8x128xf32>
    "tpu.trace_start"() <{level = 10 : i32, message = "bij,bjd->bid"}> : () -> ()
    %cst_47 = arith.constant dense<0.000000e+00> : vector<2x8x128xf32>
    %91 = tpu.matmul %66, %70, %cst_47 {dimension_numbers = #tpu.dot_dimension_numbers<[2], [1], [1], [2], [0, 0, 0, 1, 1, 2], [0], [0]>} : vector<2x8x8xbf16>, vector<2x8x128xbf16>, vector<2x8x128xf32> -> vector<2x8x128xf32>
    "tpu.trace_stop"() : () -> ()
    %92 = vector.shape_cast %91 : vector<2x8x128xf32> to vector<16x128xf32>
    %93 = arith.truncf %92 : vector<16x128xf32> to vector<16x128xbf16>
    %cst_48 = arith.constant dense<0.000000e+00> : vector<16x128xf32>
    %94 = tpu.matmul %93, %76, %cst_48 {dimension_numbers = #tpu.dot_dimension_numbers<[1], [0], [0], [1], [0, 0, 1, 1], [], []>} : vector<16x128xbf16>, vector<128x128xbf16>, vector<16x128xf32> -> vector<16x128xf32>
    %95 = vector.shape_cast %94 : vector<16x128xf32> to vector<2x8x128xf32>
    %96 = vector.shape_cast %78 : vector<1x128xf32> to vector<1x1x128xf32>
    %97 = vector.broadcast %96 : vector<1x1x128xf32> to vector<2x8x128xf32>
    %98 = arith.addf %95, %97 : vector<2x8x128xf32>
    %99 = vector.broadcast %64 : vector<2x8x1xf32> to vector<2x8x128xf32>
    %100 = arith.mulf %98, %99 : vector<2x8x128xf32>
    %cst_49 = arith.constant 0.000000e+00 : f32
    %101 = vector.broadcast %cst_49 : f32 to vector<2x8x128xf32>
    %102 = arith.maximumf %100, %101 : vector<2x8x128xf32>
    %103 = arith.truncf %90 : vector<2x8x128xf32> to vector<2x8x128xbf16>
    %104 = arith.truncf %102 : vector<2x8x128xf32> to vector<2x8x128xbf16>
    %105 = vector.shape_cast %90 : vector<2x8x128xf32> to vector<16x128xf32>
    %106 = arith.truncf %105 : vector<16x128xf32> to vector<16x128xbf16>
    %cst_50 = arith.constant dense<0.000000e+00> : vector<16x128xf32>
    %107 = tpu.matmul %106, %67, %cst_50 {dimension_numbers = #tpu.dot_dimension_numbers<[1], [0], [0], [1], [0, 0, 1, 1], [], []>} : vector<16x128xbf16>, vector<128x128xbf16>, vector<16x128xf32> -> vector<16x128xf32>
    %108 = vector.shape_cast %107 : vector<16x128xf32> to vector<2x8x128xf32>
    %109 = vector.shape_cast %102 : vector<2x8x128xf32> to vector<16x128xf32>
    %110 = arith.truncf %109 : vector<16x128xf32> to vector<16x128xbf16>
    %cst_51 = arith.constant dense<0.000000e+00> : vector<16x128xf32>
    %111 = tpu.matmul %110, %68, %cst_51 {dimension_numbers = #tpu.dot_dimension_numbers<[1], [0], [0], [1], [0, 0, 1, 1], [], []>} : vector<16x128xbf16>, vector<128x128xbf16>, vector<16x128xf32> -> vector<16x128xf32>
    %112 = vector.shape_cast %111 : vector<16x128xf32> to vector<2x8x128xf32>
    %113 = arith.truncf %108 : vector<2x8x128xf32> to vector<2x8x128xbf16>
    "tpu.trace_start"() <{level = 10 : i32, message = "bqm,bkm->bqk"}> : () -> ()
    %cst_52 = arith.constant dense<0.000000e+00> : vector<2x8x8xf32>
    %114 = tpu.matmul %113, %104, %cst_52 {dimension_numbers = #tpu.dot_dimension_numbers<[2], [2], [1], [1], [0, 0, 0, 1, 1, 1], [0], [0]>} : vector<2x8x128xbf16>, vector<2x8x128xbf16>, vector<2x8x8xf32> -> vector<2x8x8xf32>
    "tpu.trace_stop"() : () -> ()
    %115 = arith.truncf %112 : vector<2x8x128xf32> to vector<2x8x128xbf16>
    "tpu.trace_start"() <{level = 10 : i32, message = "bqm,bkm->bqk"}> : () -> ()
    %cst_53 = arith.constant dense<0.000000e+00> : vector<2x8x8xf32>
    %116 = tpu.matmul %115, %103, %cst_53 {dimension_numbers = #tpu.dot_dimension_numbers<[2], [2], [1], [1], [0, 0, 0, 1, 1, 1], [0], [0]>} : vector<2x8x128xbf16>, vector<2x8x128xbf16>, vector<2x8x8xf32> -> vector<2x8x8xf32>
    "tpu.trace_stop"() : () -> ()
    %cst_54 = arith.constant dense<0xFF800000> : vector<2x8xf32>
    %117 = vector.multi_reduction <maximumf>, %114, %cst_54 [2] : vector<2x8x8xf32> to vector<2x8xf32>
    %118 = vector.shape_cast %117 : vector<2x8xf32> to vector<2x8x1xf32>
    %119 = vector.broadcast %118 : vector<2x8x1xf32> to vector<2x8x8xf32>
    %120 = arith.subf %114, %119 : vector<2x8x8xf32>
    %121 = math.exp %120 : vector<2x8x8xf32>
    %cst_55 = arith.constant dense<0.000000e+00> : vector<2x8xf32>
    %122 = vector.multi_reduction <add>, %121, %cst_55 [2] : vector<2x8x8xf32> to vector<2x8xf32>
    %123 = vector.shape_cast %122 : vector<2x8xf32> to vector<2x8x1xf32>
    %124 = vector.broadcast %123 : vector<2x8x1xf32> to vector<2x8x8xf32>
    %125 = arith.divf %121, %124 : vector<2x8x8xf32>
    %126 = arith.truncf %125 : vector<2x8x8xf32> to vector<2x8x8xbf16>
    %cst_56 = arith.constant dense<0xFF800000> : vector<2x8xf32>
    %127 = vector.multi_reduction <maximumf>, %116, %cst_56 [2] : vector<2x8x8xf32> to vector<2x8xf32>
    %128 = vector.shape_cast %127 : vector<2x8xf32> to vector<2x8x1xf32>
    %129 = vector.broadcast %128 : vector<2x8x1xf32> to vector<2x8x8xf32>
    %130 = arith.subf %116, %129 : vector<2x8x8xf32>
    %131 = math.exp %130 : vector<2x8x8xf32>
    %cst_57 = arith.constant dense<0.000000e+00> : vector<2x8xf32>
    %132 = vector.multi_reduction <add>, %131, %cst_57 [2] : vector<2x8x8xf32> to vector<2x8xf32>
    %133 = vector.shape_cast %132 : vector<2x8xf32> to vector<2x8x1xf32>
    %134 = vector.broadcast %133 : vector<2x8x1xf32> to vector<2x8x8xf32>
    %135 = arith.divf %131, %134 : vector<2x8x8xf32>
    %136 = arith.truncf %135 : vector<2x8x8xf32> to vector<2x8x8xbf16>
    "tpu.trace_start"() <{level = 10 : i32, message = "bqk,bkm->bqm"}> : () -> ()
    %cst_58 = arith.constant dense<0.000000e+00> : vector<2x8x128xf32>
    %137 = tpu.matmul %126, %104, %cst_58 {dimension_numbers = #tpu.dot_dimension_numbers<[2], [1], [1], [2], [0, 0, 0, 1, 1, 2], [0], [0]>} : vector<2x8x8xbf16>, vector<2x8x128xbf16>, vector<2x8x128xf32> -> vector<2x8x128xf32>
    %cst_59 = arith.constant dense<0.000000e+00> : vector<2x8x128xf32>
    %138 = tpu.matmul %136, %103, %cst_59 {dimension_numbers = #tpu.dot_dimension_numbers<[2], [1], [1], [2], [0, 0, 0, 1, 1, 2], [0], [0]>} : vector<2x8x8xbf16>, vector<2x8x128xbf16>, vector<2x8x128xf32> -> vector<2x8x128xf32>
    "tpu.trace_stop"() : () -> ()
    %139 = arith.truncf %137 : vector<2x8x128xf32> to vector<2x8x128xbf16>
    %140 = arith.truncf %138 : vector<2x8x128xf32> to vector<2x8x128xbf16>
    %c1 = arith.constant 1 : index
    %c0_60 = arith.constant 0 : index
    %c0_61 = arith.constant 0 : index
    %141 = vector.load %arg8[%c1, %c0_60, %c0_61] : memref<2x128x128xbf16, #tpu.memory_space<vmem>>, vector<1x128x128xbf16>
    %142 = vector.shape_cast %141 : vector<1x128x128xbf16> to vector<128x128xbf16>
    %c1_62 = arith.constant 1 : index
    %c0_63 = arith.constant 0 : index
    %c0_64 = arith.constant 0 : index
    %143 = vector.load %arg9[%c1_62, %c0_63, %c0_64] : memref<2x1x128xf32, #tpu.memory_space<vmem>>, vector<1x1x128xf32>
    %144 = vector.shape_cast %143 : vector<1x1x128xf32> to vector<1x128xf32>
    %c1_65 = arith.constant 1 : index
    %c0_66 = arith.constant 0 : index
    %c0_67 = arith.constant 0 : index
    %145 = vector.load %arg10[%c1_65, %c0_66, %c0_67] : memref<2x128x128xbf16, #tpu.memory_space<vmem>>, vector<1x128x128xbf16>
    %146 = vector.shape_cast %145 : vector<1x128x128xbf16> to vector<128x128xbf16>
    %c1_68 = arith.constant 1 : index
    %c0_69 = arith.constant 0 : index
    %c0_70 = arith.constant 0 : index
    %147 = vector.load %arg11[%c1_68, %c0_69, %c0_70] : memref<2x1x128xf32, #tpu.memory_space<vmem>>, vector<1x1x128xf32>
    %148 = vector.shape_cast %147 : vector<1x1x128xf32> to vector<1x128xf32>
    "tpu.trace_start"() <{level = 10 : i32, message = "bij,bjd->bid"}> : () -> ()
    %cst_71 = arith.constant dense<0.000000e+00> : vector<2x8x128xf32>
    %149 = tpu.matmul %65, %139, %cst_71 {dimension_numbers = #tpu.dot_dimension_numbers<[2], [1], [1], [2], [0, 0, 0, 1, 1, 2], [0], [0]>} : vector<2x8x8xbf16>, vector<2x8x128xbf16>, vector<2x8x128xf32> -> vector<2x8x128xf32>
    "tpu.trace_stop"() : () -> ()
    %150 = vector.shape_cast %149 : vector<2x8x128xf32> to vector<16x128xf32>
    %151 = arith.truncf %150 : vector<16x128xf32> to vector<16x128xbf16>
    %cst_72 = arith.constant dense<0.000000e+00> : vector<16x128xf32>
    %152 = tpu.matmul %151, %142, %cst_72 {dimension_numbers = #tpu.dot_dimension_numbers<[1], [0], [0], [1], [0, 0, 1, 1], [], []>} : vector<16x128xbf16>, vector<128x128xbf16>, vector<16x128xf32> -> vector<16x128xf32>
    %153 = vector.shape_cast %152 : vector<16x128xf32> to vector<2x8x128xf32>
    %154 = vector.shape_cast %144 : vector<1x128xf32> to vector<1x1x128xf32>
    %155 = vector.broadcast %154 : vector<1x1x128xf32> to vector<2x8x128xf32>
    %156 = arith.addf %153, %155 : vector<2x8x128xf32>
    %157 = vector.broadcast %59 : vector<2x8x1xf32> to vector<2x8x128xf32>
    %158 = arith.mulf %156, %157 : vector<2x8x128xf32>
    %cst_73 = arith.constant 0.000000e+00 : f32
    %159 = vector.broadcast %cst_73 : f32 to vector<2x8x128xf32>
    %160 = arith.maximumf %158, %159 : vector<2x8x128xf32>
    "tpu.trace_start"() <{level = 10 : i32, message = "bij,bjd->bid"}> : () -> ()
    %cst_74 = arith.constant dense<0.000000e+00> : vector<2x8x128xf32>
    %161 = tpu.matmul %66, %140, %cst_74 {dimension_numbers = #tpu.dot_dimension_numbers<[2], [1], [1], [2], [0, 0, 0, 1, 1, 2], [0], [0]>} : vector<2x8x8xbf16>, vector<2x8x128xbf16>, vector<2x8x128xf32> -> vector<2x8x128xf32>
    "tpu.trace_stop"() : () -> ()
    %162 = vector.shape_cast %161 : vector<2x8x128xf32> to vector<16x128xf32>
    %163 = arith.truncf %162 : vector<16x128xf32> to vector<16x128xbf16>
    %cst_75 = arith.constant dense<0.000000e+00> : vector<16x128xf32>
    %164 = tpu.matmul %163, %146, %cst_75 {dimension_numbers = #tpu.dot_dimension_numbers<[1], [0], [0], [1], [0, 0, 1, 1], [], []>} : vector<16x128xbf16>, vector<128x128xbf16>, vector<16x128xf32> -> vector<16x128xf32>
    %165 = vector.shape_cast %164 : vector<16x128xf32> to vector<2x8x128xf32>
    %166 = vector.shape_cast %148 : vector<1x128xf32> to vector<1x1x128xf32>
    %167 = vector.broadcast %166 : vector<1x1x128xf32> to vector<2x8x128xf32>
    %168 = arith.addf %165, %167 : vector<2x8x128xf32>
    %169 = vector.broadcast %64 : vector<2x8x1xf32> to vector<2x8x128xf32>
    %170 = arith.mulf %168, %169 : vector<2x8x128xf32>
    %cst_76 = arith.constant 0.000000e+00 : f32
    %171 = vector.broadcast %cst_76 : f32 to vector<2x8x128xf32>
    %172 = arith.maximumf %170, %171 : vector<2x8x128xf32>
    %173 = arith.truncf %160 : vector<2x8x128xf32> to vector<2x8x128xbf16>
    %174 = arith.truncf %172 : vector<2x8x128xf32> to vector<2x8x128xbf16>
    %175 = vector.shape_cast %160 : vector<2x8x128xf32> to vector<16x128xf32>
    %176 = arith.truncf %175 : vector<16x128xf32> to vector<16x128xbf16>
    %cst_77 = arith.constant dense<0.000000e+00> : vector<16x128xf32>
    %177 = tpu.matmul %176, %67, %cst_77 {dimension_numbers = #tpu.dot_dimension_numbers<[1], [0], [0], [1], [0, 0, 1, 1], [], []>} : vector<16x128xbf16>, vector<128x128xbf16>, vector<16x128xf32> -> vector<16x128xf32>
    %178 = vector.shape_cast %177 : vector<16x128xf32> to vector<2x8x128xf32>
    %179 = vector.shape_cast %172 : vector<2x8x128xf32> to vector<16x128xf32>
    %180 = arith.truncf %179 : vector<16x128xf32> to vector<16x128xbf16>
    %cst_78 = arith.constant dense<0.000000e+00> : vector<16x128xf32>
    %181 = tpu.matmul %180, %68, %cst_78 {dimension_numbers = #tpu.dot_dimension_numbers<[1], [0], [0], [1], [0, 0, 1, 1], [], []>} : vector<16x128xbf16>, vector<128x128xbf16>, vector<16x128xf32> -> vector<16x128xf32>
    %182 = vector.shape_cast %181 : vector<16x128xf32> to vector<2x8x128xf32>
    %183 = arith.truncf %178 : vector<2x8x128xf32> to vector<2x8x128xbf16>
    "tpu.trace_start"() <{level = 10 : i32, message = "bqm,bkm->bqk"}> : () -> ()
    %cst_79 = arith.constant dense<0.000000e+00> : vector<2x8x8xf32>
    %184 = tpu.matmul %183, %174, %cst_79 {dimension_numbers = #tpu.dot_dimension_numbers<[2], [2], [1], [1], [0, 0, 0, 1, 1, 1], [0], [0]>} : vector<2x8x128xbf16>, vector<2x8x128xbf16>, vector<2x8x8xf32> -> vector<2x8x8xf32>
    "tpu.trace_stop"() : () -> ()
    %185 = arith.truncf %182 : vector<2x8x128xf32> to vector<2x8x128xbf16>
    "tpu.trace_start"() <{level = 10 : i32, message = "bqm,bkm->bqk"}> : () -> ()
    %cst_80 = arith.constant dense<0.000000e+00> : vector<2x8x8xf32>
    %186 = tpu.matmul %185, %173, %cst_80 {dimension_numbers = #tpu.dot_dimension_numbers<[2], [2], [1], [1], [0, 0, 0, 1, 1, 1], [0], [0]>} : vector<2x8x128xbf16>, vector<2x8x128xbf16>, vector<2x8x8xf32> -> vector<2x8x8xf32>
    "tpu.trace_stop"() : () -> ()
    %cst_81 = arith.constant dense<0xFF800000> : vector<2x8xf32>
    %187 = vector.multi_reduction <maximumf>, %184, %cst_81 [2] : vector<2x8x8xf32> to vector<2x8xf32>
    %188 = vector.shape_cast %187 : vector<2x8xf32> to vector<2x8x1xf32>
    %189 = vector.broadcast %188 : vector<2x8x1xf32> to vector<2x8x8xf32>
    %190 = arith.subf %184, %189 : vector<2x8x8xf32>
    %191 = math.exp %190 : vector<2x8x8xf32>
    %cst_82 = arith.constant dense<0.000000e+00> : vector<2x8xf32>
    %192 = vector.multi_reduction <add>, %191, %cst_82 [2] : vector<2x8x8xf32> to vector<2x8xf32>
    %193 = vector.shape_cast %192 : vector<2x8xf32> to vector<2x8x1xf32>
    %194 = vector.broadcast %193 : vector<2x8x1xf32> to vector<2x8x8xf32>
    %195 = arith.divf %191, %194 : vector<2x8x8xf32>
    %196 = arith.truncf %195 : vector<2x8x8xf32> to vector<2x8x8xbf16>
    %cst_83 = arith.constant dense<0xFF800000> : vector<2x8xf32>
    %197 = vector.multi_reduction <maximumf>, %186, %cst_83 [2] : vector<2x8x8xf32> to vector<2x8xf32>
    %198 = vector.shape_cast %197 : vector<2x8xf32> to vector<2x8x1xf32>
    %199 = vector.broadcast %198 : vector<2x8x1xf32> to vector<2x8x8xf32>
    %200 = arith.subf %186, %199 : vector<2x8x8xf32>
    %201 = math.exp %200 : vector<2x8x8xf32>
    %cst_84 = arith.constant dense<0.000000e+00> : vector<2x8xf32>
    %202 = vector.multi_reduction <add>, %201, %cst_84 [2] : vector<2x8x8xf32> to vector<2x8xf32>
    %203 = vector.shape_cast %202 : vector<2x8xf32> to vector<2x8x1xf32>
    %204 = vector.broadcast %203 : vector<2x8x1xf32> to vector<2x8x8xf32>
    %205 = arith.divf %201, %204 : vector<2x8x8xf32>
    %206 = arith.truncf %205 : vector<2x8x8xf32> to vector<2x8x8xbf16>
    "tpu.trace_start"() <{level = 10 : i32, message = "bqk,bkm->bqm"}> : () -> ()
    %cst_85 = arith.constant dense<0.000000e+00> : vector<2x8x128xf32>
    %207 = tpu.matmul %196, %174, %cst_85 {dimension_numbers = #tpu.dot_dimension_numbers<[2], [1], [1], [2], [0, 0, 0, 1, 1, 2], [0], [0]>} : vector<2x8x8xbf16>, vector<2x8x128xbf16>, vector<2x8x128xf32> -> vector<2x8x128xf32>
    %cst_86 = arith.constant dense<0.000000e+00> : vector<2x8x128xf32>
    %208 = tpu.matmul %206, %173, %cst_86 {dimension_numbers = #tpu.dot_dimension_numbers<[2], [1], [1], [2], [0, 0, 0, 1, 1, 2], [0], [0]>} : vector<2x8x8xbf16>, vector<2x8x128xbf16>, vector<2x8x128xf32> -> vector<2x8x128xf32>
    "tpu.trace_stop"() : () -> ()
    %c0_87 = arith.constant 0 : index
    %c0_88 = arith.constant 0 : index
    %c0_89 = arith.constant 0 : index
    %209 = vector.load %arg12[%c0_87, %c0_88, %c0_89] : memref<2x8x128xf32, #tpu.memory_space<vmem>>, vector<2x8x128xf32>
    tpu.vector_store %arg12[%c0_87, %c0_88, %c0_89], %208 {strides = array<i32>} : memref<2x8x128xf32, #tpu.memory_space<vmem>>, vector<2x8x128xf32>,
    %c0_90 = arith.constant 0 : index
    %c0_91 = arith.constant 0 : index
    %c0_92 = arith.constant 0 : index
    %210 = vector.load %arg13[%c0_90, %c0_91, %c0_92] : memref<2x8x128xf32, #tpu.memory_space<vmem>>, vector<2x8x128xf32>
    tpu.vector_store %arg13[%c0_90, %c0_91, %c0_92], %207 {strides = array<i32>} : memref<2x8x128xf32, #tpu.memory_space<vmem>>, vector<2x8x128xf32>,
    return
  }
  func.func @transform_0(%arg0: i32) -> (i32, i32, i32) {
    %c0_i32 = arith.constant 0 : i32
    %c0_i32_0 = arith.constant 0 : i32
    %c0_i32_1 = arith.constant 0 : i32
    return %arg0, %c0_i32, %c0_i32_0 : i32, i32, i32
  }
  func.func @transform_1(%arg0: i32) -> (i32, i32, i32) {
    %c0_i32 = arith.constant 0 : i32
    %c0_i32_0 = arith.constant 0 : i32
    %c0_i32_1 = arith.constant 0 : i32
    return %arg0, %c0_i32, %c0_i32_0 : i32, i32, i32
  }
  func.func @transform_2(%arg0: i32) -> (i32, i32, i32) {
    %c0_i32 = arith.constant 0 : i32
    %c0_i32_0 = arith.constant 0 : i32
    %c0_i32_1 = arith.constant 0 : i32
    return %arg0, %c0_i32, %c0_i32_0 : i32, i32, i32
  }
  func.func @transform_3(%arg0: i32) -> (i32, i32) {
    %c0_i32 = arith.constant 0 : i32
    %c0_i32_0 = arith.constant 0 : i32
    %c0_i32_1 = arith.constant 0 : i32
    return %c0_i32, %c0_i32_0 : i32, i32
  }
  func.func @transform_4(%arg0: i32) -> (i32, i32) {
    %c0_i32 = arith.constant 0 : i32
    %c0_i32_0 = arith.constant 0 : i32
    %c0_i32_1 = arith.constant 0 : i32
    return %c0_i32, %c0_i32_0 : i32, i32
  }
  func.func @transform_5(%arg0: i32) -> (i32, i32) {
    %c0_i32 = arith.constant 0 : i32
    %c0_i32_0 = arith.constant 0 : i32
    %c0_i32_1 = arith.constant 0 : i32
    return %c0_i32, %c0_i32_0 : i32, i32
  }
  func.func @transform_6(%arg0: i32) -> (i32, i32) {
    %c0_i32 = arith.constant 0 : i32
    %c0_i32_0 = arith.constant 0 : i32
    %c0_i32_1 = arith.constant 0 : i32
    return %c0_i32, %c0_i32_0 : i32, i32
  }
  func.func @transform_7(%arg0: i32) -> (i32, i32, i32) {
    %c0_i32 = arith.constant 0 : i32
    %c0_i32_0 = arith.constant 0 : i32
    %c0_i32_1 = arith.constant 0 : i32
    %c0_i32_2 = arith.constant 0 : i32
    return %c0_i32, %c0_i32_0, %c0_i32_1 : i32, i32, i32
  }
  func.func @transform_8(%arg0: i32) -> (i32, i32, i32) {
    %c0_i32 = arith.constant 0 : i32
    %c0_i32_0 = arith.constant 0 : i32
    %c0_i32_1 = arith.constant 0 : i32
    %c0_i32_2 = arith.constant 0 : i32
    return %c0_i32, %c0_i32_0, %c0_i32_1 : i32, i32, i32
  }
  func.func @transform_9(%arg0: i32) -> (i32, i32, i32) {
    %c0_i32 = arith.constant 0 : i32
    %c0_i32_0 = arith.constant 0 : i32
    %c0_i32_1 = arith.constant 0 : i32
    %c0_i32_2 = arith.constant 0 : i32
    return %c0_i32, %c0_i32_0, %c0_i32_1 : i32, i32, i32
  }
  func.func @transform_10(%arg0: i32) -> (i32, i32, i32) {
    %c0_i32 = arith.constant 0 : i32
    %c0_i32_0 = arith.constant 0 : i32
    %c0_i32_1 = arith.constant 0 : i32
    %c0_i32_2 = arith.constant 0 : i32
    return %c0_i32, %c0_i32_0, %c0_i32_1 : i32, i32, i32
  }
  func.func @transform_11(%arg0: i32) -> (i32, i32, i32) {
    %c0_i32 = arith.constant 0 : i32
    %c0_i32_0 = arith.constant 0 : i32
    %c0_i32_1 = arith.constant 0 : i32
    return %arg0, %c0_i32, %c0_i32_0 : i32, i32, i32
  }
  func.func @transform_12(%arg0: i32) -> (i32, i32, i32) {
    %c0_i32 = arith.constant 0 : i32
    %c0_i32_0 = arith.constant 0 : i32
    %c0_i32_1 = arith.constant 0 : i32
    return %arg0, %c0_i32, %c0_i32_0 : i32, i32, i32
  }
  func.func @transform_13(%arg0: i32) -> (i32, i32, i32) {
    %c0_i32 = arith.constant 0 : i32
    %c0_i32_0 = arith.constant 0 : i32
    %c0_i32_1 = arith.constant 0 : i32
    return %arg0, %c0_i32, %c0_i32_0 : i32, i32, i32
  }
}

</mosaic_0001>

<llo_original>
// kernel: custom-call.3
$region0: #{custom-call.3}
  %s0 = inlined_call_operand.vmem [shape: f32[2,50], index: 0, kind: output, shape index: {}]

// kernel: _lambda_.1
$region0: #{_lambda_.1}
  #allocation0 [shape = 'u32[]', space=smem, size = 0x4, offset = 0x4, fixed_abs, tag = 'smem constant byte address 0x4 - core index']
  #allocation1 [shape = 'u32[144,128]{1,0:T(1,128)}', space=vmem, size = 0x12000, scoped, tag = 'internal scratch']
  %s0 = inlined_call_operand.vmem [shape: f32[2,8,128], index: 0, kind: input, shape index: {}]
  %s1 = inlined_call_operand.vmem [shape: f32[2,8,8], index: 1, kind: input, shape index: {}]
  %s2 = inlined_call_operand.vmem [shape: f32[2,1,8], index: 2, kind: input, shape index: {}]
  %s3 = inlined_call_operand.vmem [shape: bf16[128,256], index: 3, kind: input, shape index: {}]
  %s4 = inlined_call_operand.vmem [shape: f32[1,256], index: 4, kind: input, shape index: {}]
  %s5 = inlined_call_operand.vmem [shape: bf16[128,128], index: 5, kind: input, shape index: {}]
  %s6 = inlined_call_operand.vmem [shape: bf16[128,128], index: 6, kind: input, shape index: {}]
  %s7 = inlined_call_operand.vmem [shape: bf16[2,128,128], index: 7, kind: input, shape index: {}]
  %s8 = inlined_call_operand.vmem [shape: f32[2,1,128], index: 8, kind: input, shape index: {}]
  %s9 = inlined_call_operand.vmem [shape: bf16[2,128,128], index: 9, kind: input, shape index: {}]
  %s10 = inlined_call_operand.vmem [shape: f32[2,1,128], index: 10, kind: input, shape index: {}]
  %s11 = inlined_call_operand.hbm [shape: f32[2,8,128], index: 11, kind: output, shape index: {0}]
  %s12 = inlined_call_operand.hbm [shape: f32[2,8,128], index: 12, kind: output, shape index: {1}]
  %s13 = inlined_call_operand.hbm [shape: f32[2,8,128], index: 13, kind: output, shape index: {2}]
  %14 = xla_tuple %s11, %s12, %s13
  %s15 = sld [smem:[#allocation0]]
  $region70: #{_lambda_.1} parent=0
    _
  %s17 = ssub.s32 1, %s15
  %s18 = scalar_select 0, %s17, %s15
  $region1: #{_lambda_.1} parent=0
    #allocation2 [shape = 'u8[8192]{0}', space=vmem, size = 0x2000, scoped, tag = 'output window, operand 0, single buffered']
    #allocation3 [shape = 's32[1]{0}', space=sflag, size = 0x4, scoped, tag = 'scoped memory for _lambda_.1']
    #allocation4 [shape = 'u8[8192]{0}', space=vmem, size = 0x2000, scoped, tag = 'output window, operand 1, single buffered']
    #allocation5 [shape = 's32[1]{0}', space=sflag, size = 0x4, scoped, tag = 'scoped memory for _lambda_.1']
    #allocation6 [shape = 'u8[8192]{0}', space=vmem, size = 0x2000, scoped, tag = 'output window, operand 2, single buffered']
    %19 = vsyncpa [#allocation3], 0
    %20 = vsyncpa [#allocation5], 0
    // Predicated region
    $region2: #{_lambda_.1} parent=1 // pred_check
      _
    $region3: #{_lambda_.1} parent=1 // pred_check_branch
      %22 = sbr.rel (0) target = $region5
    $region4: #{_lambda_.1} parent=1 // pred_region
      _
    $region5: #{_lambda_.1} parent=1 // pred_fallthru
      _
    // Predicated region
    $region6: #{_lambda_.1} parent=1 // pred_check
      _
    $region7: #{_lambda_.1} parent=1 // pred_check_branch
      %24 = sbr.rel (0) target = $region9
    $region8: #{_lambda_.1} parent=1 // pred_region
      _
    $region9: #{_lambda_.1} parent=1 // pred_fallthru
      _
    // Predicated region
    $region10: #{_lambda_.1} parent=1 // pred_check
      _
    $region11: #{_lambda_.1} parent=1 // pred_check_branch
      %26 = sbr.rel (0) target = $region13
    $region12: #{_lambda_.1} parent=1 // pred_region
      _
    $region13: #{_lambda_.1} parent=1 // pred_fallthru
      _
    // Predicated region
    $region14: #{_lambda_.1} parent=1 // pred_check
      _
    $region15: #{_lambda_.1} parent=1 // pred_check_branch
      %28 = sbr.rel (0) target = $region17
    $region16: #{_lambda_.1} parent=1 // pred_region
      _
    $region17: #{_lambda_.1} parent=1 // pred_fallthru
      _
    // Predicated region
    $region18: #{_lambda_.1} parent=1 // pred_check
      _
    $region19: #{_lambda_.1} parent=1 // pred_check_branch
      %30 = sbr.rel (0) target = $region21
    $region20: #{_lambda_.1} parent=1 // pred_region
      _
    $region21: #{_lambda_.1} parent=1 // pred_fallthru
      _
    // Predicated region
    $region22: #{_lambda_.1} parent=1 // pred_check
      _
    $region23: #{_lambda_.1} parent=1 // pred_check_branch
      %32 = sbr.rel (0) target = $region25
    $region24: #{_lambda_.1} parent=1 // pred_region
      _
    $region25: #{_lambda_.1} parent=1 // pred_fallthru
      _
    // Predicated region
    $region26: #{_lambda_.1} parent=1 // pred_check
      _
    $region27: #{_lambda_.1} parent=1 // pred_check_branch
      %34 = sbr.rel (0) target = $region29
    $region28: #{_lambda_.1} parent=1 // pred_region
      _
    $region29: #{_lambda_.1} parent=1 // pred_fallthru
      _
    // Predicated region
    $region30: #{_lambda_.1} parent=1 // pred_check
      _
    $region31: #{_lambda_.1} parent=1 // pred_check_branch
      %36 = sbr.rel (0) target = $region33
    $region32: #{_lambda_.1} parent=1 // pred_region
      _
    $region33: #{_lambda_.1} parent=1 // pred_fallthru
      _
    // Predicated region
    $region34: #{_lambda_.1} parent=1 // pred_check
      _
    $region35: #{_lambda_.1} parent=1 // pred_check_branch
      %38 = sbr.rel (0) target = $region37
    $region36: #{_lambda_.1} parent=1 // pred_region
      _
    $region37: #{_lambda_.1} parent=1 // pred_fallthru
      _
    // Predicated region
    $region38: #{_lambda_.1} parent=1 // pred_check
      _
    $region39: #{_lambda_.1} parent=1 // pred_check_branch
      %40 = sbr.rel (0) target = $region41
    $region40: #{_lambda_.1} parent=1 // pred_region
      _
    $region41: #{_lambda_.1} parent=1 // pred_fallthru
      _
    // Predicated region
    $region42: #{_lambda_.1} parent=1 // pred_check
      _
    $region43: #{_lambda_.1} parent=1 // pred_check_branch
      %42 = sbr.rel (0) target = $region45
    $region44: #{_lambda_.1} parent=1 // pred_region
      _
    $region45: #{_lambda_.1} parent=1 // pred_fallthru
      _
    %v44 = vld [vmem:[%s0] sm:$0xff]
    %v45 = vld [vmem:[%s0 + $0x8] sm:$0xff]
    %v46 = vpack.c.bf16 %v45, %v44
    %v47 = vld [vmem:[%s3] sm:$0xff]
    %v48 = vld [vmem:[%s3 + $0x8] sm:$0xff]
    %v49 = vld [vmem:[%s3 + $0x10] sm:$0xff]
    %v50 = vld [vmem:[%s3 + $0x18] sm:$0xff]
    %v51 = vld [vmem:[%s3 + $0x20] sm:$0xff]
    %v52 = vld [vmem:[%s3 + $0x28] sm:$0xff]
    %v53 = vld [vmem:[%s3 + $0x30] sm:$0xff]
    %v54 = vld [vmem:[%s3 + $0x38] sm:$0xff]
    %v55 = vld [vmem:[%s3 + $0x40] sm:$0xff]
    %v56 = vld [vmem:[%s3 + $0x48] sm:$0xff]
    %v57 = vld [vmem:[%s3 + $0x50] sm:$0xff]
    %v58 = vld [vmem:[%s3 + $0x58] sm:$0xff]
    %v59 = vld [vmem:[%s3 + $0x60] sm:$0xff]
    %v60 = vld [vmem:[%s3 + $0x68] sm:$0xff]
    %v61 = vld [vmem:[%s3 + $0x70] sm:$0xff]
    %v62 = vld [vmem:[%s3 + $0x78] sm:$0xff]
    %v63 = vld [vmem:[%s4] sm:$0x3]
    %v65 = vlaneseq
    %v66 = vshrl.u32 %v65, 7
    %v67 = vsub.s32 0, %v66
    %v68 = vrot.slane %v63, %v67
    %v69 = vlaneseq
    %v70 = vshrl.u32 %v69, 7
    %v71 = vsub.s32 1, %v70
    %v72 = vrot.slane %v63, %v71
    %v91 = vunpack.c.l.b16 %v47
    %v92 = vunpack.c.h.b16 %v47
    %v93 = vunpack.c.l.b16 %v48
    %v94 = vunpack.c.h.b16 %v48
    %v95 = vunpack.c.l.b16 %v49
    %v96 = vunpack.c.h.b16 %v49
    %v97 = vunpack.c.l.b16 %v50
    %v98 = vunpack.c.h.b16 %v50
    %v99 = vunpack.c.l.b16 %v51
    %v100 = vunpack.c.h.b16 %v51
    %v101 = vunpack.c.l.b16 %v52
    %v102 = vunpack.c.h.b16 %v52
    %v103 = vunpack.c.l.b16 %v53
    %v104 = vunpack.c.h.b16 %v53
    %v105 = vunpack.c.l.b16 %v54
    %v106 = vunpack.c.h.b16 %v54
    %v107 = vunpack.c.l.b16 %v55
    %v108 = vunpack.c.h.b16 %v55
    %v109 = vunpack.c.l.b16 %v56
    %v110 = vunpack.c.h.b16 %v56
    %v111 = vunpack.c.l.b16 %v57
    %v112 = vunpack.c.h.b16 %v57
    %v113 = vunpack.c.l.b16 %v58
    %v114 = vunpack.c.h.b16 %v58
    %v115 = vunpack.c.l.b16 %v59
    %v116 = vunpack.c.h.b16 %v59
    %v117 = vunpack.c.l.b16 %v60
    %v118 = vunpack.c.h.b16 %v60
    %v119 = vunpack.c.l.b16 %v61
    %v120 = vunpack.c.h.b16 %v61
    %v121 = vunpack.c.l.b16 %v62
    %v122 = vunpack.c.h.b16 %v62
    %v123 = vpack.c.b16 %v93, %v91
    %v124 = vpack.c.b16 %v94, %v92
    %v125 = vpack.c.b16 %v97, %v95
    %v126 = vpack.c.b16 %v98, %v96
    %v127 = vpack.c.b16 %v101, %v99
    %v128 = vpack.c.b16 %v102, %v100
    %v129 = vpack.c.b16 %v105, %v103
    %v130 = vpack.c.b16 %v106, %v104
    %v131 = vpack.c.b16 %v109, %v107
    %v132 = vpack.c.b16 %v110, %v108
    %v133 = vpack.c.b16 %v113, %v111
    %v134 = vpack.c.b16 %v114, %v112
    %v135 = vpack.c.b16 %v117, %v115
    %v136 = vpack.c.b16 %v118, %v116
    %v137 = vpack.c.b16 %v121, %v119
    %v138 = vpack.c.b16 %v122, %v120
    %155 = vmatprep.subr.bf16.mxu0 %v124
    %156 = vmatpush1.bf16.msra.mxu0 %v123
    %157 = vmatprep.subr.bf16.mxu0 %v126
    %158 = vmatpush1.bf16.msra.mxu0 %v125
    %159 = vmatprep.subr.bf16.mxu0 %v128
    %160 = vmatpush1.bf16.msra.mxu0 %v127
    %161 = vmatprep.subr.bf16.mxu0 %v130
    %162 = vmatpush1.bf16.msra.mxu0 %v129
    %163 = vmatprep.subr.bf16.mxu0 %v132
    %164 = vmatpush1.bf16.msra.mxu0 %v131
    %165 = vmatprep.subr.bf16.mxu0 %v134
    %166 = vmatpush1.bf16.msra.mxu0 %v133
    %167 = vmatprep.subr.bf16.mxu0 %v136
    %168 = vmatpush1.bf16.msra.mxu0 %v135
    %169 = vmatprep.subr.bf16.mxu0 %v138
    %170 = vmatpush1.bf16.msra.mxu0 %v137
    %171 = vmatprep.subr.bf16.mxu0 0
    %172 = vmatpush1.bf16.msra.mxu0 0
    %173 = vmatprep.subr.bf16.mxu0 0
    %174 = vmatpush1.bf16.msra.mxu0 0
    %175 = vmatprep.subr.bf16.mxu0 0
    %176 = vmatpush1.bf16.msra.mxu0 0
    %177 = vmatprep.subr.bf16.mxu0 0
    %178 = vmatpush1.bf16.msra.mxu0 0
    %179 = vmatprep.subr.bf16.mxu0 0
    %180 = vmatpush1.bf16.msra.mxu0 0
    %181 = vmatprep.subr.bf16.mxu0 0
    %182 = vmatpush1.bf16.msra.mxu0 0
    %183 = vmatprep.subr.bf16.mxu0 0
    %184 = vmatpush1.bf16.msra.mxu0 0
    %185 = vmatprep.subr.bf16.mxu0 0
    %186 = vmatpush1.bf16.msra.mxu0 0
    %187 = vmatprep.mubr.bf16.mxu0 0
    %188 = vmatmul.mubr.bf16.gmra.mrb[0].mxu0 %v46
    %v189 = vpop.f32.mrb[0].mxu0
    %v190 = vadd.f32 %v68, %v189
    %v191 = vpop.f32.mrb[0].mxu0
    %v192 = vadd.f32 %v72, %v191
    %v193 = vpop.f32.mrb[0].mxu0
    %v194 = vadd.f32 %v68, %v193
    %v195 = vpop.f32.mrb[0].mxu0
    %v196 = vadd.f32 %v72, %v195
    %197 = vdwg.mxu0
    %v198 = vpack.c.bf16 %v190, %v190
    %v199 = vpack.c.bf16 %v194, %v194
    %v200 = vpack.c.bf16 %v192, %v192
    %v201 = vpack.c.bf16 %v196, %v196
    %202 = vmatprep.subr.bf16.mxu0 0
    %203 = vmatpush1.bf16.xpose.msra.mxu0 %v200
    %204 = vmatprep.subr.bf16.mxu0 0
    %205 = vmatpush1.bf16.xpose.msra.mxu0 0
    %206 = vmatprep.subr.bf16.mxu0 0
    %207 = vmatpush1.bf16.xpose.msra.mxu0 0
    %208 = vmatprep.subr.bf16.mxu0 0
    %209 = vmatpush1.bf16.xpose.msra.mxu0 0
    %210 = vmatprep.subr.bf16.mxu0 0
    %211 = vmatpush1.bf16.xpose.msra.mxu0 0
    %212 = vmatprep.subr.bf16.mxu0 0
    %213 = vmatpush1.bf16.xpose.msra.mxu0 0
    %214 = vmatprep.subr.bf16.mxu0 0
    %215 = vmatpush1.bf16.xpose.msra.mxu0 0
    %216 = vmatprep.subr.bf16.mxu0 0
    %217 = vmatpush1.bf16.xpose.msra.mxu0 0
    %218 = vmatprep.subr.bf16.mxu0 0
    %219 = vmatpush1.bf16.xpose.msra.mxu0 0
    %220 = vmatprep.subr.bf16.mxu0 0
    %221 = vmatpush1.bf16.xpose.msra.mxu0 0
    %222 = vmatprep.subr.bf16.mxu0 0
    %223 = vmatpush1.bf16.xpose.msra.mxu0 0
    %224 = vmatprep.subr.bf16.mxu0 0
    %225 = vmatpush1.bf16.xpose.msra.mxu0 0
    %226 = vmatprep.subr.bf16.mxu0 0
    %227 = vmatpush1.bf16.xpose.msra.mxu0 0
    %228 = vmatprep.subr.bf16.mxu0 0
    %229 = vmatpush1.bf16.xpose.msra.mxu0 0
    %230 = vmatprep.subr.bf16.mxu0 0
    %231 = vmatpush1.bf16.xpose.msra.mxu0 0
    %232 = vmatprep.subr.bf16.mxu0 0
    %233 = vmatpush1.bf16.xpose.msra.mxu0 0
    %234 = vmatprep.mubr.bf16.mxu0 0
    %235 = vmatmul.mubr.bf16.gmra.mrb[0].mxu0 %v198
    %v236 = vpop.f32.mrb[0].mxu0
    %v237 = vadd.f32 0.0, %v236
    %v238 = vpop.f32.mrb[0].mxu0
    %v239 = vpop.f32.mrb[0].mxu0
    %v240 = vpop.f32.mrb[0].mxu0
    %241 = vdwg.mxu0
    %242 = vmatprep.subr.bf16.mxu0 0
    %243 = vmatpush1.bf16.xpose.msra.mxu0 %v201
    %244 = vmatprep.subr.bf16.mxu0 0
    %245 = vmatpush1.bf16.xpose.msra.mxu0 0
    %246 = vmatprep.subr.bf16.mxu0 0
    %247 = vmatpush1.bf16.xpose.msra.mxu0 0
    %248 = vmatprep.subr.bf16.mxu0 0
    %249 = vmatpush1.bf16.xpose.msra.mxu0 0
    %250 = vmatprep.subr.bf16.mxu0 0
    %251 = vmatpush1.bf16.xpose.msra.mxu0 0
    %252 = vmatprep.subr.bf16.mxu0 0
    %253 = vmatpush1.bf16.xpose.msra.mxu0 0
    %254 = vmatprep.subr.bf16.mxu0 0
    %255 = vmatpush1.bf16.xpose.msra.mxu0 0
    %256 = vmatprep.subr.bf16.mxu0 0
    %257 = vmatpush1.bf16.xpose.msra.mxu0 0
    %258 = vmatprep.subr.bf16.mxu0 0
    %259 = vmatpush1.bf16.xpose.msra.mxu0 0
    %260 = vmatprep.subr.bf16.mxu0 0
    %261 = vmatpush1.bf16.xpose.msra.mxu0 0
    %262 = vmatprep.subr.bf16.mxu0 0
    %263 = vmatpush1.bf16.xpose.msra.mxu0 0
    %264 = vmatprep.subr.bf16.mxu0 0
    %265 = vmatpush1.bf16.xpose.msra.mxu0 0
    %266 = vmatprep.subr.bf16.mxu0 0
    %267 = vmatpush1.bf16.xpose.msra.mxu0 0
    %268 = vmatprep.subr.bf16.mxu0 0
    %269 = vmatpush1.bf16.xpose.msra.mxu0 0
    %270 = vmatprep.subr.bf16.mxu0 0
    %271 = vmatpush1.bf16.xpose.msra.mxu0 0
    %272 = vmatprep.subr.bf16.mxu0 0
    %273 = vmatpush1.bf16.xpose.msra.mxu0 0
    %274 = vmatprep.mubr.bf16.mxu0 0
    %275 = vmatmul.mubr.bf16.gmra.mrb[0].mxu0 %v199
    %v276 = vpop.f32.mrb[0].mxu0
    %v277 = vadd.f32 0.0, %v276
    %v278 = vpop.f32.mrb[0].mxu0
    %v279 = vpop.f32.mrb[0].mxu0
    %v280 = vpop.f32.mrb[0].mxu0
    %281 = vdwg.mxu0
    %v282 = vmul.f32 %v237, 0.1
    %v283 = vmul.f32 %v277, 0.1
    %v284 = vld [vmem:[%s2] sm:$0x1]
    %v285 = vld [vmem:[%s2 + $0x1] sm:$0x1]
    %vm286 = vcmp.eq.f32.partialorder %v284, 0.0
    %vm287 = vcmp.eq.f32.partialorder %v285, 0.0
    %v288 = vsel %vm286, 1, 0
    %v289 = vsel %vm287, 1, 0
    %v290 = vlaneseq
    %v291 = vshrl.u32 %v290, 7
    %v292 = vsub.s32 0, %v291
    %v293 = vrot.slane %v288, %v292
    %v294 = vlaneseq
    %v295 = vshrl.u32 %v294, 7
    %v296 = vsub.s32 0, %v295
    %v297 = vrot.slane %v289, %v296
    %vm298 = vcmp.eq.s32.totalorder %v293, 1
    %vm299 = vcmp.eq.s32.totalorder %v297, 1
    %v300 = vsel %vm298, -1e+09, %v282
    %v301 = vsel %vm299, -1e+09, %v283
    %vm302 = vcmask 64512
    %v303 = vsel %vm302, %v300, -inf
    %304 = vmax.xlane.f32.xlu0 %v303
    %v305 = vpop.xlane.xlu0 %304
    %v306 = vsel %vm302, %v301, -inf
    %307 = vmax.xlane.f32.xlu0 %v306
    %v308 = vpop.xlane.xlu0 %307
    %v309 = vsub.f32 %v300, %v305
    %v310 = vsub.f32 %v301, %v308
    %v311 = vmul.f32 %v309, 1.442695
    %v312 = vpow.pop %v311
    %v313 = vmul.f32 %v310, 1.442695
    %v314 = vpow.pop %v313
    %v315 = vsel %vm302, %v312, 0.0
    %316 = vadd.xlane.f32.xlu0 %v315
    %v317 = vpop.xlane.xlu0 %316
    %v318 = vsel %vm302, %v314, 0.0
    %319 = vadd.xlane.f32.xlu0 %v318
    %v320 = vpop.xlane.xlu0 %319
    %v321 = vrcp.pop %v317
    %v322 = vmul.f32 %v312, %v321
    %v323 = vrcp.pop %v320
    %v324 = vmul.f32 %v314, %v323
    %v325 = vlaneseq
    %v326 = vshrl.u32 %v325, 7
    %v327 = vlaneseq
    %v328 = vand.u32 %v327, 127
    %vm329 = vcmp.eq.s32.totalorder %v326, %v328
    %v330 = vsel %vm329, 1, 0
    %v331 = vcvt.s32.f32 %v330
    %v332 = vsub.f32 1.0, %v331
    %v333 = vmul.f32 %v322, %v332
    %v334 = vmul.f32 %v324, %v332
    %v335 = vadd.f32 %v333, %v331
    %v336 = vadd.f32 %v334, %v331
    %v339 = vlaneseq
    %v340 = vshrl.u32 %v339, 7
    %v341 = vsub.s32 0, %v340
    %v342 = vrot.slane %v284, %v341
    %v343 = vlaneseq
    %v344 = vshrl.u32 %v343, 7
    %v345 = vsub.s32 0, %v344
    %v346 = vrot.slane %v285, %v345
    %v349 = vmul.f32 %v331, %v342
    %v350 = vmul.f32 %v331, %v346
    %v352 = vsel %vm302, %v349, 0
    %354 = vmatprep.subr.mxu0 0.0
    %355 = vmatpush1.msra.mxu0 %v335
    %356 = vmatprep.subr.mxu0 0.0
    %357 = vmatpush1.msra.mxu0 0.0
    %358 = vmatprep.subr.mxu0 0.0
    %359 = vmatpush1.msra.mxu0 0.0
    %360 = vmatprep.subr.mxu0 0.0
    %361 = vmatpush1.msra.mxu0 0.0
    %362 = vmatprep.subr.mxu0 0.0
    %363 = vmatpush1.msra.mxu0 0.0
    %364 = vmatprep.subr.mxu0 0.0
    %365 = vmatpush1.msra.mxu0 0.0
    %366 = vmatprep.subr.mxu0 0.0
    %367 = vmatpush1.msra.mxu0 0.0
    %368 = vmatprep.subr.mxu0 0.0
    %369 = vmatpush1.msra.mxu0 0.0
    %370 = vmatprep.subr.mxu0 0.0
    %371 = vmatpush1.msra.mxu0 0.0
    %372 = vmatprep.subr.mxu0 0.0
    %373 = vmatpush1.msra.mxu0 0.0
    %374 = vmatprep.subr.mxu0 0.0
    %375 = vmatpush1.msra.mxu0 0.0
    %376 = vmatprep.subr.mxu0 0.0
    %377 = vmatpush1.msra.mxu0 0.0
    %378 = vmatprep.subr.mxu0 0.0
    %379 = vmatpush1.msra.mxu0 0.0
    %380 = vmatprep.subr.mxu0 0.0
    %381 = vmatpush1.msra.mxu0 0.0
    %382 = vmatprep.subr.mxu0 0.0
    %383 = vmatpush1.msra.mxu0 0.0
    %384 = vmatprep.subr.mxu0 0.0
    %385 = vmatpush1.msra.mxu0 0.0
    %386 = vmatprep.subr.mxu0 0.0
    %387 = vmatpush1.msra.mxu0 0.0
    %388 = vmatprep.subr.mxu0 0.0
    %389 = vmatpush1.msra.mxu0 0.0
    %390 = vmatprep.subr.mxu0 0.0
    %391 = vmatpush1.msra.mxu0 0.0
    %392 = vmatprep.subr.mxu0 0.0
    %393 = vmatpush1.msra.mxu0 0.0
    %394 = vmatprep.subr.mxu0 0.0
    %395 = vmatpush1.msra.mxu0 0.0
    %396 = vmatprep.subr.mxu0 0.0
    %397 = vmatpush1.msra.mxu0 0.0
    %398 = vmatprep.subr.mxu0 0.0
    %399 = vmatpush1.msra.mxu0 0.0
    %400 = vmatprep.subr.mxu0 0.0
    %401 = vmatpush1.msra.mxu0 0.0
    %402 = vmatprep.subr.mxu0 0.0
    %403 = vmatpush1.msra.mxu0 0.0
    %404 = vmatprep.subr.mxu0 0.0
    %405 = vmatpush1.msra.mxu0 0.0
    %406 = vmatprep.subr.mxu0 0.0
    %407 = vmatpush1.msra.mxu0 0.0
    %408 = vmatprep.subr.mxu0 0.0
    %409 = vmatpush1.msra.mxu0 0.0
    %410 = vmatprep.subr.mxu0 0.0
    %411 = vmatpush1.msra.mxu0 0.0
    %412 = vmatprep.subr.mxu0 0.0
    %413 = vmatpush1.msra.mxu0 0.0
    %414 = vmatprep.subr.mxu0 0.0
    %415 = vmatpush1.msra.mxu0 0.0
    %416 = vmatprep.subr.mxu0 0.0
    %417 = vmatpush1.msra.mxu0 0.0
    %418 = vmatprep.mubr.f32.mxu0 0.0
    %419 = vmatmul.mubr.f32.gmra.mrb[0].mxu0 %v352
    %v420 = vpop.f32.mrb[0].mxu0
    %v421 = vadd.f32 0.0, %v420
    %v422 = vpop.f32.mrb[0].mxu0
    %423 = vdwg.mxu0
    %v425 = vsel %vm302, %v350, 0
    %427 = vmatprep.subr.mxu0 0.0
    %428 = vmatpush1.msra.mxu0 %v336
    %429 = vmatprep.subr.mxu0 0.0
    %430 = vmatpush1.msra.mxu0 0.0
    %431 = vmatprep.subr.mxu0 0.0
    %432 = vmatpush1.msra.mxu0 0.0
    %433 = vmatprep.subr.mxu0 0.0
    %434 = vmatpush1.msra.mxu0 0.0
    %435 = vmatprep.subr.mxu0 0.0
    %436 = vmatpush1.msra.mxu0 0.0
    %437 = vmatprep.subr.mxu0 0.0
    %438 = vmatpush1.msra.mxu0 0.0
    %439 = vmatprep.subr.mxu0 0.0
    %440 = vmatpush1.msra.mxu0 0.0
    %441 = vmatprep.subr.mxu0 0.0
    %442 = vmatpush1.msra.mxu0 0.0
    %443 = vmatprep.subr.mxu0 0.0
    %444 = vmatpush1.msra.mxu0 0.0
    %445 = vmatprep.subr.mxu0 0.0
    %446 = vmatpush1.msra.mxu0 0.0
    %447 = vmatprep.subr.mxu0 0.0
    %448 = vmatpush1.msra.mxu0 0.0
    %449 = vmatprep.subr.mxu0 0.0
    %450 = vmatpush1.msra.mxu0 0.0
    %451 = vmatprep.subr.mxu0 0.0
    %452 = vmatpush1.msra.mxu0 0.0
    %453 = vmatprep.subr.mxu0 0.0
    %454 = vmatpush1.msra.mxu0 0.0
    %455 = vmatprep.subr.mxu0 0.0
    %456 = vmatpush1.msra.mxu0 0.0
    %457 = vmatprep.subr.mxu0 0.0
    %458 = vmatpush1.msra.mxu0 0.0
    %459 = vmatprep.subr.mxu0 0.0
    %460 = vmatpush1.msra.mxu0 0.0
    %461 = vmatprep.subr.mxu0 0.0
    %462 = vmatpush1.msra.mxu0 0.0
    %463 = vmatprep.subr.mxu0 0.0
    %464 = vmatpush1.msra.mxu0 0.0
    %465 = vmatprep.subr.mxu0 0.0
    %466 = vmatpush1.msra.mxu0 0.0
    %467 = vmatprep.subr.mxu0 0.0
    %468 = vmatpush1.msra.mxu0 0.0
    %469 = vmatprep.subr.mxu0 0.0
    %470 = vmatpush1.msra.mxu0 0.0
    %471 = vmatprep.subr.mxu0 0.0
    %472 = vmatpush1.msra.mxu0 0.0
    %473 = vmatprep.subr.mxu0 0.0
    %474 = vmatpush1.msra.mxu0 0.0
    %475 = vmatprep.subr.mxu0 0.0
    %476 = vmatpush1.msra.mxu0 0.0
    %477 = vmatprep.subr.mxu0 0.0
    %478 = vmatpush1.msra.mxu0 0.0
    %479 = vmatprep.subr.mxu0 0.0
    %480 = vmatpush1.msra.mxu0 0.0
    %481 = vmatprep.subr.mxu0 0.0
    %482 = vmatpush1.msra.mxu0 0.0
    %483 = vmatprep.subr.mxu0 0.0
    %484 = vmatpush1.msra.mxu0 0.0
    %485 = vmatprep.subr.mxu0 0.0
    %486 = vmatpush1.msra.mxu0 0.0
    %487 = vmatprep.subr.mxu0 0.0
    %488 = vmatpush1.msra.mxu0 0.0
    %489 = vmatprep.subr.mxu0 0.0
    %490 = vmatpush1.msra.mxu0 0.0
    %491 = vmatprep.mubr.f32.mxu0 0.0
    %492 = vmatmul.mubr.f32.gmra.mrb[0].mxu0 %v425
    %v493 = vpop.f32.mrb[0].mxu0
    %v494 = vadd.f32 0.0, %v493
    %v495 = vpop.f32.mrb[0].mxu0
    %496 = vdwg.mxu0
    %v497 = vsel %vm302, %v421, 0.0
    %v498 = vsel %vm302, %v494, 0.0
    %499 = vst [vmem:[#allocation6] sm:$0xff] %v497
    %500 = vst [vmem:[#allocation6 + $0x8] sm:$0xff] %v498
    %v501 = vld [vmem:[%s1] sm:$0xff]
    %v502 = vld [vmem:[%s1 + $0x8] sm:$0xff]
    %v503 = vsel %vm302, %v501, 0.0
    %504 = vadd.xlane.f32.xlu0 %v503
    %v505 = vpop.xlane.xlu0 %504
    %v506 = vsel %vm302, %v502, 0.0
    %507 = vadd.xlane.f32.xlu0 %v506
    %v508 = vpop.xlane.xlu0 %507
    %v509 = vadd.f32 %v505, 1.0
    %v510 = vadd.f32 %v508, 1.0
    %v511 = vrcp.pop %v509
    %v512 = vrcp.pop %v510
    %513 = vadd.xlane.f32.xlu0 %v497
    %v514 = vpop.xlane.xlu0 %513
    %515 = vadd.xlane.f32.xlu0 %v498
    %v516 = vpop.xlane.xlu0 %515
    %v517 = vadd.f32 %v514, 1.0
    %v518 = vadd.f32 %v516, 1.0
    %v519 = vrcp.pop %v517
    %v520 = vrcp.pop %v518
    %v521 = vpack.c.bf16 %v501, %v501
    %v522 = vpack.c.bf16 %v502, %v502
    %v523 = vpack.c.bf16 %v421, %v421
    %v524 = vpack.c.bf16 %v494, %v494
    %v525 = vld [vmem:[%s5] sm:$0xf]
    %v526 = vld [vmem:[%s5 + $0x4] sm:$0xf]
    %v527 = vld [vmem:[%s5 + $0x8] sm:$0xf]
    %v528 = vld [vmem:[%s5 + $0xc] sm:$0xf]
    %v529 = vld [vmem:[%s5 + $0x10] sm:$0xf]
    %v530 = vld [vmem:[%s5 + $0x14] sm:$0xf]
    %v531 = vld [vmem:[%s5 + $0x18] sm:$0xf]
    %v532 = vld [vmem:[%s5 + $0x1c] sm:$0xf]
    %v533 = vld [vmem:[%s5 + $0x20] sm:$0xf]
    %v534 = vld [vmem:[%s5 + $0x24] sm:$0xf]
    %v535 = vld [vmem:[%s5 + $0x28] sm:$0xf]
    %v536 = vld [vmem:[%s5 + $0x2c] sm:$0xf]
    %v537 = vld [vmem:[%s5 + $0x30] sm:$0xf]
    %v538 = vld [vmem:[%s5 + $0x34] sm:$0xf]
    %v539 = vld [vmem:[%s5 + $0x38] sm:$0xf]
    %v540 = vld [vmem:[%s5 + $0x3c] sm:$0xf]
    %v541 = vld [vmem:[%s6] sm:$0xf]
    %v542 = vld [vmem:[%s6 + $0x4] sm:$0xf]
    %v543 = vld [vmem:[%s6 + $0x8] sm:$0xf]
    %v544 = vld [vmem:[%s6 + $0xc] sm:$0xf]
    %v545 = vld [vmem:[%s6 + $0x10] sm:$0xf]
    %v546 = vld [vmem:[%s6 + $0x14] sm:$0xf]
    %v547 = vld [vmem:[%s6 + $0x18] sm:$0xf]
    %v548 = vld [vmem:[%s6 + $0x1c] sm:$0xf]
    %v549 = vld [vmem:[%s6 + $0x20] sm:$0xf]
    %v550 = vld [vmem:[%s6 + $0x24] sm:$0xf]
    %v551 = vld [vmem:[%s6 + $0x28] sm:$0xf]
    %v552 = vld [vmem:[%s6 + $0x2c] sm:$0xf]
    %v553 = vld [vmem:[%s6 + $0x30] sm:$0xf]
    %v554 = vld [vmem:[%s6 + $0x34] sm:$0xf]
    %v555 = vld [vmem:[%s6 + $0x38] sm:$0xf]
    %v556 = vld [vmem:[%s6 + $0x3c] sm:$0xf]
    %v557 = vpack.c.bf16 %v44, %v44
    %v558 = vpack.c.bf16 %v45, %v45
    %v559 = vld [vmem:[%s7] sm:$0xf]
    %v560 = vld [vmem:[%s7 + $0x4] sm:$0xf]
    %v561 = vld [vmem:[%s7 + $0x8] sm:$0xf]
    %v562 = vld [vmem:[%s7 + $0xc] sm:$0xf]
    %v563 = vld [vmem:[%s7 + $0x10] sm:$0xf]
    %v564 = vld [vmem:[%s7 + $0x14] sm:$0xf]
    %v565 = vld [vmem:[%s7 + $0x18] sm:$0xf]
    %v566 = vld [vmem:[%s7 + $0x1c] sm:$0xf]
    %v567 = vld [vmem:[%s7 + $0x20] sm:$0xf]
    %v568 = vld [vmem:[%s7 + $0x24] sm:$0xf]
    %v569 = vld [vmem:[%s7 + $0x28] sm:$0xf]
    %v570 = vld [vmem:[%s7 + $0x2c] sm:$0xf]
    %v571 = vld [vmem:[%s7 + $0x30] sm:$0xf]
    %v572 = vld [vmem:[%s7 + $0x34] sm:$0xf]
    %v573 = vld [vmem:[%s7 + $0x38] sm:$0xf]
    %v574 = vld [vmem:[%s7 + $0x3c] sm:$0xf]
    %v575 = vld [vmem:[%s8] sm:$0x1]
    %v576 = vld [vmem:[%s9] sm:$0xf]
    %v577 = vld [vmem:[%s9 + $0x4] sm:$0xf]
    %v578 = vld [vmem:[%s9 + $0x8] sm:$0xf]
    %v579 = vld [vmem:[%s9 + $0xc] sm:$0xf]
    %v580 = vld [vmem:[%s9 + $0x10] sm:$0xf]
    %v581 = vld [vmem:[%s9 + $0x14] sm:$0xf]
    %v582 = vld [vmem:[%s9 + $0x18] sm:$0xf]
    %v583 = vld [vmem:[%s9 + $0x1c] sm:$0xf]
    %v584 = vld [vmem:[%s9 + $0x20] sm:$0xf]
    %v585 = vld [vmem:[%s9 + $0x24] sm:$0xf]
    %v586 = vld [vmem:[%s9 + $0x28] sm:$0xf]
    %v587 = vld [vmem:[%s9 + $0x2c] sm:$0xf]
    %v588 = vld [vmem:[%s9 + $0x30] sm:$0xf]
    %v589 = vld [vmem:[%s9 + $0x34] sm:$0xf]
    %v590 = vld [vmem:[%s9 + $0x38] sm:$0xf]
    %v591 = vld [vmem:[%s9 + $0x3c] sm:$0xf]
    %v592 = vld [vmem:[%s10] sm:$0x1]
    %v594 = vsel %vm302, %v521, 0
    %vm596 = vcmask 1043456
    %v598 = vsel %vm596, %v557, 0
    %600 = vmatprep.subr.bf16.mxu0 0
    %601 = vmatpush1.bf16.msra.mxu0 %v598
    %602 = vmatprep.subr.bf16.mxu0 0
    %603 = vmatpush1.bf16.msra.mxu0 0
    %604 = vmatprep.subr.bf16.mxu0 0
    %605 = vmatpush1.bf16.msra.mxu0 0
    %606 = vmatprep.subr.bf16.mxu0 0
    %607 = vmatpush1.bf16.msra.mxu0 0
    %608 = vmatprep.subr.bf16.mxu0 0
    %609 = vmatpush1.bf16.msra.mxu0 0
    %610 = vmatprep.subr.bf16.mxu0 0
    %611 = vmatpush1.bf16.msra.mxu0 0
    %612 = vmatprep.subr.bf16.mxu0 0
    %613 = vmatpush1.bf16.msra.mxu0 0
    %614 = vmatprep.subr.bf16.mxu0 0
    %615 = vmatpush1.bf16.msra.mxu0 0
    %616 = vmatprep.subr.bf16.mxu0 0
    %617 = vmatpush1.bf16.msra.mxu0 0
    %618 = vmatprep.subr.bf16.mxu0 0
    %619 = vmatpush1.bf16.msra.mxu0 0
    %620 = vmatprep.subr.bf16.mxu0 0
    %621 = vmatpush1.bf16.msra.mxu0 0
    %622 = vmatprep.subr.bf16.mxu0 0
    %623 = vmatpush1.bf16.msra.mxu0 0
    %624 = vmatprep.subr.bf16.mxu0 0
    %625 = vmatpush1.bf16.msra.mxu0 0
    %626 = vmatprep.subr.bf16.mxu0 0
    %627 = vmatpush1.bf16.msra.mxu0 0
    %628 = vmatprep.subr.bf16.mxu0 0
    %629 = vmatpush1.bf16.msra.mxu0 0
    %630 = vmatprep.subr.bf16.mxu0 0
    %631 = vmatpush1.bf16.msra.mxu0 0
    %632 = vmatprep.mubr.bf16.mxu0 0
    %633 = vmatmul.mubr.bf16.gmra.mrb[0].mxu0 %v594
    %v634 = vpop.f32.mrb[0].mxu0
    %v635 = vadd.f32 0.0, %v634
    %v636 = vpop.f32.mrb[0].mxu0
    %v637 = vpop.f32.mrb[0].mxu0
    %v638 = vpop.f32.mrb[0].mxu0
    %639 = vdwg.mxu0
    %v641 = vsel %vm302, %v522, 0
    %v644 = vsel %vm596, %v558, 0
    %646 = vmatprep.subr.bf16.mxu0 0
    %647 = vmatpush1.bf16.msra.mxu0 %v644
    %648 = vmatprep.subr.bf16.mxu0 0
    %649 = vmatpush1.bf16.msra.mxu0 0
    %650 = vmatprep.subr.bf16.mxu0 0
    %651 = vmatpush1.bf16.msra.mxu0 0
    %652 = vmatprep.subr.bf16.mxu0 0
    %653 = vmatpush1.bf16.msra.mxu0 0
    %654 = vmatprep.subr.bf16.mxu0 0
    %655 = vmatpush1.bf16.msra.mxu0 0
    %656 = vmatprep.subr.bf16.mxu0 0
    %657 = vmatpush1.bf16.msra.mxu0 0
    %658 = vmatprep.subr.bf16.mxu0 0
    %659 = vmatpush1.bf16.msra.mxu0 0
    %660 = vmatprep.subr.bf16.mxu0 0
    %661 = vmatpush1.bf16.msra.mxu0 0
    %662 = vmatprep.subr.bf16.mxu0 0
    %663 = vmatpush1.bf16.msra.mxu0 0
    %664 = vmatprep.subr.bf16.mxu0 0
    %665 = vmatpush1.bf16.msra.mxu0 0
    %666 = vmatprep.subr.bf16.mxu0 0
    %667 = vmatpush1.bf16.msra.mxu0 0
    %668 = vmatprep.subr.bf16.mxu0 0
    %669 = vmatpush1.bf16.msra.mxu0 0
    %670 = vmatprep.subr.bf16.mxu0 0
    %671 = vmatpush1.bf16.msra.mxu0 0
    %672 = vmatprep.subr.bf16.mxu0 0
    %673 = vmatpush1.bf16.msra.mxu0 0
    %674 = vmatprep.subr.bf16.mxu0 0
    %675 = vmatpush1.bf16.msra.mxu0 0
    %676 = vmatprep.subr.bf16.mxu0 0
    %677 = vmatpush1.bf16.msra.mxu0 0
    %678 = vmatprep.mubr.bf16.mxu0 0
    %679 = vmatmul.mubr.bf16.gmra.mrb[0].mxu0 %v641
    %v680 = vpop.f32.mrb[0].mxu0
    %v681 = vadd.f32 0.0, %v680
    %v682 = vpop.f32.mrb[0].mxu0
    %v683 = vpop.f32.mrb[0].mxu0
    %v684 = vpop.f32.mrb[0].mxu0
    %685 = vdwg.mxu0
    %v686 = vpack.c.bf16 %v681, %v635
    %v703 = vunpack.c.l.b16 %v559
    %v704 = vunpack.c.l.b16 %v560
    %v705 = vunpack.c.l.b16 %v561
    %v706 = vunpack.c.l.b16 %v562
    %v707 = vunpack.c.l.b16 %v563
    %v708 = vunpack.c.l.b16 %v564
    %v709 = vunpack.c.l.b16 %v565
    %v710 = vunpack.c.l.b16 %v566
    %v711 = vunpack.c.l.b16 %v567
    %v712 = vunpack.c.l.b16 %v568
    %v713 = vunpack.c.l.b16 %v569
    %v714 = vunpack.c.l.b16 %v570
    %v715 = vunpack.c.l.b16 %v571
    %v716 = vunpack.c.l.b16 %v572
    %v717 = vunpack.c.l.b16 %v573
    %v718 = vunpack.c.l.b16 %v574
    %v719 = vpack.c.b16 %v704, %v703
    %v720 = vpack.c.b16 %v706, %v705
    %v721 = vpack.c.b16 %v708, %v707
    %v722 = vpack.c.b16 %v710, %v709
    %v723 = vpack.c.b16 %v712, %v711
    %v724 = vpack.c.b16 %v714, %v713
    %v725 = vpack.c.b16 %v716, %v715
    %v726 = vpack.c.b16 %v718, %v717
    %735 = vmatprep.subr.bf16.mxu0 0
    %736 = vmatpush1.bf16.msra.mxu0 %v719
    %737 = vmatprep.subr.bf16.mxu0 0
    %738 = vmatpush1.bf16.msra.mxu0 %v720
    %739 = vmatprep.subr.bf16.mxu0 0
    %740 = vmatpush1.bf16.msra.mxu0 %v721
    %741 = vmatprep.subr.bf16.mxu0 0
    %742 = vmatpush1.bf16.msra.mxu0 %v722
    %743 = vmatprep.subr.bf16.mxu0 0
    %744 = vmatpush1.bf16.msra.mxu0 %v723
    %745 = vmatprep.subr.bf16.mxu0 0
    %746 = vmatpush1.bf16.msra.mxu0 %v724
    %747 = vmatprep.subr.bf16.mxu0 0
    %748 = vmatpush1.bf16.msra.mxu0 %v725
    %749 = vmatprep.subr.bf16.mxu0 0
    %750 = vmatpush1.bf16.msra.mxu0 %v726
    %751 = vmatprep.subr.bf16.mxu0 0
    %752 = vmatpush1.bf16.msra.mxu0 0
    %753 = vmatprep.subr.bf16.mxu0 0
    %754 = vmatpush1.bf16.msra.mxu0 0
    %755 = vmatprep.subr.bf16.mxu0 0
    %756 = vmatpush1.bf16.msra.mxu0 0
    %757 = vmatprep.subr.bf16.mxu0 0
    %758 = vmatpush1.bf16.msra.mxu0 0
    %759 = vmatprep.subr.bf16.mxu0 0
    %760 = vmatpush1.bf16.msra.mxu0 0
    %761 = vmatprep.subr.bf16.mxu0 0
    %762 = vmatpush1.bf16.msra.mxu0 0
    %763 = vmatprep.subr.bf16.mxu0 0
    %764 = vmatpush1.bf16.msra.mxu0 0
    %765 = vmatprep.subr.bf16.mxu0 0
    %766 = vmatpush1.bf16.msra.mxu0 0
    %767 = vmatprep.mubr.bf16.mxu0 0
    %768 = vmatmul.mubr.bf16.gmra.mrb[0].mxu0 %v686
    %v769 = vpop.f32.mrb[0].mxu0
    %v770 = vadd.f32 0.0, %v769
    %v771 = vpop.f32.mrb[0].mxu0
    %v772 = vpop.f32.mrb[0].mxu0
    %v773 = vadd.f32 0.0, %v772
    %v774 = vpop.f32.mrb[0].mxu0
    %775 = vdwg.mxu0
    %v777 = vlaneseq
    %v778 = vshrl.u32 %v777, 7
    %v779 = vsub.s32 0, %v778
    %v780 = vrot.slane %v575, %v779
    %v782 = vadd.f32 %v770, %v780
    %v783 = vadd.f32 %v773, %v780
    %v784 = vmul.f32 %v782, %v511
    %v785 = vmul.f32 %v783, %v512
    %v786 = vmax.f32 %v784, 0.0
    %v787 = vmax.f32 %v785, 0.0
    %v789 = vsel %vm302, %v523, 0
    %791 = vmatprep.subr.bf16.mxu0 0
    %792 = vmatpush1.bf16.msra.mxu0 %v598
    %793 = vmatprep.subr.bf16.mxu0 0
    %794 = vmatpush1.bf16.msra.mxu0 0
    %795 = vmatprep.subr.bf16.mxu0 0
    %796 = vmatpush1.bf16.msra.mxu0 0
    %797 = vmatprep.subr.bf16.mxu0 0
    %798 = vmatpush1.bf16.msra.mxu0 0
    %799 = vmatprep.subr.bf16.mxu0 0
    %800 = vmatpush1.bf16.msra.mxu0 0
    %801 = vmatprep.subr.bf16.mxu0 0
    %802 = vmatpush1.bf16.msra.mxu0 0
    %803 = vmatprep.subr.bf16.mxu0 0
    %804 = vmatpush1.bf16.msra.mxu0 0
    %805 = vmatprep.subr.bf16.mxu0 0
    %806 = vmatpush1.bf16.msra.mxu0 0
    %807 = vmatprep.subr.bf16.mxu0 0
    %808 = vmatpush1.bf16.msra.mxu0 0
    %809 = vmatprep.subr.bf16.mxu0 0
    %810 = vmatpush1.bf16.msra.mxu0 0
    %811 = vmatprep.subr.bf16.mxu0 0
    %812 = vmatpush1.bf16.msra.mxu0 0
    %813 = vmatprep.subr.bf16.mxu0 0
    %814 = vmatpush1.bf16.msra.mxu0 0
    %815 = vmatprep.subr.bf16.mxu0 0
    %816 = vmatpush1.bf16.msra.mxu0 0
    %817 = vmatprep.subr.bf16.mxu0 0
    %818 = vmatpush1.bf16.msra.mxu0 0
    %819 = vmatprep.subr.bf16.mxu0 0
    %820 = vmatpush1.bf16.msra.mxu0 0
    %821 = vmatprep.subr.bf16.mxu0 0
    %822 = vmatpush1.bf16.msra.mxu0 0
    %823 = vmatprep.mubr.bf16.mxu0 0
    %824 = vmatmul.mubr.bf16.gmra.mrb[0].mxu0 %v789
    %v825 = vpop.f32.mrb[0].mxu0
    %v826 = vadd.f32 0.0, %v825
    %v827 = vpop.f32.mrb[0].mxu0
    %v828 = vpop.f32.mrb[0].mxu0
    %v829 = vpop.f32.mrb[0].mxu0
    %830 = vdwg.mxu0
    %v832 = vsel %vm302, %v524, 0
    %834 = vmatprep.subr.bf16.mxu0 0
    %835 = vmatpush1.bf16.msra.mxu0 %v644
    %836 = vmatprep.subr.bf16.mxu0 0
    %837 = vmatpush1.bf16.msra.mxu0 0
    %838 = vmatprep.subr.bf16.mxu0 0
    %839 = vmatpush1.bf16.msra.mxu0 0
    %840 = vmatprep.subr.bf16.mxu0 0
    %841 = vmatpush1.bf16.msra.mxu0 0
    %842 = vmatprep.subr.bf16.mxu0 0
    %843 = vmatpush1.bf16.msra.mxu0 0
    %844 = vmatprep.subr.bf16.mxu0 0
    %845 = vmatpush1.bf16.msra.mxu0 0
    %846 = vmatprep.subr.bf16.mxu0 0
    %847 = vmatpush1.bf16.msra.mxu0 0
    %848 = vmatprep.subr.bf16.mxu0 0
    %849 = vmatpush1.bf16.msra.mxu0 0
    %850 = vmatprep.subr.bf16.mxu0 0
    %851 = vmatpush1.bf16.msra.mxu0 0
    %852 = vmatprep.subr.bf16.mxu0 0
    %853 = vmatpush1.bf16.msra.mxu0 0
    %854 = vmatprep.subr.bf16.mxu0 0
    %855 = vmatpush1.bf16.msra.mxu0 0
    %856 = vmatprep.subr.bf16.mxu0 0
    %857 = vmatpush1.bf16.msra.mxu0 0
    %858 = vmatprep.subr.bf16.mxu0 0
    %859 = vmatpush1.bf16.msra.mxu0 0
    %860 = vmatprep.subr.bf16.mxu0 0
    %861 = vmatpush1.bf16.msra.mxu0 0
    %862 = vmatprep.subr.bf16.mxu0 0
    %863 = vmatpush1.bf16.msra.mxu0 0
    %864 = vmatprep.subr.bf16.mxu0 0
    %865 = vmatpush1.bf16.msra.mxu0 0
    %866 = vmatprep.mubr.bf16.mxu0 0
    %867 = vmatmul.mubr.bf16.gmra.mrb[0].mxu0 %v832
    %v868 = vpop.f32.mrb[0].mxu0
    %v869 = vadd.f32 0.0, %v868
    %v870 = vpop.f32.mrb[0].mxu0
    %v871 = vpop.f32.mrb[0].mxu0
    %v872 = vpop.f32.mrb[0].mxu0
    %873 = vdwg.mxu0
    %v874 = vpack.c.bf16 %v869, %v826
    %v891 = vunpack.c.l.b16 %v576
    %v892 = vunpack.c.l.b16 %v577
    %v893 = vunpack.c.l.b16 %v578
    %v894 = vunpack.c.l.b16 %v579
    %v895 = vunpack.c.l.b16 %v580
    %v896 = vunpack.c.l.b16 %v581
    %v897 = vunpack.c.l.b16 %v582
    %v898 = vunpack.c.l.b16 %v583
    %v899 = vunpack.c.l.b16 %v584
    %v900 = vunpack.c.l.b16 %v585
    %v901 = vunpack.c.l.b16 %v586
    %v902 = vunpack.c.l.b16 %v587
    %v903 = vunpack.c.l.b16 %v588
    %v904 = vunpack.c.l.b16 %v589
    %v905 = vunpack.c.l.b16 %v590
    %v906 = vunpack.c.l.b16 %v591
    %v907 = vpack.c.b16 %v892, %v891
    %v908 = vpack.c.b16 %v894, %v893
    %v909 = vpack.c.b16 %v896, %v895
    %v910 = vpack.c.b16 %v898, %v897
    %v911 = vpack.c.b16 %v900, %v899
    %v912 = vpack.c.b16 %v902, %v901
    %v913 = vpack.c.b16 %v904, %v903
    %v914 = vpack.c.b16 %v906, %v905
    %923 = vmatprep.subr.bf16.mxu0 0
    %924 = vmatpush1.bf16.msra.mxu0 %v907
    %925 = vmatprep.subr.bf16.mxu0 0
    %926 = vmatpush1.bf16.msra.mxu0 %v908
    %927 = vmatprep.subr.bf16.mxu0 0
    %928 = vmatpush1.bf16.msra.mxu0 %v909
    %929 = vmatprep.subr.bf16.mxu0 0
    %930 = vmatpush1.bf16.msra.mxu0 %v910
    %931 = vmatprep.subr.bf16.mxu0 0
    %932 = vmatpush1.bf16.msra.mxu0 %v911
    %933 = vmatprep.subr.bf16.mxu0 0
    %934 = vmatpush1.bf16.msra.mxu0 %v912
    %935 = vmatprep.subr.bf16.mxu0 0
    %936 = vmatpush1.bf16.msra.mxu0 %v913
    %937 = vmatprep.subr.bf16.mxu0 0
    %938 = vmatpush1.bf16.msra.mxu0 %v914
    %939 = vmatprep.subr.bf16.mxu0 0
    %940 = vmatpush1.bf16.msra.mxu0 0
    %941 = vmatprep.subr.bf16.mxu0 0
    %942 = vmatpush1.bf16.msra.mxu0 0
    %943 = vmatprep.subr.bf16.mxu0 0
    %944 = vmatpush1.bf16.msra.mxu0 0
    %945 = vmatprep.subr.bf16.mxu0 0
    %946 = vmatpush1.bf16.msra.mxu0 0
    %947 = vmatprep.subr.bf16.mxu0 0
    %948 = vmatpush1.bf16.msra.mxu0 0
    %949 = vmatprep.subr.bf16.mxu0 0
    %950 = vmatpush1.bf16.msra.mxu0 0
    %951 = vmatprep.subr.bf16.mxu0 0
    %952 = vmatpush1.bf16.msra.mxu0 0
    %953 = vmatprep.subr.bf16.mxu0 0
    %954 = vmatpush1.bf16.msra.mxu0 0
    %955 = vmatprep.mubr.bf16.mxu0 0
    %956 = vmatmul.mubr.bf16.gmra.mrb[0].mxu0 %v874
    %v957 = vpop.f32.mrb[0].mxu0
    %v958 = vadd.f32 0.0, %v957
    %v959 = vpop.f32.mrb[0].mxu0
    %v960 = vpop.f32.mrb[0].mxu0
    %v961 = vadd.f32 0.0, %v960
    %v962 = vpop.f32.mrb[0].mxu0
    %963 = vdwg.mxu0
    %v965 = vlaneseq
    %v966 = vshrl.u32 %v965, 7
    %v967 = vsub.s32 0, %v966
    %v968 = vrot.slane %v592, %v967
    %v970 = vadd.f32 %v958, %v968
    %v971 = vadd.f32 %v961, %v968
    %v972 = vmul.f32 %v970, %v519
    %v973 = vmul.f32 %v971, %v520
    %v974 = vmax.f32 %v972, 0.0
    %v975 = vmax.f32 %v973, 0.0
    %v976 = vpack.c.bf16 %v786, %v786
    %v977 = vpack.c.bf16 %v787, %v787
    %v978 = vpack.c.bf16 %v974, %v974
    %v979 = vpack.c.bf16 %v975, %v975
    %v980 = vpack.c.bf16 %v787, %v786
    %v997 = vunpack.c.l.b16 %v525
    %v998 = vunpack.c.l.b16 %v526
    %v999 = vunpack.c.l.b16 %v527
    %v1000 = vunpack.c.l.b16 %v528
    %v1001 = vunpack.c.l.b16 %v529
    %v1002 = vunpack.c.l.b16 %v530
    %v1003 = vunpack.c.l.b16 %v531
    %v1004 = vunpack.c.l.b16 %v532
    %v1005 = vunpack.c.l.b16 %v533
    %v1006 = vunpack.c.l.b16 %v534
    %v1007 = vunpack.c.l.b16 %v535
    %v1008 = vunpack.c.l.b16 %v536
    %v1009 = vunpack.c.l.b16 %v537
    %v1010 = vunpack.c.l.b16 %v538
    %v1011 = vunpack.c.l.b16 %v539
    %v1012 = vunpack.c.l.b16 %v540
    %v1013 = vpack.c.b16 %v998, %v997
    %v1014 = vpack.c.b16 %v1000, %v999
    %v1015 = vpack.c.b16 %v1002, %v1001
    %v1016 = vpack.c.b16 %v1004, %v1003
    %v1017 = vpack.c.b16 %v1006, %v1005
    %v1018 = vpack.c.b16 %v1008, %v1007
    %v1019 = vpack.c.b16 %v1010, %v1009
    %v1020 = vpack.c.b16 %v1012, %v1011
    %1029 = vmatprep.subr.bf16.mxu0 0
    %1030 = vmatpush1.bf16.msra.mxu0 %v1013
    %1031 = vmatprep.subr.bf16.mxu0 0
    %1032 = vmatpush1.bf16.msra.mxu0 %v1014
    %1033 = vmatprep.subr.bf16.mxu0 0
    %1034 = vmatpush1.bf16.msra.mxu0 %v1015
    %1035 = vmatprep.subr.bf16.mxu0 0
    %1036 = vmatpush1.bf16.msra.mxu0 %v1016
    %1037 = vmatprep.subr.bf16.mxu0 0
    %1038 = vmatpush1.bf16.msra.mxu0 %v1017
    %1039 = vmatprep.subr.bf16.mxu0 0
    %1040 = vmatpush1.bf16.msra.mxu0 %v1018
    %1041 = vmatprep.subr.bf16.mxu0 0
    %1042 = vmatpush1.bf16.msra.mxu0 %v1019
    %1043 = vmatprep.subr.bf16.mxu0 0
    %1044 = vmatpush1.bf16.msra.mxu0 %v1020
    %1045 = vmatprep.subr.bf16.mxu0 0
    %1046 = vmatpush1.bf16.msra.mxu0 0
    %1047 = vmatprep.subr.bf16.mxu0 0
    %1048 = vmatpush1.bf16.msra.mxu0 0
    %1049 = vmatprep.subr.bf16.mxu0 0
    %1050 = vmatpush1.bf16.msra.mxu0 0
    %1051 = vmatprep.subr.bf16.mxu0 0
    %1052 = vmatpush1.bf16.msra.mxu0 0
    %1053 = vmatprep.subr.bf16.mxu0 0
    %1054 = vmatpush1.bf16.msra.mxu0 0
    %1055 = vmatprep.subr.bf16.mxu0 0
    %1056 = vmatpush1.bf16.msra.mxu0 0
    %1057 = vmatprep.subr.bf16.mxu0 0
    %1058 = vmatpush1.bf16.msra.mxu0 0
    %1059 = vmatprep.subr.bf16.mxu0 0
    %1060 = vmatpush1.bf16.msra.mxu0 0
    %1061 = vmatprep.mubr.bf16.mxu0 0
    %1062 = vmatmul.mubr.bf16.gmra.mrb[0].mxu0 %v980
    %v1063 = vpop.f32.mrb[0].mxu0
    %v1064 = vadd.f32 0.0, %v1063
    %v1065 = vpop.f32.mrb[0].mxu0
    %v1066 = vpop.f32.mrb[0].mxu0
    %v1067 = vadd.f32 0.0, %v1066
    %v1068 = vpop.f32.mrb[0].mxu0
    %1069 = vdwg.mxu0
    %v1070 = vpack.c.bf16 %v975, %v974
    %v1087 = vunpack.c.l.b16 %v541
    %v1088 = vunpack.c.l.b16 %v542
    %v1089 = vunpack.c.l.b16 %v543
    %v1090 = vunpack.c.l.b16 %v544
    %v1091 = vunpack.c.l.b16 %v545
    %v1092 = vunpack.c.l.b16 %v546
    %v1093 = vunpack.c.l.b16 %v547
    %v1094 = vunpack.c.l.b16 %v548
    %v1095 = vunpack.c.l.b16 %v549
    %v1096 = vunpack.c.l.b16 %v550
    %v1097 = vunpack.c.l.b16 %v551
    %v1098 = vunpack.c.l.b16 %v552
    %v1099 = vunpack.c.l.b16 %v553
    %v1100 = vunpack.c.l.b16 %v554
    %v1101 = vunpack.c.l.b16 %v555
    %v1102 = vunpack.c.l.b16 %v556
    %v1103 = vpack.c.b16 %v1088, %v1087
    %v1104 = vpack.c.b16 %v1090, %v1089
    %v1105 = vpack.c.b16 %v1092, %v1091
    %v1106 = vpack.c.b16 %v1094, %v1093
    %v1107 = vpack.c.b16 %v1096, %v1095
    %v1108 = vpack.c.b16 %v1098, %v1097
    %v1109 = vpack.c.b16 %v1100, %v1099
    %v1110 = vpack.c.b16 %v1102, %v1101
    %1119 = vmatprep.subr.bf16.mxu0 0
    %1120 = vmatpush1.bf16.msra.mxu0 %v1103
    %1121 = vmatprep.subr.bf16.mxu0 0
    %1122 = vmatpush1.bf16.msra.mxu0 %v1104
    %1123 = vmatprep.subr.bf16.mxu0 0
    %1124 = vmatpush1.bf16.msra.mxu0 %v1105
    %1125 = vmatprep.subr.bf16.mxu0 0
    %1126 = vmatpush1.bf16.msra.mxu0 %v1106
    %1127 = vmatprep.subr.bf16.mxu0 0
    %1128 = vmatpush1.bf16.msra.mxu0 %v1107
    %1129 = vmatprep.subr.bf16.mxu0 0
    %1130 = vmatpush1.bf16.msra.mxu0 %v1108
    %1131 = vmatprep.subr.bf16.mxu0 0
    %1132 = vmatpush1.bf16.msra.mxu0 %v1109
    %1133 = vmatprep.subr.bf16.mxu0 0
    %1134 = vmatpush1.bf16.msra.mxu0 %v1110
    %1135 = vmatprep.subr.bf16.mxu0 0
    %1136 = vmatpush1.bf16.msra.mxu0 0
    %1137 = vmatprep.subr.bf16.mxu0 0
    %1138 = vmatpush1.bf16.msra.mxu0 0
    %1139 = vmatprep.subr.bf16.mxu0 0
    %1140 = vmatpush1.bf16.msra.mxu0 0
    %1141 = vmatprep.subr.bf16.mxu0 0
    %1142 = vmatpush1.bf16.msra.mxu0 0
    %1143 = vmatprep.subr.bf16.mxu0 0
    %1144 = vmatpush1.bf16.msra.mxu0 0
    %1145 = vmatprep.subr.bf16.mxu0 0
    %1146 = vmatpush1.bf16.msra.mxu0 0
    %1147 = vmatprep.subr.bf16.mxu0 0
    %1148 = vmatpush1.bf16.msra.mxu0 0
    %1149 = vmatprep.subr.bf16.mxu0 0
    %1150 = vmatpush1.bf16.msra.mxu0 0
    %1151 = vmatprep.mubr.bf16.mxu0 0
    %1152 = vmatmul.mubr.bf16.gmra.mrb[0].mxu0 %v1070
    %v1153 = vpop.f32.mrb[0].mxu0
    %v1154 = vadd.f32 0.0, %v1153
    %v1155 = vpop.f32.mrb[0].mxu0
    %v1156 = vpop.f32.mrb[0].mxu0
    %v1157 = vadd.f32 0.0, %v1156
    %v1158 = vpop.f32.mrb[0].mxu0
    %1159 = vdwg.mxu0
    %v1160 = vpack.c.bf16 %v1064, %v1064
    %v1161 = vpack.c.bf16 %v1067, %v1067
    %1162 = vmatprep.subr.bf16.mxu0 0
    %1163 = vmatpush1.bf16.xpose.msra.mxu0 %v978
    %1164 = vmatprep.subr.bf16.mxu0 0
    %1165 = vmatpush1.bf16.xpose.msra.mxu0 0
    %1166 = vmatprep.subr.bf16.mxu0 0
    %1167 = vmatpush1.bf16.xpose.msra.mxu0 0
    %1168 = vmatprep.subr.bf16.mxu0 0
    %1169 = vmatpush1.bf16.xpose.msra.mxu0 0
    %1170 = vmatprep.subr.bf16.mxu0 0
    %1171 = vmatpush1.bf16.xpose.msra.mxu0 0
    %1172 = vmatprep.subr.bf16.mxu0 0
    %1173 = vmatpush1.bf16.xpose.msra.mxu0 0
    %1174 = vmatprep.subr.bf16.mxu0 0
    %1175 = vmatpush1.bf16.xpose.msra.mxu0 0
    %1176 = vmatprep.subr.bf16.mxu0 0
    %1177 = vmatpush1.bf16.xpose.msra.mxu0 0
    %1178 = vmatprep.subr.bf16.mxu0 0
    %1179 = vmatpush1.bf16.xpose.msra.mxu0 0
    %1180 = vmatprep.subr.bf16.mxu0 0
    %1181 = vmatpush1.bf16.xpose.msra.mxu0 0
    %1182 = vmatprep.subr.bf16.mxu0 0
    %1183 = vmatpush1.bf16.xpose.msra.mxu0 0
    %1184 = vmatprep.subr.bf16.mxu0 0
    %1185 = vmatpush1.bf16.xpose.msra.mxu0 0
    %1186 = vmatprep.subr.bf16.mxu0 0
    %1187 = vmatpush1.bf16.xpose.msra.mxu0 0
    %1188 = vmatprep.subr.bf16.mxu0 0
    %1189 = vmatpush1.bf16.xpose.msra.mxu0 0
    %1190 = vmatprep.subr.bf16.mxu0 0
    %1191 = vmatpush1.bf16.xpose.msra.mxu0 0
    %1192 = vmatprep.subr.bf16.mxu0 0
    %1193 = vmatpush1.bf16.xpose.msra.mxu0 0
    %1194 = vmatprep.mubr.bf16.mxu0 0
    %1195 = vmatmul.mubr.bf16.gmra.mrb[0].mxu0 %v1160
    %v1196 = vpop.f32.mrb[0].mxu0
    %v1197 = vadd.f32 0.0, %v1196
    %v1198 = vpop.f32.mrb[0].mxu0
    %v1199 = vpop.f32.mrb[0].mxu0
    %v1200 = vpop.f32.mrb[0].mxu0
    %1201 = vdwg.mxu0
    %1202 = vmatprep.subr.bf16.mxu0 0
    %1203 = vmatpush1.bf16.xpose.msra.mxu0 %v979
    %1204 = vmatprep.subr.bf16.mxu0 0
    %1205 = vmatpush1.bf16.xpose.msra.mxu0 0
    %1206 = vmatprep.subr.bf16.mxu0 0
    %1207 = vmatpush1.bf16.xpose.msra.mxu0 0
    %1208 = vmatprep.subr.bf16.mxu0 0
    %1209 = vmatpush1.bf16.xpose.msra.mxu0 0
    %1210 = vmatprep.subr.bf16.mxu0 0
    %1211 = vmatpush1.bf16.xpose.msra.mxu0 0
    %1212 = vmatprep.subr.bf16.mxu0 0
    %1213 = vmatpush1.bf16.xpose.msra.mxu0 0
    %1214 = vmatprep.subr.bf16.mxu0 0
    %1215 = vmatpush1.bf16.xpose.msra.mxu0 0
    %1216 = vmatprep.subr.bf16.mxu0 0
    %1217 = vmatpush1.bf16.xpose.msra.mxu0 0
    %1218 = vmatprep.subr.bf16.mxu0 0
    %1219 = vmatpush1.bf16.xpose.msra.mxu0 0
    %1220 = vmatprep.subr.bf16.mxu0 0
    %1221 = vmatpush1.bf16.xpose.msra.mxu0 0
    %1222 = vmatprep.subr.bf16.mxu0 0
    %1223 = vmatpush1.bf16.xpose.msra.mxu0 0
    %1224 = vmatprep.subr.bf16.mxu0 0
    %1225 = vmatpush1.bf16.xpose.msra.mxu0 0
    %1226 = vmatprep.subr.bf16.mxu0 0
    %1227 = vmatpush1.bf16.xpose.msra.mxu0 0
    %1228 = vmatprep.subr.bf16.mxu0 0
    %1229 = vmatpush1.bf16.xpose.msra.mxu0 0
    %1230 = vmatprep.subr.bf16.mxu0 0
    %1231 = vmatpush1.bf16.xpose.msra.mxu0 0
    %1232 = vmatprep.subr.bf16.mxu0 0
    %1233 = vmatpush1.bf16.xpose.msra.mxu0 0
    %1234 = vmatprep.mubr.bf16.mxu0 0
    %1235 = vmatmul.mubr.bf16.gmra.mrb[0].mxu0 %v1161
    %v1236 = vpop.f32.mrb[0].mxu0
    %v1237 = vadd.f32 0.0, %v1236
    %v1238 = vpop.f32.mrb[0].mxu0
    %v1239 = vpop.f32.mrb[0].mxu0
    %v1240 = vpop.f32.mrb[0].mxu0
    %1241 = vdwg.mxu0
    %v1242 = vpack.c.bf16 %v1154, %v1154
    %v1243 = vpack.c.bf16 %v1157, %v1157
    %1244 = vmatprep.subr.bf16.mxu0 0
    %1245 = vmatpush1.bf16.xpose.msra.mxu0 %v976
    %1246 = vmatprep.subr.bf16.mxu0 0
    %1247 = vmatpush1.bf16.xpose.msra.mxu0 0
    %1248 = vmatprep.subr.bf16.mxu0 0
    %1249 = vmatpush1.bf16.xpose.msra.mxu0 0
    %1250 = vmatprep.subr.bf16.mxu0 0
    %1251 = vmatpush1.bf16.xpose.msra.mxu0 0
    %1252 = vmatprep.subr.bf16.mxu0 0
    %1253 = vmatpush1.bf16.xpose.msra.mxu0 0
    %1254 = vmatprep.subr.bf16.mxu0 0
    %1255 = vmatpush1.bf16.xpose.msra.mxu0 0
    %1256 = vmatprep.subr.bf16.mxu0 0
    %1257 = vmatpush1.bf16.xpose.msra.mxu0 0
    %1258 = vmatprep.subr.bf16.mxu0 0
    %1259 = vmatpush1.bf16.xpose.msra.mxu0 0
    %1260 = vmatprep.subr.bf16.mxu0 0
    %1261 = vmatpush1.bf16.xpose.msra.mxu0 0
    %1262 = vmatprep.subr.bf16.mxu0 0
    %1263 = vmatpush1.bf16.xpose.msra.mxu0 0
    %1264 = vmatprep.subr.bf16.mxu0 0
    %1265 = vmatpush1.bf16.xpose.msra.mxu0 0
    %1266 = vmatprep.subr.bf16.mxu0 0
    %1267 = vmatpush1.bf16.xpose.msra.mxu0 0
    %1268 = vmatprep.subr.bf16.mxu0 0
    %1269 = vmatpush1.bf16.xpose.msra.mxu0 0
    %1270 = vmatprep.subr.bf16.mxu0 0
    %1271 = vmatpush1.bf16.xpose.msra.mxu0 0
    %1272 = vmatprep.subr.bf16.mxu0 0
    %1273 = vmatpush1.bf16.xpose.msra.mxu0 0
    %1274 = vmatprep.subr.bf16.mxu0 0
    %1275 = vmatpush1.bf16.xpose.msra.mxu0 0
    %1276 = vmatprep.mubr.bf16.mxu0 0
    %1277 = vmatmul.mubr.bf16.gmra.mrb[0].mxu0 %v1242
    %v1278 = vpop.f32.mrb[0].mxu0
    %v1279 = vadd.f32 0.0, %v1278
    %v1280 = vpop.f32.mrb[0].mxu0
    %v1281 = vpop.f32.mrb[0].mxu0
    %v1282 = vpop.f32.mrb[0].mxu0
    %1283 = vdwg.mxu0
    %1284 = vmatprep.subr.bf16.mxu0 0
    %1285 = vmatpush1.bf16.xpose.msra.mxu0 %v977
    %1286 = vmatprep.subr.bf16.mxu0 0
    %1287 = vmatpush1.bf16.xpose.msra.mxu0 0
    %1288 = vmatprep.subr.bf16.mxu0 0
    %1289 = vmatpush1.bf16.xpose.msra.mxu0 0
    %1290 = vmatprep.subr.bf16.mxu0 0
    %1291 = vmatpush1.bf16.xpose.msra.mxu0 0
    %1292 = vmatprep.subr.bf16.mxu0 0
    %1293 = vmatpush1.bf16.xpose.msra.mxu0 0
    %1294 = vmatprep.subr.bf16.mxu0 0
    %1295 = vmatpush1.bf16.xpose.msra.mxu0 0
    %1296 = vmatprep.subr.bf16.mxu0 0
    %1297 = vmatpush1.bf16.xpose.msra.mxu0 0
    %1298 = vmatprep.subr.bf16.mxu0 0
    %1299 = vmatpush1.bf16.xpose.msra.mxu0 0
    %1300 = vmatprep.subr.bf16.mxu0 0
    %1301 = vmatpush1.bf16.xpose.msra.mxu0 0
    %1302 = vmatprep.subr.bf16.mxu0 0
    %1303 = vmatpush1.bf16.xpose.msra.mxu0 0
    %1304 = vmatprep.subr.bf16.mxu0 0
    %1305 = vmatpush1.bf16.xpose.msra.mxu0 0
    %1306 = vmatprep.subr.bf16.mxu0 0
    %1307 = vmatpush1.bf16.xpose.msra.mxu0 0
    %1308 = vmatprep.subr.bf16.mxu0 0
    %1309 = vmatpush1.bf16.xpose.msra.mxu0 0
    %1310 = vmatprep.subr.bf16.mxu0 0
    %1311 = vmatpush1.bf16.xpose.msra.mxu0 0
    %1312 = vmatprep.subr.bf16.mxu0 0
    %1313 = vmatpush1.bf16.xpose.msra.mxu0 0
    %1314 = vmatprep.subr.bf16.mxu0 0
    %1315 = vmatpush1.bf16.xpose.msra.mxu0 0
    %1316 = vmatprep.mubr.bf16.mxu0 0
    %1317 = vmatmul.mubr.bf16.gmra.mrb[0].mxu0 %v1243
    %v1318 = vpop.f32.mrb[0].mxu0
    %v1319 = vadd.f32 0.0, %v1318
    %v1320 = vpop.f32.mrb[0].mxu0
    %v1321 = vpop.f32.mrb[0].mxu0
    %v1322 = vpop.f32.mrb[0].mxu0
    %1323 = vdwg.mxu0
    %v1324 = vsel %vm302, %v1197, -inf
    %1325 = vmax.xlane.f32.xlu0 %v1324
    %v1326 = vpop.xlane.xlu0 %1325
    %v1327 = vsel %vm302, %v1237, -inf
    %1328 = vmax.xlane.f32.xlu0 %v1327
    %v1329 = vpop.xlane.xlu0 %1328
    %v1330 = vsub.f32 %v1197, %v1326
    %v1331 = vsub.f32 %v1237, %v1329
    %v1332 = vmul.f32 %v1330, 1.442695
    %v1333 = vpow.pop %v1332
    %v1334 = vmul.f32 %v1331, 1.442695
    %v1335 = vpow.pop %v1334
    %v1336 = vsel %vm302, %v1333, 0.0
    %1337 = vadd.xlane.f32.xlu0 %v1336
    %v1338 = vpop.xlane.xlu0 %1337
    %v1339 = vsel %vm302, %v1335, 0.0
    %1340 = vadd.xlane.f32.xlu0 %v1339
    %v1341 = vpop.xlane.xlu0 %1340
    %v1342 = vrcp.pop %v1338
    %v1343 = vmul.f32 %v1333, %v1342
    %v1344 = vrcp.pop %v1341
    %v1345 = vmul.f32 %v1335, %v1344
    %v1346 = vpack.c.bf16 %v1343, %v1343
    %v1347 = vpack.c.bf16 %v1345, %v1345
    %v1348 = vsel %vm302, %v1279, -inf
    %1349 = vmax.xlane.f32.xlu0 %v1348
    %v1350 = vpop.xlane.xlu0 %1349
    %v1351 = vsel %vm302, %v1319, -inf
    %1352 = vmax.xlane.f32.xlu0 %v1351
    %v1353 = vpop.xlane.xlu0 %1352
    %v1354 = vsub.f32 %v1279, %v1350
    %v1355 = vsub.f32 %v1319, %v1353
    %v1356 = vmul.f32 %v1354, 1.442695
    %v1357 = vpow.pop %v1356
    %v1358 = vmul.f32 %v1355, 1.442695
    %v1359 = vpow.pop %v1358
    %v1360 = vsel %vm302, %v1357, 0.0
    %1361 = vadd.xlane.f32.xlu0 %v1360
    %v1362 = vpop.xlane.xlu0 %1361
    %v1363 = vsel %vm302, %v1359, 0.0
    %1364 = vadd.xlane.f32.xlu0 %v1363
    %v1365 = vpop.xlane.xlu0 %1364
    %v1366 = vrcp.pop %v1362
    %v1367 = vmul.f32 %v1357, %v1366
    %v1368 = vrcp.pop %v1365
    %v1369 = vmul.f32 %v1359, %v1368
    %v1370 = vpack.c.bf16 %v1367, %v1367
    %v1371 = vpack.c.bf16 %v1369, %v1369
    %v1373 = vsel %vm302, %v1346, 0
    %v1376 = vsel %vm596, %v978, 0
    %1378 = vmatprep.subr.bf16.mxu0 0
    %1379 = vmatpush1.bf16.msra.mxu0 %v1376
    %1380 = vmatprep.subr.bf16.mxu0 0
    %1381 = vmatpush1.bf16.msra.mxu0 0
    %1382 = vmatprep.subr.bf16.mxu0 0
    %1383 = vmatpush1.bf16.msra.mxu0 0
    %1384 = vmatprep.subr.bf16.mxu0 0
    %1385 = vmatpush1.bf16.msra.mxu0 0
    %1386 = vmatprep.subr.bf16.mxu0 0
    %1387 = vmatpush1.bf16.msra.mxu0 0
    %1388 = vmatprep.subr.bf16.mxu0 0
    %1389 = vmatpush1.bf16.msra.mxu0 0
    %1390 = vmatprep.subr.bf16.mxu0 0
    %1391 = vmatpush1.bf16.msra.mxu0 0
    %1392 = vmatprep.subr.bf16.mxu0 0
    %1393 = vmatpush1.bf16.msra.mxu0 0
    %1394 = vmatprep.subr.bf16.mxu0 0
    %1395 = vmatpush1.bf16.msra.mxu0 0
    %1396 = vmatprep.subr.bf16.mxu0 0
    %1397 = vmatpush1.bf16.msra.mxu0 0
    %1398 = vmatprep.subr.bf16.mxu0 0
    %1399 = vmatpush1.bf16.msra.mxu0 0
    %1400 = vmatprep.subr.bf16.mxu0 0
    %1401 = vmatpush1.bf16.msra.mxu0 0
    %1402 = vmatprep.subr.bf16.mxu0 0
    %1403 = vmatpush1.bf16.msra.mxu0 0
    %1404 = vmatprep.subr.bf16.mxu0 0
    %1405 = vmatpush1.bf16.msra.mxu0 0
    %1406 = vmatprep.subr.bf16.mxu0 0
    %1407 = vmatpush1.bf16.msra.mxu0 0
    %1408 = vmatprep.subr.bf16.mxu0 0
    %1409 = vmatpush1.bf16.msra.mxu0 0
    %1410 = vmatprep.mubr.bf16.mxu0 0
    %1411 = vmatmul.mubr.bf16.gmra.mrb[0].mxu0 %v1373
    %v1412 = vpop.f32.mrb[0].mxu0
    %v1413 = vadd.f32 0.0, %v1412
    %v1414 = vpop.f32.mrb[0].mxu0
    %v1415 = vpop.f32.mrb[0].mxu0
    %v1416 = vpop.f32.mrb[0].mxu0
    %1417 = vdwg.mxu0
    %v1419 = vsel %vm302, %v1347, 0
    %v1422 = vsel %vm596, %v979, 0
    %1424 = vmatprep.subr.bf16.mxu0 0
    %1425 = vmatpush1.bf16.msra.mxu0 %v1422
    %1426 = vmatprep.subr.bf16.mxu0 0
    %1427 = vmatpush1.bf16.msra.mxu0 0
    %1428 = vmatprep.subr.bf16.mxu0 0
    %1429 = vmatpush1.bf16.msra.mxu0 0
    %1430 = vmatprep.subr.bf16.mxu0 0
    %1431 = vmatpush1.bf16.msra.mxu0 0
    %1432 = vmatprep.subr.bf16.mxu0 0
    %1433 = vmatpush1.bf16.msra.mxu0 0
    %1434 = vmatprep.subr.bf16.mxu0 0
    %1435 = vmatpush1.bf16.msra.mxu0 0
    %1436 = vmatprep.subr.bf16.mxu0 0
    %1437 = vmatpush1.bf16.msra.mxu0 0
    %1438 = vmatprep.subr.bf16.mxu0 0
    %1439 = vmatpush1.bf16.msra.mxu0 0
    %1440 = vmatprep.subr.bf16.mxu0 0
    %1441 = vmatpush1.bf16.msra.mxu0 0
    %1442 = vmatprep.subr.bf16.mxu0 0
    %1443 = vmatpush1.bf16.msra.mxu0 0
    %1444 = vmatprep.subr.bf16.mxu0 0
    %1445 = vmatpush1.bf16.msra.mxu0 0
    %1446 = vmatprep.subr.bf16.mxu0 0
    %1447 = vmatpush1.bf16.msra.mxu0 0
    %1448 = vmatprep.subr.bf16.mxu0 0
    %1449 = vmatpush1.bf16.msra.mxu0 0
    %1450 = vmatprep.subr.bf16.mxu0 0
    %1451 = vmatpush1.bf16.msra.mxu0 0
    %1452 = vmatprep.subr.bf16.mxu0 0
    %1453 = vmatpush1.bf16.msra.mxu0 0
    %1454 = vmatprep.subr.bf16.mxu0 0
    %1455 = vmatpush1.bf16.msra.mxu0 0
    %1456 = vmatprep.mubr.bf16.mxu0 0
    %1457 = vmatmul.mubr.bf16.gmra.mrb[0].mxu0 %v1419
    %v1458 = vpop.f32.mrb[0].mxu0
    %v1459 = vadd.f32 0.0, %v1458
    %v1460 = vpop.f32.mrb[0].mxu0
    %v1461 = vpop.f32.mrb[0].mxu0
    %v1462 = vpop.f32.mrb[0].mxu0
    %1463 = vdwg.mxu0
    %v1465 = vsel %vm302, %v1370, 0
    %v1468 = vsel %vm596, %v976, 0
    %1470 = vmatprep.subr.bf16.mxu0 0
    %1471 = vmatpush1.bf16.msra.mxu0 %v1468
    %1472 = vmatprep.subr.bf16.mxu0 0
    %1473 = vmatpush1.bf16.msra.mxu0 0
    %1474 = vmatprep.subr.bf16.mxu0 0
    %1475 = vmatpush1.bf16.msra.mxu0 0
    %1476 = vmatprep.subr.bf16.mxu0 0
    %1477 = vmatpush1.bf16.msra.mxu0 0
    %1478 = vmatprep.subr.bf16.mxu0 0
    %1479 = vmatpush1.bf16.msra.mxu0 0
    %1480 = vmatprep.subr.bf16.mxu0 0
    %1481 = vmatpush1.bf16.msra.mxu0 0
    %1482 = vmatprep.subr.bf16.mxu0 0
    %1483 = vmatpush1.bf16.msra.mxu0 0
    %1484 = vmatprep.subr.bf16.mxu0 0
    %1485 = vmatpush1.bf16.msra.mxu0 0
    %1486 = vmatprep.subr.bf16.mxu0 0
    %1487 = vmatpush1.bf16.msra.mxu0 0
    %1488 = vmatprep.subr.bf16.mxu0 0
    %1489 = vmatpush1.bf16.msra.mxu0 0
    %1490 = vmatprep.subr.bf16.mxu0 0
    %1491 = vmatpush1.bf16.msra.mxu0 0
    %1492 = vmatprep.subr.bf16.mxu0 0
    %1493 = vmatpush1.bf16.msra.mxu0 0
    %1494 = vmatprep.subr.bf16.mxu0 0
    %1495 = vmatpush1.bf16.msra.mxu0 0
    %1496 = vmatprep.subr.bf16.mxu0 0
    %1497 = vmatpush1.bf16.msra.mxu0 0
    %1498 = vmatprep.subr.bf16.mxu0 0
    %1499 = vmatpush1.bf16.msra.mxu0 0
    %1500 = vmatprep.subr.bf16.mxu0 0
    %1501 = vmatpush1.bf16.msra.mxu0 0
    %1502 = vmatprep.mubr.bf16.mxu0 0
    %1503 = vmatmul.mubr.bf16.gmra.mrb[0].mxu0 %v1465
    %v1504 = vpop.f32.mrb[0].mxu0
    %v1505 = vadd.f32 0.0, %v1504
    %v1506 = vpop.f32.mrb[0].mxu0
    %v1507 = vpop.f32.mrb[0].mxu0
    %v1508 = vpop.f32.mrb[0].mxu0
    %1509 = vdwg.mxu0
    %v1511 = vsel %vm302, %v1371, 0
    %v1514 = vsel %vm596, %v977, 0
    %1516 = vmatprep.subr.bf16.mxu0 0
    %1517 = vmatpush1.bf16.msra.mxu0 %v1514
    %1518 = vmatprep.subr.bf16.mxu0 0
    %1519 = vmatpush1.bf16.msra.mxu0 0
    %1520 = vmatprep.subr.bf16.mxu0 0
    %1521 = vmatpush1.bf16.msra.mxu0 0
    %1522 = vmatprep.subr.bf16.mxu0 0
    %1523 = vmatpush1.bf16.msra.mxu0 0
    %1524 = vmatprep.subr.bf16.mxu0 0
    %1525 = vmatpush1.bf16.msra.mxu0 0
    %1526 = vmatprep.subr.bf16.mxu0 0
    %1527 = vmatpush1.bf16.msra.mxu0 0
    %1528 = vmatprep.subr.bf16.mxu0 0
    %1529 = vmatpush1.bf16.msra.mxu0 0
    %1530 = vmatprep.subr.bf16.mxu0 0
    %1531 = vmatpush1.bf16.msra.mxu0 0
    %1532 = vmatprep.subr.bf16.mxu0 0
    %1533 = vmatpush1.bf16.msra.mxu0 0
    %1534 = vmatprep.subr.bf16.mxu0 0
    %1535 = vmatpush1.bf16.msra.mxu0 0
    %1536 = vmatprep.subr.bf16.mxu0 0
    %1537 = vmatpush1.bf16.msra.mxu0 0
    %1538 = vmatprep.subr.bf16.mxu0 0
    %1539 = vmatpush1.bf16.msra.mxu0 0
    %1540 = vmatprep.subr.bf16.mxu0 0
    %1541 = vmatpush1.bf16.msra.mxu0 0
    %1542 = vmatprep.subr.bf16.mxu0 0
    %1543 = vmatpush1.bf16.msra.mxu0 0
    %1544 = vmatprep.subr.bf16.mxu0 0
    %1545 = vmatpush1.bf16.msra.mxu0 0
    %1546 = vmatprep.subr.bf16.mxu0 0
    %1547 = vmatpush1.bf16.msra.mxu0 0
    %1548 = vmatprep.mubr.bf16.mxu0 0
    %1549 = vmatmul.mubr.bf16.gmra.mrb[0].mxu0 %v1511
    %v1550 = vpop.f32.mrb[0].mxu0
    %v1551 = vadd.f32 0.0, %v1550
    %v1552 = vpop.f32.mrb[0].mxu0
    %v1553 = vpop.f32.mrb[0].mxu0
    %v1554 = vpop.f32.mrb[0].mxu0
    %1555 = vdwg.mxu0
    %v1556 = vpack.c.bf16 %v1413, %v1413
    %v1557 = vpack.c.bf16 %v1459, %v1459
    %v1558 = vpack.c.bf16 %v1505, %v1505
    %v1559 = vpack.c.bf16 %v1551, %v1551
    %s1560 = scalar_lea.vmem %s7, 64
    %v1561 = vld [vmem:[%s1560] sm:$0xf]
    %v1562 = vld [vmem:[%s1560 + $0x4] sm:$0xf]
    %v1563 = vld [vmem:[%s1560 + $0x8] sm:$0xf]
    %v1564 = vld [vmem:[%s1560 + $0xc] sm:$0xf]
    %v1565 = vld [vmem:[%s1560 + $0x10] sm:$0xf]
    %v1566 = vld [vmem:[%s1560 + $0x14] sm:$0xf]
    %v1567 = vld [vmem:[%s1560 + $0x18] sm:$0xf]
    %v1568 = vld [vmem:[%s1560 + $0x1c] sm:$0xf]
    %v1569 = vld [vmem:[%s1560 + $0x20] sm:$0xf]
    %v1570 = vld [vmem:[%s1560 + $0x24] sm:$0xf]
    %v1571 = vld [vmem:[%s1560 + $0x28] sm:$0xf]
    %v1572 = vld [vmem:[%s1560 + $0x2c] sm:$0xf]
    %v1573 = vld [vmem:[%s1560 + $0x30] sm:$0xf]
    %v1574 = vld [vmem:[%s1560 + $0x34] sm:$0xf]
    %v1575 = vld [vmem:[%s1560 + $0x38] sm:$0xf]
    %v1576 = vld [vmem:[%s1560 + $0x3c] sm:$0xf]
    %s1577 = scalar_lea.vmem %s8, 1
    %v1578 = vld [vmem:[%s1577] sm:$0x1]
    %s1579 = scalar_lea.vmem %s9, 64
    %v1580 = vld [vmem:[%s1579] sm:$0xf]
    %v1581 = vld [vmem:[%s1579 + $0x4] sm:$0xf]
    %v1582 = vld [vmem:[%s1579 + $0x8] sm:$0xf]
    %v1583 = vld [vmem:[%s1579 + $0xc] sm:$0xf]
    %v1584 = vld [vmem:[%s1579 + $0x10] sm:$0xf]
    %v1585 = vld [vmem:[%s1579 + $0x14] sm:$0xf]
    %v1586 = vld [vmem:[%s1579 + $0x18] sm:$0xf]
    %v1587 = vld [vmem:[%s1579 + $0x1c] sm:$0xf]
    %v1588 = vld [vmem:[%s1579 + $0x20] sm:$0xf]
    %v1589 = vld [vmem:[%s1579 + $0x24] sm:$0xf]
    %v1590 = vld [vmem:[%s1579 + $0x28] sm:$0xf]
    %v1591 = vld [vmem:[%s1579 + $0x2c] sm:$0xf]
    %v1592 = vld [vmem:[%s1579 + $0x30] sm:$0xf]
    %v1593 = vld [vmem:[%s1579 + $0x34] sm:$0xf]
    %v1594 = vld [vmem:[%s1579 + $0x38] sm:$0xf]
    %v1595 = vld [vmem:[%s1579 + $0x3c] sm:$0xf]
    %s1596 = scalar_lea.vmem %s10, 1
    %v1597 = vld [vmem:[%s1596] sm:$0x1]
    %v1599 = vsel %vm596, %v1556, 0
    %1601 = vmatprep.subr.bf16.mxu0 0
    %1602 = vmatpush1.bf16.msra.mxu0 %v1599
    %1603 = vmatprep.subr.bf16.mxu0 0
    %1604 = vmatpush1.bf16.msra.mxu0 0
    %1605 = vmatprep.subr.bf16.mxu0 0
    %1606 = vmatpush1.bf16.msra.mxu0 0
    %1607 = vmatprep.subr.bf16.mxu0 0
    %1608 = vmatpush1.bf16.msra.mxu0 0
    %1609 = vmatprep.subr.bf16.mxu0 0
    %1610 = vmatpush1.bf16.msra.mxu0 0
    %1611 = vmatprep.subr.bf16.mxu0 0
    %1612 = vmatpush1.bf16.msra.mxu0 0
    %1613 = vmatprep.subr.bf16.mxu0 0
    %1614 = vmatpush1.bf16.msra.mxu0 0
    %1615 = vmatprep.subr.bf16.mxu0 0
    %1616 = vmatpush1.bf16.msra.mxu0 0
    %1617 = vmatprep.subr.bf16.mxu0 0
    %1618 = vmatpush1.bf16.msra.mxu0 0
    %1619 = vmatprep.subr.bf16.mxu0 0
    %1620 = vmatpush1.bf16.msra.mxu0 0
    %1621 = vmatprep.subr.bf16.mxu0 0
    %1622 = vmatpush1.bf16.msra.mxu0 0
    %1623 = vmatprep.subr.bf16.mxu0 0
    %1624 = vmatpush1.bf16.msra.mxu0 0
    %1625 = vmatprep.subr.bf16.mxu0 0
    %1626 = vmatpush1.bf16.msra.mxu0 0
    %1627 = vmatprep.subr.bf16.mxu0 0
    %1628 = vmatpush1.bf16.msra.mxu0 0
    %1629 = vmatprep.subr.bf16.mxu0 0
    %1630 = vmatpush1.bf16.msra.mxu0 0
    %1631 = vmatprep.subr.bf16.mxu0 0
    %1632 = vmatpush1.bf16.msra.mxu0 0
    %1633 = vmatprep.mubr.bf16.mxu0 0
    %1634 = vmatmul.mubr.bf16.gmra.mrb[0].mxu0 %v594
    %v1635 = vpop.f32.mrb[0].mxu0
    %v1636 = vadd.f32 0.0, %v1635
    %v1637 = vpop.f32.mrb[0].mxu0
    %v1638 = vpop.f32.mrb[0].mxu0
    %v1639 = vpop.f32.mrb[0].mxu0
    %1640 = vdwg.mxu0
    %v1642 = vsel %vm596, %v1557, 0
    %1644 = vmatprep.subr.bf16.mxu0 0
    %1645 = vmatpush1.bf16.msra.mxu0 %v1642
    %1646 = vmatprep.subr.bf16.mxu0 0
    %1647 = vmatpush1.bf16.msra.mxu0 0
    %1648 = vmatprep.subr.bf16.mxu0 0
    %1649 = vmatpush1.bf16.msra.mxu0 0
    %1650 = vmatprep.subr.bf16.mxu0 0
    %1651 = vmatpush1.bf16.msra.mxu0 0
    %1652 = vmatprep.subr.bf16.mxu0 0
    %1653 = vmatpush1.bf16.msra.mxu0 0
    %1654 = vmatprep.subr.bf16.mxu0 0
    %1655 = vmatpush1.bf16.msra.mxu0 0
    %1656 = vmatprep.subr.bf16.mxu0 0
    %1657 = vmatpush1.bf16.msra.mxu0 0
    %1658 = vmatprep.subr.bf16.mxu0 0
    %1659 = vmatpush1.bf16.msra.mxu0 0
    %1660 = vmatprep.subr.bf16.mxu0 0
    %1661 = vmatpush1.bf16.msra.mxu0 0
    %1662 = vmatprep.subr.bf16.mxu0 0
    %1663 = vmatpush1.bf16.msra.mxu0 0
    %1664 = vmatprep.subr.bf16.mxu0 0
    %1665 = vmatpush1.bf16.msra.mxu0 0
    %1666 = vmatprep.subr.bf16.mxu0 0
    %1667 = vmatpush1.bf16.msra.mxu0 0
    %1668 = vmatprep.subr.bf16.mxu0 0
    %1669 = vmatpush1.bf16.msra.mxu0 0
    %1670 = vmatprep.subr.bf16.mxu0 0
    %1671 = vmatpush1.bf16.msra.mxu0 0
    %1672 = vmatprep.subr.bf16.mxu0 0
    %1673 = vmatpush1.bf16.msra.mxu0 0
    %1674 = vmatprep.subr.bf16.mxu0 0
    %1675 = vmatpush1.bf16.msra.mxu0 0
    %1676 = vmatprep.mubr.bf16.mxu0 0
    %1677 = vmatmul.mubr.bf16.gmra.mrb[0].mxu0 %v641
    %v1678 = vpop.f32.mrb[0].mxu0
    %v1679 = vadd.f32 0.0, %v1678
    %v1680 = vpop.f32.mrb[0].mxu0
    %v1681 = vpop.f32.mrb[0].mxu0
    %v1682 = vpop.f32.mrb[0].mxu0
    %1683 = vdwg.mxu0
    %v1684 = vpack.c.bf16 %v1679, %v1636
    %v1701 = vunpack.c.l.b16 %v1561
    %v1702 = vunpack.c.l.b16 %v1562
    %v1703 = vunpack.c.l.b16 %v1563
    %v1704 = vunpack.c.l.b16 %v1564
    %v1705 = vunpack.c.l.b16 %v1565
    %v1706 = vunpack.c.l.b16 %v1566
    %v1707 = vunpack.c.l.b16 %v1567
    %v1708 = vunpack.c.l.b16 %v1568
    %v1709 = vunpack.c.l.b16 %v1569
    %v1710 = vunpack.c.l.b16 %v1570
    %v1711 = vunpack.c.l.b16 %v1571
    %v1712 = vunpack.c.l.b16 %v1572
    %v1713 = vunpack.c.l.b16 %v1573
    %v1714 = vunpack.c.l.b16 %v1574
    %v1715 = vunpack.c.l.b16 %v1575
    %v1716 = vunpack.c.l.b16 %v1576
    %v1717 = vpack.c.b16 %v1702, %v1701
    %v1718 = vpack.c.b16 %v1704, %v1703
    %v1719 = vpack.c.b16 %v1706, %v1705
    %v1720 = vpack.c.b16 %v1708, %v1707
    %v1721 = vpack.c.b16 %v1710, %v1709
    %v1722 = vpack.c.b16 %v1712, %v1711
    %v1723 = vpack.c.b16 %v1714, %v1713
    %v1724 = vpack.c.b16 %v1716, %v1715
    %1733 = vmatprep.subr.bf16.mxu0 0
    %1734 = vmatpush1.bf16.msra.mxu0 %v1717
    %1735 = vmatprep.subr.bf16.mxu0 0
    %1736 = vmatpush1.bf16.msra.mxu0 %v1718
    %1737 = vmatprep.subr.bf16.mxu0 0
    %1738 = vmatpush1.bf16.msra.mxu0 %v1719
    %1739 = vmatprep.subr.bf16.mxu0 0
    %1740 = vmatpush1.bf16.msra.mxu0 %v1720
    %1741 = vmatprep.subr.bf16.mxu0 0
    %1742 = vmatpush1.bf16.msra.mxu0 %v1721
    %1743 = vmatprep.subr.bf16.mxu0 0
    %1744 = vmatpush1.bf16.msra.mxu0 %v1722
    %1745 = vmatprep.subr.bf16.mxu0 0
    %1746 = vmatpush1.bf16.msra.mxu0 %v1723
    %1747 = vmatprep.subr.bf16.mxu0 0
    %1748 = vmatpush1.bf16.msra.mxu0 %v1724
    %1749 = vmatprep.subr.bf16.mxu0 0
    %1750 = vmatpush1.bf16.msra.mxu0 0
    %1751 = vmatprep.subr.bf16.mxu0 0
    %1752 = vmatpush1.bf16.msra.mxu0 0
    %1753 = vmatprep.subr.bf16.mxu0 0
    %1754 = vmatpush1.bf16.msra.mxu0 0
    %1755 = vmatprep.subr.bf16.mxu0 0
    %1756 = vmatpush1.bf16.msra.mxu0 0
    %1757 = vmatprep.subr.bf16.mxu0 0
    %1758 = vmatpush1.bf16.msra.mxu0 0
    %1759 = vmatprep.subr.bf16.mxu0 0
    %1760 = vmatpush1.bf16.msra.mxu0 0
    %1761 = vmatprep.subr.bf16.mxu0 0
    %1762 = vmatpush1.bf16.msra.mxu0 0
    %1763 = vmatprep.subr.bf16.mxu0 0
    %1764 = vmatpush1.bf16.msra.mxu0 0
    %1765 = vmatprep.mubr.bf16.mxu0 0
    %1766 = vmatmul.mubr.bf16.gmra.mrb[0].mxu0 %v1684
    %v1767 = vpop.f32.mrb[0].mxu0
    %v1768 = vadd.f32 0.0, %v1767
    %v1769 = vpop.f32.mrb[0].mxu0
    %v1770 = vpop.f32.mrb[0].mxu0
    %v1771 = vadd.f32 0.0, %v1770
    %v1772 = vpop.f32.mrb[0].mxu0
    %1773 = vdwg.mxu0
    %v1775 = vlaneseq
    %v1776 = vshrl.u32 %v1775, 7
    %v1777 = vsub.s32 0, %v1776
    %v1778 = vrot.slane %v1578, %v1777
    %v1780 = vadd.f32 %v1768, %v1778
    %v1781 = vadd.f32 %v1771, %v1778
    %v1782 = vmul.f32 %v1780, %v511
    %v1783 = vmul.f32 %v1781, %v512
    %v1784 = vmax.f32 %v1782, 0.0
    %v1785 = vmax.f32 %v1783, 0.0
    %v1787 = vsel %vm596, %v1558, 0
    %1789 = vmatprep.subr.bf16.mxu0 0
    %1790 = vmatpush1.bf16.msra.mxu0 %v1787
    %1791 = vmatprep.subr.bf16.mxu0 0
    %1792 = vmatpush1.bf16.msra.mxu0 0
    %1793 = vmatprep.subr.bf16.mxu0 0
    %1794 = vmatpush1.bf16.msra.mxu0 0
    %1795 = vmatprep.subr.bf16.mxu0 0
    %1796 = vmatpush1.bf16.msra.mxu0 0
    %1797 = vmatprep.subr.bf16.mxu0 0
    %1798 = vmatpush1.bf16.msra.mxu0 0
    %1799 = vmatprep.subr.bf16.mxu0 0
    %1800 = vmatpush1.bf16.msra.mxu0 0
    %1801 = vmatprep.subr.bf16.mxu0 0
    %1802 = vmatpush1.bf16.msra.mxu0 0
    %1803 = vmatprep.subr.bf16.mxu0 0
    %1804 = vmatpush1.bf16.msra.mxu0 0
    %1805 = vmatprep.subr.bf16.mxu0 0
    %1806 = vmatpush1.bf16.msra.mxu0 0
    %1807 = vmatprep.subr.bf16.mxu0 0
    %1808 = vmatpush1.bf16.msra.mxu0 0
    %1809 = vmatprep.subr.bf16.mxu0 0
    %1810 = vmatpush1.bf16.msra.mxu0 0
    %1811 = vmatprep.subr.bf16.mxu0 0
    %1812 = vmatpush1.bf16.msra.mxu0 0
    %1813 = vmatprep.subr.bf16.mxu0 0
    %1814 = vmatpush1.bf16.msra.mxu0 0
    %1815 = vmatprep.subr.bf16.mxu0 0
    %1816 = vmatpush1.bf16.msra.mxu0 0
    %1817 = vmatprep.subr.bf16.mxu0 0
    %1818 = vmatpush1.bf16.msra.mxu0 0
    %1819 = vmatprep.subr.bf16.mxu0 0
    %1820 = vmatpush1.bf16.msra.mxu0 0
    %1821 = vmatprep.mubr.bf16.mxu0 0
    %1822 = vmatmul.mubr.bf16.gmra.mrb[0].mxu0 %v789
    %v1823 = vpop.f32.mrb[0].mxu0
    %v1824 = vadd.f32 0.0, %v1823
    %v1825 = vpop.f32.mrb[0].mxu0
    %v1826 = vpop.f32.mrb[0].mxu0
    %v1827 = vpop.f32.mrb[0].mxu0
    %1828 = vdwg.mxu0
    %v1830 = vsel %vm596, %v1559, 0
    %1832 = vmatprep.subr.bf16.mxu0 0
    %1833 = vmatpush1.bf16.msra.mxu0 %v1830
    %1834 = vmatprep.subr.bf16.mxu0 0
    %1835 = vmatpush1.bf16.msra.mxu0 0
    %1836 = vmatprep.subr.bf16.mxu0 0
    %1837 = vmatpush1.bf16.msra.mxu0 0
    %1838 = vmatprep.subr.bf16.mxu0 0
    %1839 = vmatpush1.bf16.msra.mxu0 0
    %1840 = vmatprep.subr.bf16.mxu0 0
    %1841 = vmatpush1.bf16.msra.mxu0 0
    %1842 = vmatprep.subr.bf16.mxu0 0
    %1843 = vmatpush1.bf16.msra.mxu0 0
    %1844 = vmatprep.subr.bf16.mxu0 0
    %1845 = vmatpush1.bf16.msra.mxu0 0
    %1846 = vmatprep.subr.bf16.mxu0 0
    %1847 = vmatpush1.bf16.msra.mxu0 0
    %1848 = vmatprep.subr.bf16.mxu0 0
    %1849 = vmatpush1.bf16.msra.mxu0 0
    %1850 = vmatprep.subr.bf16.mxu0 0
    %1851 = vmatpush1.bf16.msra.mxu0 0
    %1852 = vmatprep.subr.bf16.mxu0 0
    %1853 = vmatpush1.bf16.msra.mxu0 0
    %1854 = vmatprep.subr.bf16.mxu0 0
    %1855 = vmatpush1.bf16.msra.mxu0 0
    %1856 = vmatprep.subr.bf16.mxu0 0
    %1857 = vmatpush1.bf16.msra.mxu0 0
    %1858 = vmatprep.subr.bf16.mxu0 0
    %1859 = vmatpush1.bf16.msra.mxu0 0
    %1860 = vmatprep.subr.bf16.mxu0 0
    %1861 = vmatpush1.bf16.msra.mxu0 0
    %1862 = vmatprep.subr.bf16.mxu0 0
    %1863 = vmatpush1.bf16.msra.mxu0 0
    %1864 = vmatprep.mubr.bf16.mxu0 0
    %1865 = vmatmul.mubr.bf16.gmra.mrb[0].mxu0 %v832
    %v1866 = vpop.f32.mrb[0].mxu0
    %v1867 = vadd.f32 0.0, %v1866
    %v1868 = vpop.f32.mrb[0].mxu0
    %v1869 = vpop.f32.mrb[0].mxu0
    %v1870 = vpop.f32.mrb[0].mxu0
    %1871 = vdwg.mxu0
    %v1872 = vpack.c.bf16 %v1867, %v1824
    %v1889 = vunpack.c.l.b16 %v1580
    %v1890 = vunpack.c.l.b16 %v1581
    %v1891 = vunpack.c.l.b16 %v1582
    %v1892 = vunpack.c.l.b16 %v1583
    %v1893 = vunpack.c.l.b16 %v1584
    %v1894 = vunpack.c.l.b16 %v1585
    %v1895 = vunpack.c.l.b16 %v1586
    %v1896 = vunpack.c.l.b16 %v1587
    %v1897 = vunpack.c.l.b16 %v1588
    %v1898 = vunpack.c.l.b16 %v1589
    %v1899 = vunpack.c.l.b16 %v1590
    %v1900 = vunpack.c.l.b16 %v1591
    %v1901 = vunpack.c.l.b16 %v1592
    %v1902 = vunpack.c.l.b16 %v1593
    %v1903 = vunpack.c.l.b16 %v1594
    %v1904 = vunpack.c.l.b16 %v1595
    %v1905 = vpack.c.b16 %v1890, %v1889
    %v1906 = vpack.c.b16 %v1892, %v1891
    %v1907 = vpack.c.b16 %v1894, %v1893
    %v1908 = vpack.c.b16 %v1896, %v1895
    %v1909 = vpack.c.b16 %v1898, %v1897
    %v1910 = vpack.c.b16 %v1900, %v1899
    %v1911 = vpack.c.b16 %v1902, %v1901
    %v1912 = vpack.c.b16 %v1904, %v1903
    %1921 = vmatprep.subr.bf16.mxu0 0
    %1922 = vmatpush1.bf16.msra.mxu0 %v1905
    %1923 = vmatprep.subr.bf16.mxu0 0
    %1924 = vmatpush1.bf16.msra.mxu0 %v1906
    %1925 = vmatprep.subr.bf16.mxu0 0
    %1926 = vmatpush1.bf16.msra.mxu0 %v1907
    %1927 = vmatprep.subr.bf16.mxu0 0
    %1928 = vmatpush1.bf16.msra.mxu0 %v1908
    %1929 = vmatprep.subr.bf16.mxu0 0
    %1930 = vmatpush1.bf16.msra.mxu0 %v1909
    %1931 = vmatprep.subr.bf16.mxu0 0
    %1932 = vmatpush1.bf16.msra.mxu0 %v1910
    %1933 = vmatprep.subr.bf16.mxu0 0
    %1934 = vmatpush1.bf16.msra.mxu0 %v1911
    %1935 = vmatprep.subr.bf16.mxu0 0
    %1936 = vmatpush1.bf16.msra.mxu0 %v1912
    %1937 = vmatprep.subr.bf16.mxu0 0
    %1938 = vmatpush1.bf16.msra.mxu0 0
    %1939 = vmatprep.subr.bf16.mxu0 0
    %1940 = vmatpush1.bf16.msra.mxu0 0
    %1941 = vmatprep.subr.bf16.mxu0 0
    %1942 = vmatpush1.bf16.msra.mxu0 0
    %1943 = vmatprep.subr.bf16.mxu0 0
    %1944 = vmatpush1.bf16.msra.mxu0 0
    %1945 = vmatprep.subr.bf16.mxu0 0
    %1946 = vmatpush1.bf16.msra.mxu0 0
    %1947 = vmatprep.subr.bf16.mxu0 0
    %1948 = vmatpush1.bf16.msra.mxu0 0
    %1949 = vmatprep.subr.bf16.mxu0 0
    %1950 = vmatpush1.bf16.msra.mxu0 0
    %1951 = vmatprep.subr.bf16.mxu0 0
    %1952 = vmatpush1.bf16.msra.mxu0 0
    %1953 = vmatprep.mubr.bf16.mxu0 0
    %1954 = vmatmul.mubr.bf16.gmra.mrb[0].mxu0 %v1872
    %v1955 = vpop.f32.mrb[0].mxu0
    %v1956 = vadd.f32 0.0, %v1955
    %v1957 = vpop.f32.mrb[0].mxu0
    %v1958 = vpop.f32.mrb[0].mxu0
    %v1959 = vadd.f32 0.0, %v1958
    %v1960 = vpop.f32.mrb[0].mxu0
    %1961 = vdwg.mxu0
    %v1963 = vlaneseq
    %v1964 = vshrl.u32 %v1963, 7
    %v1965 = vsub.s32 0, %v1964
    %v1966 = vrot.slane %v1597, %v1965
    %v1968 = vadd.f32 %v1956, %v1966
    %v1969 = vadd.f32 %v1959, %v1966
    %v1970 = vmul.f32 %v1968, %v519
    %v1971 = vmul.f32 %v1969, %v520
    %v1972 = vmax.f32 %v1970, 0.0
    %v1973 = vmax.f32 %v1971, 0.0
    %v1974 = vpack.c.bf16 %v1784, %v1784
    %v1975 = vpack.c.bf16 %v1785, %v1785
    %v1976 = vpack.c.bf16 %v1972, %v1972
    %v1977 = vpack.c.bf16 %v1973, %v1973
    %v1978 = vpack.c.bf16 %v1785, %v1784
    %1979 = vmatprep.subr.bf16.mxu0 0
    %1980 = vmatpush1.bf16.msra.mxu0 %v1013
    %1981 = vmatprep.subr.bf16.mxu0 0
    %1982 = vmatpush1.bf16.msra.mxu0 %v1014
    %1983 = vmatprep.subr.bf16.mxu0 0
    %1984 = vmatpush1.bf16.msra.mxu0 %v1015
    %1985 = vmatprep.subr.bf16.mxu0 0
    %1986 = vmatpush1.bf16.msra.mxu0 %v1016
    %1987 = vmatprep.subr.bf16.mxu0 0
    %1988 = vmatpush1.bf16.msra.mxu0 %v1017
    %1989 = vmatprep.subr.bf16.mxu0 0
    %1990 = vmatpush1.bf16.msra.mxu0 %v1018
    %1991 = vmatprep.subr.bf16.mxu0 0
    %1992 = vmatpush1.bf16.msra.mxu0 %v1019
    %1993 = vmatprep.subr.bf16.mxu0 0
    %1994 = vmatpush1.bf16.msra.mxu0 %v1020
    %1995 = vmatprep.subr.bf16.mxu0 0
    %1996 = vmatpush1.bf16.msra.mxu0 0
    %1997 = vmatprep.subr.bf16.mxu0 0
    %1998 = vmatpush1.bf16.msra.mxu0 0
    %1999 = vmatprep.subr.bf16.mxu0 0
    %2000 = vmatpush1.bf16.msra.mxu0 0
    %2001 = vmatprep.subr.bf16.mxu0 0
    %2002 = vmatpush1.bf16.msra.mxu0 0
    %2003 = vmatprep.subr.bf16.mxu0 0
    %2004 = vmatpush1.bf16.msra.mxu0 0
    %2005 = vmatprep.subr.bf16.mxu0 0
    %2006 = vmatpush1.bf16.msra.mxu0 0
    %2007 = vmatprep.subr.bf16.mxu0 0
    %2008 = vmatpush1.bf16.msra.mxu0 0
    %2009 = vmatprep.subr.bf16.mxu0 0
    %2010 = vmatpush1.bf16.msra.mxu0 0
    %2011 = vmatprep.mubr.bf16.mxu0 0
    %2012 = vmatmul.mubr.bf16.gmra.mrb[0].mxu0 %v1978
    %v2013 = vpop.f32.mrb[0].mxu0
    %v2014 = vadd.f32 0.0, %v2013
    %v2015 = vpop.f32.mrb[0].mxu0
    %v2016 = vpop.f32.mrb[0].mxu0
    %v2017 = vadd.f32 0.0, %v2016
    %v2018 = vpop.f32.mrb[0].mxu0
    %2019 = vdwg.mxu0
    %v2020 = vpack.c.bf16 %v1973, %v1972
    %2021 = vmatprep.subr.bf16.mxu0 0
    %2022 = vmatpush1.bf16.msra.mxu0 %v1103
    %2023 = vmatprep.subr.bf16.mxu0 0
    %2024 = vmatpush1.bf16.msra.mxu0 %v1104
    %2025 = vmatprep.subr.bf16.mxu0 0
    %2026 = vmatpush1.bf16.msra.mxu0 %v1105
    %2027 = vmatprep.subr.bf16.mxu0 0
    %2028 = vmatpush1.bf16.msra.mxu0 %v1106
    %2029 = vmatprep.subr.bf16.mxu0 0
    %2030 = vmatpush1.bf16.msra.mxu0 %v1107
    %2031 = vmatprep.subr.bf16.mxu0 0
    %2032 = vmatpush1.bf16.msra.mxu0 %v1108
    %2033 = vmatprep.subr.bf16.mxu0 0
    %2034 = vmatpush1.bf16.msra.mxu0 %v1109
    %2035 = vmatprep.subr.bf16.mxu0 0
    %2036 = vmatpush1.bf16.msra.mxu0 %v1110
    %2037 = vmatprep.subr.bf16.mxu0 0
    %2038 = vmatpush1.bf16.msra.mxu0 0
    %2039 = vmatprep.subr.bf16.mxu0 0
    %2040 = vmatpush1.bf16.msra.mxu0 0
    %2041 = vmatprep.subr.bf16.mxu0 0
    %2042 = vmatpush1.bf16.msra.mxu0 0
    %2043 = vmatprep.subr.bf16.mxu0 0
    %2044 = vmatpush1.bf16.msra.mxu0 0
    %2045 = vmatprep.subr.bf16.mxu0 0
    %2046 = vmatpush1.bf16.msra.mxu0 0
    %2047 = vmatprep.subr.bf16.mxu0 0
    %2048 = vmatpush1.bf16.msra.mxu0 0
    %2049 = vmatprep.subr.bf16.mxu0 0
    %2050 = vmatpush1.bf16.msra.mxu0 0
    %2051 = vmatprep.subr.bf16.mxu0 0
    %2052 = vmatpush1.bf16.msra.mxu0 0
    %2053 = vmatprep.mubr.bf16.mxu0 0
    %2054 = vmatmul.mubr.bf16.gmra.mrb[0].mxu0 %v2020
    %v2055 = vpop.f32.mrb[0].mxu0
    %v2056 = vadd.f32 0.0, %v2055
    %v2057 = vpop.f32.mrb[0].mxu0
    %v2058 = vpop.f32.mrb[0].mxu0
    %v2059 = vadd.f32 0.0, %v2058
    %v2060 = vpop.f32.mrb[0].mxu0
    %2061 = vdwg.mxu0
    %v2062 = vpack.c.bf16 %v2014, %v2014
    %v2063 = vpack.c.bf16 %v2017, %v2017
    %2064 = vmatprep.subr.bf16.mxu0 0
    %2065 = vmatpush1.bf16.xpose.msra.mxu0 %v1976
    %2066 = vmatprep.subr.bf16.mxu0 0
    %2067 = vmatpush1.bf16.xpose.msra.mxu0 0
    %2068 = vmatprep.subr.bf16.mxu0 0
    %2069 = vmatpush1.bf16.xpose.msra.mxu0 0
    %2070 = vmatprep.subr.bf16.mxu0 0
    %2071 = vmatpush1.bf16.xpose.msra.mxu0 0
    %2072 = vmatprep.subr.bf16.mxu0 0
    %2073 = vmatpush1.bf16.xpose.msra.mxu0 0
    %2074 = vmatprep.subr.bf16.mxu0 0
    %2075 = vmatpush1.bf16.xpose.msra.mxu0 0
    %2076 = vmatprep.subr.bf16.mxu0 0
    %2077 = vmatpush1.bf16.xpose.msra.mxu0 0
    %2078 = vmatprep.subr.bf16.mxu0 0
    %2079 = vmatpush1.bf16.xpose.msra.mxu0 0
    %2080 = vmatprep.subr.bf16.mxu0 0
    %2081 = vmatpush1.bf16.xpose.msra.mxu0 0
    %2082 = vmatprep.subr.bf16.mxu0 0
    %2083 = vmatpush1.bf16.xpose.msra.mxu0 0
    %2084 = vmatprep.subr.bf16.mxu0 0
    %2085 = vmatpush1.bf16.xpose.msra.mxu0 0
    %2086 = vmatprep.subr.bf16.mxu0 0
    %2087 = vmatpush1.bf16.xpose.msra.mxu0 0
    %2088 = vmatprep.subr.bf16.mxu0 0
    %2089 = vmatpush1.bf16.xpose.msra.mxu0 0
    %2090 = vmatprep.subr.bf16.mxu0 0
    %2091 = vmatpush1.bf16.xpose.msra.mxu0 0
    %2092 = vmatprep.subr.bf16.mxu0 0
    %2093 = vmatpush1.bf16.xpose.msra.mxu0 0
    %2094 = vmatprep.subr.bf16.mxu0 0
    %2095 = vmatpush1.bf16.xpose.msra.mxu0 0
    %2096 = vmatprep.mubr.bf16.mxu0 0
    %2097 = vmatmul.mubr.bf16.gmra.mrb[0].mxu0 %v2062
    %v2098 = vpop.f32.mrb[0].mxu0
    %v2099 = vadd.f32 0.0, %v2098
    %v2100 = vpop.f32.mrb[0].mxu0
    %v2101 = vpop.f32.mrb[0].mxu0
    %v2102 = vpop.f32.mrb[0].mxu0
    %2103 = vdwg.mxu0
    %2104 = vmatprep.subr.bf16.mxu0 0
    %2105 = vmatpush1.bf16.xpose.msra.mxu0 %v1977
    %2106 = vmatprep.subr.bf16.mxu0 0
    %2107 = vmatpush1.bf16.xpose.msra.mxu0 0
    %2108 = vmatprep.subr.bf16.mxu0 0
    %2109 = vmatpush1.bf16.xpose.msra.mxu0 0
    %2110 = vmatprep.subr.bf16.mxu0 0
    %2111 = vmatpush1.bf16.xpose.msra.mxu0 0
    %2112 = vmatprep.subr.bf16.mxu0 0
    %2113 = vmatpush1.bf16.xpose.msra.mxu0 0
    %2114 = vmatprep.subr.bf16.mxu0 0
    %2115 = vmatpush1.bf16.xpose.msra.mxu0 0
    %2116 = vmatprep.subr.bf16.mxu0 0
    %2117 = vmatpush1.bf16.xpose.msra.mxu0 0
    %2118 = vmatprep.subr.bf16.mxu0 0
    %2119 = vmatpush1.bf16.xpose.msra.mxu0 0
    %2120 = vmatprep.subr.bf16.mxu0 0
    %2121 = vmatpush1.bf16.xpose.msra.mxu0 0
    %2122 = vmatprep.subr.bf16.mxu0 0
    %2123 = vmatpush1.bf16.xpose.msra.mxu0 0
    %2124 = vmatprep.subr.bf16.mxu0 0
    %2125 = vmatpush1.bf16.xpose.msra.mxu0 0
    %2126 = vmatprep.subr.bf16.mxu0 0
    %2127 = vmatpush1.bf16.xpose.msra.mxu0 0
    %2128 = vmatprep.subr.bf16.mxu0 0
    %2129 = vmatpush1.bf16.xpose.msra.mxu0 0
    %2130 = vmatprep.subr.bf16.mxu0 0
    %2131 = vmatpush1.bf16.xpose.msra.mxu0 0
    %2132 = vmatprep.subr.bf16.mxu0 0
    %2133 = vmatpush1.bf16.xpose.msra.mxu0 0
    %2134 = vmatprep.subr.bf16.mxu0 0
    %2135 = vmatpush1.bf16.xpose.msra.mxu0 0
    %2136 = vmatprep.mubr.bf16.mxu0 0
    %2137 = vmatmul.mubr.bf16.gmra.mrb[0].mxu0 %v2063
    %v2138 = vpop.f32.mrb[0].mxu0
    %v2139 = vadd.f32 0.0, %v2138
    %v2140 = vpop.f32.mrb[0].mxu0
    %v2141 = vpop.f32.mrb[0].mxu0
    %v2142 = vpop.f32.mrb[0].mxu0
    %2143 = vdwg.mxu0
    %v2144 = vpack.c.bf16 %v2056, %v2056
    %v2145 = vpack.c.bf16 %v2059, %v2059
    %2146 = vmatprep.subr.bf16.mxu0 0
    %2147 = vmatpush1.bf16.xpose.msra.mxu0 %v1974
    %2148 = vmatprep.subr.bf16.mxu0 0
    %2149 = vmatpush1.bf16.xpose.msra.mxu0 0
    %2150 = vmatprep.subr.bf16.mxu0 0
    %2151 = vmatpush1.bf16.xpose.msra.mxu0 0
    %2152 = vmatprep.subr.bf16.mxu0 0
    %2153 = vmatpush1.bf16.xpose.msra.mxu0 0
    %2154 = vmatprep.subr.bf16.mxu0 0
    %2155 = vmatpush1.bf16.xpose.msra.mxu0 0
    %2156 = vmatprep.subr.bf16.mxu0 0
    %2157 = vmatpush1.bf16.xpose.msra.mxu0 0
    %2158 = vmatprep.subr.bf16.mxu0 0
    %2159 = vmatpush1.bf16.xpose.msra.mxu0 0
    %2160 = vmatprep.subr.bf16.mxu0 0
    %2161 = vmatpush1.bf16.xpose.msra.mxu0 0
    %2162 = vmatprep.subr.bf16.mxu0 0
    %2163 = vmatpush1.bf16.xpose.msra.mxu0 0
    %2164 = vmatprep.subr.bf16.mxu0 0
    %2165 = vmatpush1.bf16.xpose.msra.mxu0 0
    %2166 = vmatprep.subr.bf16.mxu0 0
    %2167 = vmatpush1.bf16.xpose.msra.mxu0 0
    %2168 = vmatprep.subr.bf16.mxu0 0
    %2169 = vmatpush1.bf16.xpose.msra.mxu0 0
    %2170 = vmatprep.subr.bf16.mxu0 0
    %2171 = vmatpush1.bf16.xpose.msra.mxu0 0
    %2172 = vmatprep.subr.bf16.mxu0 0
    %2173 = vmatpush1.bf16.xpose.msra.mxu0 0
    %2174 = vmatprep.subr.bf16.mxu0 0
    %2175 = vmatpush1.bf16.xpose.msra.mxu0 0
    %2176 = vmatprep.subr.bf16.mxu0 0
    %2177 = vmatpush1.bf16.xpose.msra.mxu0 0
    %2178 = vmatprep.mubr.bf16.mxu0 0
    %2179 = vmatmul.mubr.bf16.gmra.mrb[0].mxu0 %v2144
    %v2180 = vpop.f32.mrb[0].mxu0
    %v2181 = vadd.f32 0.0, %v2180
    %v2182 = vpop.f32.mrb[0].mxu0
    %v2183 = vpop.f32.mrb[0].mxu0
    %v2184 = vpop.f32.mrb[0].mxu0
    %2185 = vdwg.mxu0
    %2186 = vmatprep.subr.bf16.mxu0 0
    %2187 = vmatpush1.bf16.xpose.msra.mxu0 %v1975
    %2188 = vmatprep.subr.bf16.mxu0 0
    %2189 = vmatpush1.bf16.xpose.msra.mxu0 0
    %2190 = vmatprep.subr.bf16.mxu0 0
    %2191 = vmatpush1.bf16.xpose.msra.mxu0 0
    %2192 = vmatprep.subr.bf16.mxu0 0
    %2193 = vmatpush1.bf16.xpose.msra.mxu0 0
    %2194 = vmatprep.subr.bf16.mxu0 0
    %2195 = vmatpush1.bf16.xpose.msra.mxu0 0
    %2196 = vmatprep.subr.bf16.mxu0 0
    %2197 = vmatpush1.bf16.xpose.msra.mxu0 0
    %2198 = vmatprep.subr.bf16.mxu0 0
    %2199 = vmatpush1.bf16.xpose.msra.mxu0 0
    %2200 = vmatprep.subr.bf16.mxu0 0
    %2201 = vmatpush1.bf16.xpose.msra.mxu0 0
    %2202 = vmatprep.subr.bf16.mxu0 0
    %2203 = vmatpush1.bf16.xpose.msra.mxu0 0
    %2204 = vmatprep.subr.bf16.mxu0 0
    %2205 = vmatpush1.bf16.xpose.msra.mxu0 0
    %2206 = vmatprep.subr.bf16.mxu0 0
    %2207 = vmatpush1.bf16.xpose.msra.mxu0 0
    %2208 = vmatprep.subr.bf16.mxu0 0
    %2209 = vmatpush1.bf16.xpose.msra.mxu0 0
    %2210 = vmatprep.subr.bf16.mxu0 0
    %2211 = vmatpush1.bf16.xpose.msra.mxu0 0
    %2212 = vmatprep.subr.bf16.mxu0 0
    %2213 = vmatpush1.bf16.xpose.msra.mxu0 0
    %2214 = vmatprep.subr.bf16.mxu0 0
    %2215 = vmatpush1.bf16.xpose.msra.mxu0 0
    %2216 = vmatprep.subr.bf16.mxu0 0
    %2217 = vmatpush1.bf16.xpose.msra.mxu0 0
    %2218 = vmatprep.mubr.bf16.mxu0 0
    %2219 = vmatmul.mubr.bf16.gmra.mrb[0].mxu0 %v2145
    %v2220 = vpop.f32.mrb[0].mxu0
    %v2221 = vadd.f32 0.0, %v2220
    %v2222 = vpop.f32.mrb[0].mxu0
    %v2223 = vpop.f32.mrb[0].mxu0
    %v2224 = vpop.f32.mrb[0].mxu0
    %2225 = vdwg.mxu0
    %v2226 = vsel %vm302, %v2099, -inf
    %2227 = vmax.xlane.f32.xlu0 %v2226
    %v2228 = vpop.xlane.xlu0 %2227
    %v2229 = vsel %vm302, %v2139, -inf
    %2230 = vmax.xlane.f32.xlu0 %v2229
    %v2231 = vpop.xlane.xlu0 %2230
    %v2232 = vsub.f32 %v2099, %v2228
    %v2233 = vsub.f32 %v2139, %v2231
    %v2234 = vmul.f32 %v2232, 1.442695
    %v2235 = vpow.pop %v2234
    %v2236 = vmul.f32 %v2233, 1.442695
    %v2237 = vpow.pop %v2236
    %v2238 = vsel %vm302, %v2235, 0.0
    %2239 = vadd.xlane.f32.xlu0 %v2238
    %v2240 = vpop.xlane.xlu0 %2239
    %v2241 = vsel %vm302, %v2237, 0.0
    %2242 = vadd.xlane.f32.xlu0 %v2241
    %v2243 = vpop.xlane.xlu0 %2242
    %v2244 = vrcp.pop %v2240
    %v2245 = vmul.f32 %v2235, %v2244
    %v2246 = vrcp.pop %v2243
    %v2247 = vmul.f32 %v2237, %v2246
    %v2248 = vpack.c.bf16 %v2245, %v2245
    %v2249 = vpack.c.bf16 %v2247, %v2247
    %v2250 = vsel %vm302, %v2181, -inf
    %2251 = vmax.xlane.f32.xlu0 %v2250
    %v2252 = vpop.xlane.xlu0 %2251
    %v2253 = vsel %vm302, %v2221, -inf
    %2254 = vmax.xlane.f32.xlu0 %v2253
    %v2255 = vpop.xlane.xlu0 %2254
    %v2256 = vsub.f32 %v2181, %v2252
    %v2257 = vsub.f32 %v2221, %v2255
    %v2258 = vmul.f32 %v2256, 1.442695
    %v2259 = vpow.pop %v2258
    %v2260 = vmul.f32 %v2257, 1.442695
    %v2261 = vpow.pop %v2260
    %v2262 = vsel %vm302, %v2259, 0.0
    %2263 = vadd.xlane.f32.xlu0 %v2262
    %v2264 = vpop.xlane.xlu0 %2263
    %v2265 = vsel %vm302, %v2261, 0.0
    %2266 = vadd.xlane.f32.xlu0 %v2265
    %v2267 = vpop.xlane.xlu0 %2266
    %v2268 = vrcp.pop %v2264
    %v2269 = vmul.f32 %v2259, %v2268
    %v2270 = vrcp.pop %v2267
    %v2271 = vmul.f32 %v2261, %v2270
    %v2272 = vpack.c.bf16 %v2269, %v2269
    %v2273 = vpack.c.bf16 %v2271, %v2271
    %v2275 = vsel %vm302, %v2248, 0
    %v2278 = vsel %vm596, %v1976, 0
    %2280 = vmatprep.subr.bf16.mxu0 0
    %2281 = vmatpush1.bf16.msra.mxu0 %v2278
    %2282 = vmatprep.subr.bf16.mxu0 0
    %2283 = vmatpush1.bf16.msra.mxu0 0
    %2284 = vmatprep.subr.bf16.mxu0 0
    %2285 = vmatpush1.bf16.msra.mxu0 0
    %2286 = vmatprep.subr.bf16.mxu0 0
    %2287 = vmatpush1.bf16.msra.mxu0 0
    %2288 = vmatprep.subr.bf16.mxu0 0
    %2289 = vmatpush1.bf16.msra.mxu0 0
    %2290 = vmatprep.subr.bf16.mxu0 0
    %2291 = vmatpush1.bf16.msra.mxu0 0
    %2292 = vmatprep.subr.bf16.mxu0 0
    %2293 = vmatpush1.bf16.msra.mxu0 0
    %2294 = vmatprep.subr.bf16.mxu0 0
    %2295 = vmatpush1.bf16.msra.mxu0 0
    %2296 = vmatprep.subr.bf16.mxu0 0
    %2297 = vmatpush1.bf16.msra.mxu0 0
    %2298 = vmatprep.subr.bf16.mxu0 0
    %2299 = vmatpush1.bf16.msra.mxu0 0
    %2300 = vmatprep.subr.bf16.mxu0 0
    %2301 = vmatpush1.bf16.msra.mxu0 0
    %2302 = vmatprep.subr.bf16.mxu0 0
    %2303 = vmatpush1.bf16.msra.mxu0 0
    %2304 = vmatprep.subr.bf16.mxu0 0
    %2305 = vmatpush1.bf16.msra.mxu0 0
    %2306 = vmatprep.subr.bf16.mxu0 0
    %2307 = vmatpush1.bf16.msra.mxu0 0
    %2308 = vmatprep.subr.bf16.mxu0 0
    %2309 = vmatpush1.bf16.msra.mxu0 0
    %2310 = vmatprep.subr.bf16.mxu0 0
    %2311 = vmatpush1.bf16.msra.mxu0 0
    %2312 = vmatprep.mubr.bf16.mxu0 0
    %2313 = vmatmul.mubr.bf16.gmra.mrb[0].mxu0 %v2275
    %v2314 = vpop.f32.mrb[0].mxu0
    %v2315 = vadd.f32 0.0, %v2314
    %v2316 = vpop.f32.mrb[0].mxu0
    %v2317 = vpop.f32.mrb[0].mxu0
    %v2318 = vpop.f32.mrb[0].mxu0
    %2319 = vdwg.mxu0
    %v2321 = vsel %vm302, %v2249, 0
    %v2324 = vsel %vm596, %v1977, 0
    %2326 = vmatprep.subr.bf16.mxu0 0
    %2327 = vmatpush1.bf16.msra.mxu0 %v2324
    %2328 = vmatprep.subr.bf16.mxu0 0
    %2329 = vmatpush1.bf16.msra.mxu0 0
    %2330 = vmatprep.subr.bf16.mxu0 0
    %2331 = vmatpush1.bf16.msra.mxu0 0
    %2332 = vmatprep.subr.bf16.mxu0 0
    %2333 = vmatpush1.bf16.msra.mxu0 0
    %2334 = vmatprep.subr.bf16.mxu0 0
    %2335 = vmatpush1.bf16.msra.mxu0 0
    %2336 = vmatprep.subr.bf16.mxu0 0
    %2337 = vmatpush1.bf16.msra.mxu0 0
    %2338 = vmatprep.subr.bf16.mxu0 0
    %2339 = vmatpush1.bf16.msra.mxu0 0
    %2340 = vmatprep.subr.bf16.mxu0 0
    %2341 = vmatpush1.bf16.msra.mxu0 0
    %2342 = vmatprep.subr.bf16.mxu0 0
    %2343 = vmatpush1.bf16.msra.mxu0 0
    %2344 = vmatprep.subr.bf16.mxu0 0
    %2345 = vmatpush1.bf16.msra.mxu0 0
    %2346 = vmatprep.subr.bf16.mxu0 0
    %2347 = vmatpush1.bf16.msra.mxu0 0
    %2348 = vmatprep.subr.bf16.mxu0 0
    %2349 = vmatpush1.bf16.msra.mxu0 0
    %2350 = vmatprep.subr.bf16.mxu0 0
    %2351 = vmatpush1.bf16.msra.mxu0 0
    %2352 = vmatprep.subr.bf16.mxu0 0
    %2353 = vmatpush1.bf16.msra.mxu0 0
    %2354 = vmatprep.subr.bf16.mxu0 0
    %2355 = vmatpush1.bf16.msra.mxu0 0
    %2356 = vmatprep.subr.bf16.mxu0 0
    %2357 = vmatpush1.bf16.msra.mxu0 0
    %2358 = vmatprep.mubr.bf16.mxu0 0
    %2359 = vmatmul.mubr.bf16.gmra.mrb[0].mxu0 %v2321
    %v2360 = vpop.f32.mrb[0].mxu0
    %v2361 = vadd.f32 0.0, %v2360
    %v2362 = vpop.f32.mrb[0].mxu0
    %v2363 = vpop.f32.mrb[0].mxu0
    %v2364 = vpop.f32.mrb[0].mxu0
    %2365 = vdwg.mxu0
    %v2367 = vsel %vm302, %v2272, 0
    %v2370 = vsel %vm596, %v1974, 0
    %2372 = vmatprep.subr.bf16.mxu0 0
    %2373 = vmatpush1.bf16.msra.mxu0 %v2370
    %2374 = vmatprep.subr.bf16.mxu0 0
    %2375 = vmatpush1.bf16.msra.mxu0 0
    %2376 = vmatprep.subr.bf16.mxu0 0
    %2377 = vmatpush1.bf16.msra.mxu0 0
    %2378 = vmatprep.subr.bf16.mxu0 0
    %2379 = vmatpush1.bf16.msra.mxu0 0
    %2380 = vmatprep.subr.bf16.mxu0 0
    %2381 = vmatpush1.bf16.msra.mxu0 0
    %2382 = vmatprep.subr.bf16.mxu0 0
    %2383 = vmatpush1.bf16.msra.mxu0 0
    %2384 = vmatprep.subr.bf16.mxu0 0
    %2385 = vmatpush1.bf16.msra.mxu0 0
    %2386 = vmatprep.subr.bf16.mxu0 0
    %2387 = vmatpush1.bf16.msra.mxu0 0
    %2388 = vmatprep.subr.bf16.mxu0 0
    %2389 = vmatpush1.bf16.msra.mxu0 0
    %2390 = vmatprep.subr.bf16.mxu0 0
    %2391 = vmatpush1.bf16.msra.mxu0 0
    %2392 = vmatprep.subr.bf16.mxu0 0
    %2393 = vmatpush1.bf16.msra.mxu0 0
    %2394 = vmatprep.subr.bf16.mxu0 0
    %2395 = vmatpush1.bf16.msra.mxu0 0
    %2396 = vmatprep.subr.bf16.mxu0 0
    %2397 = vmatpush1.bf16.msra.mxu0 0
    %2398 = vmatprep.subr.bf16.mxu0 0
    %2399 = vmatpush1.bf16.msra.mxu0 0
    %2400 = vmatprep.subr.bf16.mxu0 0
    %2401 = vmatpush1.bf16.msra.mxu0 0
    %2402 = vmatprep.subr.bf16.mxu0 0
    %2403 = vmatpush1.bf16.msra.mxu0 0
    %2404 = vmatprep.mubr.bf16.mxu0 0
    %2405 = vmatmul.mubr.bf16.gmra.mrb[0].mxu0 %v2367
    %v2406 = vpop.f32.mrb[0].mxu0
    %v2407 = vadd.f32 0.0, %v2406
    %v2408 = vpop.f32.mrb[0].mxu0
    %v2409 = vpop.f32.mrb[0].mxu0
    %v2410 = vpop.f32.mrb[0].mxu0
    %2411 = vdwg.mxu0
    %v2413 = vsel %vm302, %v2273, 0
    %v2416 = vsel %vm596, %v1975, 0
    %2418 = vmatprep.subr.bf16.mxu0 0
    %2419 = vmatpush1.bf16.msra.mxu0 %v2416
    %2420 = vmatprep.subr.bf16.mxu0 0
    %2421 = vmatpush1.bf16.msra.mxu0 0
    %2422 = vmatprep.subr.bf16.mxu0 0
    %2423 = vmatpush1.bf16.msra.mxu0 0
    %2424 = vmatprep.subr.bf16.mxu0 0
    %2425 = vmatpush1.bf16.msra.mxu0 0
    %2426 = vmatprep.subr.bf16.mxu0 0
    %2427 = vmatpush1.bf16.msra.mxu0 0
    %2428 = vmatprep.subr.bf16.mxu0 0
    %2429 = vmatpush1.bf16.msra.mxu0 0
    %2430 = vmatprep.subr.bf16.mxu0 0
    %2431 = vmatpush1.bf16.msra.mxu0 0
    %2432 = vmatprep.subr.bf16.mxu0 0
    %2433 = vmatpush1.bf16.msra.mxu0 0
    %2434 = vmatprep.subr.bf16.mxu0 0
    %2435 = vmatpush1.bf16.msra.mxu0 0
    %2436 = vmatprep.subr.bf16.mxu0 0
    %2437 = vmatpush1.bf16.msra.mxu0 0
    %2438 = vmatprep.subr.bf16.mxu0 0
    %2439 = vmatpush1.bf16.msra.mxu0 0
    %2440 = vmatprep.subr.bf16.mxu0 0
    %2441 = vmatpush1.bf16.msra.mxu0 0
    %2442 = vmatprep.subr.bf16.mxu0 0
    %2443 = vmatpush1.bf16.msra.mxu0 0
    %2444 = vmatprep.subr.bf16.mxu0 0
    %2445 = vmatpush1.bf16.msra.mxu0 0
    %2446 = vmatprep.subr.bf16.mxu0 0
    %2447 = vmatpush1.bf16.msra.mxu0 0
    %2448 = vmatprep.subr.bf16.mxu0 0
    %2449 = vmatpush1.bf16.msra.mxu0 0
    %2450 = vmatprep.mubr.bf16.mxu0 0
    %2451 = vmatmul.mubr.bf16.gmra.mrb[0].mxu0 %v2413
    %v2452 = vpop.f32.mrb[0].mxu0
    %v2453 = vadd.f32 0.0, %v2452
    %v2454 = vpop.f32.mrb[0].mxu0
    %v2455 = vpop.f32.mrb[0].mxu0
    %v2456 = vpop.f32.mrb[0].mxu0
    %2457 = vdwg.mxu0
    %2458 = vst [vmem:[#allocation2] sm:$0xff] %v2407
    %2459 = vst [vmem:[#allocation2 + $0x8] sm:$0xff] %v2453
    %2460 = vst [vmem:[#allocation4] sm:$0xff] %v2315
    %2461 = vst [vmem:[#allocation4 + $0x8] sm:$0xff] %v2361
    // Predicated region
    $region46: #{_lambda_.1} parent=1 // pred_check
      _
    $region47: #{_lambda_.1} parent=1 // pred_check_branch
      %2463 = sbr.rel (0) target = $region49
    $region48: #{_lambda_.1} parent=1 // pred_region
      %s2465 = ssub.s32 256, 256
      %2466 = vsyncadd [#allocation3], %s2465
      %s2467 = sshll.u32 [#allocation2], 4
      %s2468 = int_to_ptr.vmem [resolvable:$true] %s2467
      %2473 = dma.vmem_to_hbm [thread:$0]  %s2468, 256, %s11, [#allocation3], 128, 128, 8
    $region49: #{_lambda_.1} parent=1 // pred_fallthru
      _
    // Predicated region
    $region50: #{_lambda_.1} parent=1 // pred_check
      _
    $region51: #{_lambda_.1} parent=1 // pred_check_branch
      %2475 = sbr.rel (0) target = $region53
    $region52: #{_lambda_.1} parent=1 // pred_region
      %s2477 = ssub.s32 256, 256
      %2478 = vsyncadd [#allocation5], %s2477
      %s2479 = sshll.u32 [#allocation4], 4
      %s2480 = int_to_ptr.vmem [resolvable:$true] %s2479
      %2485 = dma.vmem_to_hbm [thread:$0]  %s2480, 256, %s12, [#allocation5], 128, 128, 8
    $region53: #{_lambda_.1} parent=1 // pred_fallthru
      _
    // Predicated region
    $region54: #{_lambda_.1} parent=1 // pred_check
      _
    $region55: #{_lambda_.1} parent=1 // pred_check_branch
      %2487 = sbr.rel (0) target = $region57
    $region56: #{_lambda_.1} parent=1 // pred_region
      %s2489 = ssub.s32 256, 256
      %2490 = vsyncadd [#allocation5], %s2489
      %s2491 = sshll.u32 [#allocation6], 4
      %s2492 = int_to_ptr.vmem [resolvable:$true] %s2491
      %2497 = dma.vmem_to_hbm [thread:$0]  %s2492, 256, %s13, [#allocation5], 128, 128, 8
    $region57: #{_lambda_.1} parent=1 // pred_fallthru
      _
    // Predicated region
    $region58: #{_lambda_.1} parent=1 // pred_check
      _
    $region59: #{_lambda_.1} parent=1 // pred_check_branch
      %2499 = sbr.rel (0) target = $region61
    $region60: #{_lambda_.1} parent=1 // pred_region
      %2500 = dma.done [#allocation3], 256
    $region61: #{_lambda_.1} parent=1 // pred_fallthru
      _
    // Predicated region
    $region62: #{_lambda_.1} parent=1 // pred_check
      _
    $region63: #{_lambda_.1} parent=1 // pred_check_branch
      %2502 = sbr.rel (0) target = $region65
    $region64: #{_lambda_.1} parent=1 // pred_region
      %2503 = dma.done [#allocation5], 256
    $region65: #{_lambda_.1} parent=1 // pred_fallthru
      _
    // Predicated region
    $region66: #{_lambda_.1} parent=1 // pred_check
      _
    $region67: #{_lambda_.1} parent=1 // pred_check_branch
      %2505 = sbr.rel (0) target = $region69
    $region68: #{_lambda_.1} parent=1 // pred_region
      %2506 = dma.done [#allocation5], 256
    $region69: #{_lambda_.1} parent=1 // pred_fallthru
      _
    %2507 = vsyncpa [#allocation3], 1
    %2508 = vsyncpa [#allocation5], 1

</llo_original>
